<compile_context>
chip_gen: v5e
topology: v5e:2x2
jax: 0.10.0
libtpu: 0.0.40
codegen_flags: <defaults>
</compile_context>

<pallas_src>
import math
from functools import partial

import jax
import jax.numpy as jnp
from jax.experimental import pallas as pl
from jax.experimental.pallas import tpu as pltpu

LN_EPS = 1e-5


def _layernorm(x, w, b, eps=LN_EPS):
    # F.layer_norm: biased variance over the last dim (f32 math).
    mu = jnp.mean(x, axis=-1, keepdims=True)
    xc = x - mu
    var = jnp.mean(xc * xc, axis=-1, keepdims=True)
    return xc * jax.lax.rsqrt(var + eps) * w + b


def _gelu(x):
    # TODO(synk): nn.GELU() default is the exact erf formulation; tanh
    # approximation kept for guaranteed Mosaic lowering (~1e-3 abs diff).
    # x*x is reused to trim VPU multiplies on the (BT, 4C) stretch.
    c = math.sqrt(2.0 / math.pi)
    x2 = x * x
    return 0.5 * x * (1.0 + jnp.tanh(c * x * (1.0 + 0.044715 * x2)))


def _pick_vmem_limit():
    # v5e/v6e have 128 MiB physical VMEM (use a generous scoped limit so the
    # per-layer weight double-buffering is never squeezed); v7x only has 64.
    try:
        cap = pltpu.get_tpu_info().vmem_capacity_bytes
    except Exception:
        cap = 128 * 1024 * 1024
    if cap <= 64 * 1024 * 1024:
        return 48 * 1024 * 1024
    return 96 * 1024 * 1024


# ----------------------------------------------------------------------------
# All transformer blocks in one kernel; grid = (row_chunk, layer).
# ----------------------------------------------------------------------------
def gpt_blocks_kernel(x_ref, ln1w, ln1b, wqkv, bqkv, wo, bo,
                      ln2w, ln2b, wfc, bfc, wp2, bp2,
                      o_ref, acc_ref, qkv_ref, y_ref, *, n_head):
    l = pl.program_id(1)
    Bc, T, C = x_ref.shape
    BT = Bc * T
    hd = C // n_head
    F = wfc.shape[-1]                                   # 4C
    bf16 = jnp.bfloat16

    @pl.when(l == 0)
    def _():
        # Load the embeddings once per chunk; the residual stream stays
        # resident in a f32 VMEM scratch across all layers of this chunk.
        acc_ref[...] = x_ref[...].reshape(BT, C)

    # ---- attention: x += b_o + (concat_h softmax(q_h k_h^T / sqrt(hd)) v_h) Wo
    x = acc_ref[...]                                    # (BT, C) f32
    h = _layernorm(x, ln1w[0], ln1b[0])
    # Fold 1/sqrt(hd) into the q columns in f32 (cheaper than scaling every
    # (T, T) score matrix) before the single bf16 materialization of qkv.
    col3 = jax.lax.broadcasted_iota(jnp.int32, (1, 3 * C), 1)
    qscale = jnp.where(col3 < C, jnp.float32(1.0 / math.sqrt(hd)),
                       jnp.float32(1.0))
    qkv = (jnp.dot(h.astype(bf16), wqkv[0],
                   preferred_element_type=jnp.float32) + bqkv[0]) * qscale
    qkv_ref[...] = qkv.reshape(Bc, T, 3 * C).astype(bf16)

    rr = jax.lax.broadcasted_iota(jnp.int32, (T, T), 0)
    cc = jax.lax.broadcasted_iota(jnp.int32, (T, T), 1)
    causal = rr >= cc

    # TODO(synk): for block_size ~1024 switch the inner loop to a KV-tiled
    # online-softmax (flash) formulation; full (T, T) scores are fine here.
    # TODO(synk): for hd not a multiple of 128 (e.g. GPT-2 hd=64) a head-major
    # / padded-head qkv layout would make the column slices lane-aligned.
    def batch_body(b, carry):
        for hi in range(n_head):                        # static column offsets
            c0 = hi * hd
            qh = qkv_ref[b, :, c0:c0 + hd]              # (T, hd) bf16
            kh = qkv_ref[b, :, C + c0:C + c0 + hd]
            vh = qkv_ref[b, :, 2 * C + c0:2 * C + c0 + hd]
            s = jax.lax.dot_general(qh, kh, (((1,), (1,)), ((), ())),
                                    preferred_element_type=jnp.float32)
            s = jnp.where(causal, s, -1e30)
            s = s - jnp.max(s, axis=-1, keepdims=True)
            p = jnp.exp(s)
            # approx EUP reciprocal: ~1e-2 rel. on attention probs, fine for
            # inference; use approx=False when validating against torch.
            p = p * pl.reciprocal(jnp.sum(p, axis=-1, keepdims=True),
                                  approx=True)
            yh = jnp.dot(p.astype(bf16), vh,
                         preferred_element_type=jnp.float32)   # (T, hd)
            y_ref[b, :, c0:c0 + hd] = yh.astype(bf16)
        return carry

    jax.lax.fori_loop(0, Bc, batch_body, 0)

    # One full-width (BT, C) x (C, C) output projection instead of per-head
    # K=hd GEMMs and per-head read-modify-write stores of the residual.
    attn = jnp.dot(y_ref[...].reshape(BT, C), wo[0],
                   preferred_element_type=jnp.float32)
    x = x + attn + bo[0]

    # ---- MLP: x += W2 gelu(W1 ln_2(x) + b1) + b2 ; hidden dim chunked so the
    # f32 gelu temp stays bounded (matters for v7x's 64 MiB VMEM).
    h2 = _layernorm(x, ln2w[0], ln2b[0]).astype(bf16)
    proj = jnp.zeros((BT, C), jnp.float32)
    ck = F if F <= 2048 else 2048
    for f0 in range(0, F, ck):
        fs = min(ck, F - f0)
        m = jnp.dot(h2, wfc[0, :, f0:f0 + fs],
                    preferred_element_type=jnp.float32) + bfc[0, :, f0:f0 + fs]
        m = _gelu(m)
        proj = proj + jnp.dot(m.astype(bf16), wp2[0, f0:f0 + fs, :],
                              preferred_element_type=jnp.float32)
    acc_ref[...] = x + proj + bp2[0]

    @pl.when(l == pl.num_programs(1) - 1)
    def _():
        # Only the last token per batch element is needed downstream (the
        # inference lm_head path) -> no full (B, T, C) HBM writeback.
        for b in range(Bc):
            r = b * T + T - 1
            o_ref[b] = acc_ref[r:r + 1, :]


def run_blocks(x, p, n_head):
    B, T, C = x.shape
    L = p["w_qkv"].shape[0]
    # Row-chunk axis: feeds both TensorCores on v7x ("parallel"), while capping
    # per-layer weight re-streaming at 2x on single-TC v5e/v6e.
    n_chunks = 2 if (B % 2 == 0 and B >= 2) else 1
    Bc = B // n_chunks

    weights = (p["ln1_w"], p["ln1_b"], p["w_qkv"], p["b_qkv"], p["w_o"],
               p["b_o"], p["ln2_w"], p["ln2_b"], p["w_fc"], p["b_fc"],
               p["w_p2"], p["b_p2"])

    def wspec(arr):
        nd = arr.ndim
        return pl.BlockSpec((1,) + arr.shape[1:],
                            lambda c, l, _nd=nd: (l,) + (0,) * (_nd - 1))

    return pl.pallas_call(
        partial(gpt_blocks_kernel, n_head=n_head),
        out_shape=jax.ShapeDtypeStruct((B, 1, C), jnp.float32),
        grid=(n_chunks, L),
        in_specs=[pl.BlockSpec((Bc, T, C), lambda c, l: (c, 0, 0))]
        + [wspec(w) for w in weights],
        out_specs=pl.BlockSpec((Bc, 1, C), lambda c, l: (c, 0, 0)),
        scratch_shapes=[
            pltpu.VMEM((Bc * T, C), jnp.float32),        # residual stream
            pltpu.VMEM((Bc, T, 3 * C), jnp.bfloat16),    # qkv (single bf16 copy)
            pltpu.VMEM((Bc, T, C), jnp.bfloat16),        # concatenated head out
        ],
        compiler_params=pltpu.CompilerParams(
            dimension_semantics=("parallel", "arbitrary"),
            vmem_limit_bytes=_pick_vmem_limit()),
    )(x, *weights)


# ----------------------------------------------------------------------------
# Final LayerNorm + tied lm_head on the last token (inference branch).
# All B rows in one block (M=B matmul); wte streamed exactly once over vocab.
# ----------------------------------------------------------------------------
def lm_head_kernel(x_ref, lnfw_ref, lnfb_ref, wte_ref, o_ref):
    h = _layernorm(x_ref[...], lnfw_ref[...], lnfb_ref[...])        # (B, C) f32
    o_ref[...] = jax.lax.dot_general(h.astype(jnp.bfloat16), wte_ref[...],
                                     (((1,), (1,)), ((), ())),
                                     preferred_element_type=jnp.float32)


def run_lm_head(x_last, lnf_w, lnf_b, wte):
    B, _, C = x_last.shape
    V = wte.shape[0]
    x2d = x_last.reshape(B, C)

    TV = 512
    Vp = ((V + TV - 1) // TV) * TV
    wte_bf16 = wte.astype(jnp.bfloat16)
    if Vp != V:
        wte_bf16 = jnp.pad(wte_bf16, ((0, Vp - V), (0, 0)))
    nV = Vp // TV

    out = pl.pallas_call(
        lm_head_kernel,
        out_shape=jax.ShapeDtypeStruct((B, Vp), jnp.float32),
        grid=(nV,),
        in_specs=[
            pl.BlockSpec((B, C), lambda j: (0, 0)),      # all B rows, one DMA
            pl.BlockSpec((1, C), lambda j: (0, 0)),
            pl.BlockSpec((1, C), lambda j: (0, 0)),
            pl.BlockSpec((TV, C), lambda j: (j, 0)),     # wte streamed once
        ],
        out_specs=pl.BlockSpec((B, TV), lambda j: (0, j)),
        compiler_params=pltpu.CompilerParams(
            dimension_semantics=("parallel",),
            vmem_limit_bytes=_pick_vmem_limit()),
    )(x2d, lnf_w, lnf_b, wte_bf16)
    return out[:, :V].reshape(B, 1, V)


# ----------------------------------------------------------------------------
# Parameter init (deterministic, mirrors GPT._init_weights); weights stacked
# over layers, matmul weights stored pre-transposed [in, out] in bfloat16.
# ----------------------------------------------------------------------------
def init_params(key, cfg):
    C, V, L, BS = cfg["n_embd"], cfg["vocab_size"], cfg["n_layer"], cfg["block_size"]
    std = 0.02
    proj_std = 0.02 / math.sqrt(2 * L)
    keys = iter(jax.random.split(key, 2 + 4 * L))

    wte = std * jax.random.normal(next(keys), (V, C), jnp.float32)
    wpe = std * jax.random.normal(next(keys), (BS, C), jnp.float32)

    w_qkv, w_o, w_fc, w_p2 = [], [], [], []
    for _ in range(L):
        w_qkv.append((std * jax.random.normal(next(keys), (3 * C, C))).T)
        w_o.append((proj_std * jax.random.normal(next(keys), (C, C))).T)
        w_fc.append((std * jax.random.normal(next(keys), (4 * C, C))).T)
        w_p2.append((proj_std * jax.random.normal(next(keys), (C, 4 * C))).T)

    return {
        "wte": wte,
        "wpe": wpe,
        "ln_f_w": jnp.ones((1, C), jnp.float32),
        "ln_f_b": jnp.zeros((1, C), jnp.float32),
        "ln1_w": jnp.ones((L, 1, C), jnp.float32),
        "ln1_b": jnp.zeros((L, 1, C), jnp.float32),
        "ln2_w": jnp.ones((L, 1, C), jnp.float32),
        "ln2_b": jnp.zeros((L, 1, C), jnp.float32),
        "w_qkv": jnp.stack(w_qkv).astype(jnp.bfloat16),   # (L, C, 3C)
        "b_qkv": jnp.zeros((L, 1, 3 * C), jnp.float32),
        "w_o": jnp.stack(w_o).astype(jnp.bfloat16),       # (L, C, C)
        "b_o": jnp.zeros((L, 1, C), jnp.float32),
        "w_fc": jnp.stack(w_fc).astype(jnp.bfloat16),     # (L, C, 4C)
        "b_fc": jnp.zeros((L, 1, 4 * C), jnp.float32),
        "w_p2": jnp.stack(w_p2).astype(jnp.bfloat16),     # (L, 4C, C)
        "b_p2": jnp.zeros((L, 1, C), jnp.float32),
    }


def gpt_forward(idx, params, cfg):
    B, T = idx.shape
    assert T <= cfg["block_size"]
    assert cfg["n_embd"] % cfg["n_head"] == 0
    # token + position embeddings (plain-JAX gather); dropout p=0 -> identity
    x = jnp.take(params["wte"], idx, axis=0) + params["wpe"][:T][None, :, :]
    x_last = run_blocks(x, params, cfg["n_head"])            # (B, 1, C)
    logits = run_lm_head(x_last, params["ln_f_w"], params["ln_f_b"],
                         params["wte"])
    return logits, None  # inference branch: last-token logits, no loss


if __name__ == "__main__":
    cfg = dict(block_size=16, vocab_size=512, n_layer=2, n_head=2,
               n_embd=256, dropout=0.0, bias=True)
    B, T = 2, 8

    key = jax.random.PRNGKey(0)
    pkey, ikey = jax.random.split(key)
    params = init_params(pkey, cfg)
    idx = jax.random.randint(ikey, (B, T), 0, cfg["vocab_size"], dtype=jnp.int32)

    logits, loss = gpt_forward(idx, params, cfg)
    logits = jax.block_until_ready(logits)

    assert logits.shape == (B, 1, cfg["vocab_size"]), logits.shape
    assert loss is None
    assert bool(jnp.all(jnp.isfinite(logits)))
    print("KERNEL_OK")
</pallas_src>

<mosaic_0001>
module attributes {stable_mosaic.version = 11 : i64} {
  func.func @gpt_blocks_kernel(%arg0: i32, %arg1: i32, %arg2: memref<1x8x256xf32, #tpu.memory_space<vmem>>, %arg3: memref<1x1x256xf32, #tpu.memory_space<vmem>>, %arg4: memref<1x1x256xf32, #tpu.memory_space<vmem>>, %arg5: memref<1x256x768xbf16, #tpu.memory_space<vmem>>, %arg6: memref<1x1x768xf32, #tpu.memory_space<vmem>>, %arg7: memref<1x256x256xbf16, #tpu.memory_space<vmem>>, %arg8: memref<1x1x256xf32, #tpu.memory_space<vmem>>, %arg9: memref<1x1x256xf32, #tpu.memory_space<vmem>>, %arg10: memref<1x1x256xf32, #tpu.memory_space<vmem>>, %arg11: memref<1x256x1024xbf16, #tpu.memory_space<vmem>>, %arg12: memref<1x1x1024xf32, #tpu.memory_space<vmem>>, %arg13: memref<1x1024x256xbf16, #tpu.memory_space<vmem>>, %arg14: memref<1x1x256xf32, #tpu.memory_space<vmem>>, %arg15: memref<1x1x256xf32, #tpu.memory_space<vmem>>, %arg16: memref<8x256xf32, #tpu.memory_space<vmem>>, %arg17: memref<1x8x768xbf16, #tpu.memory_space<vmem>>, %arg18: memref<1x8x256xbf16, #tpu.memory_space<vmem>>) attributes {dimension_semantics = [#tpu.dimension_semantics<parallel>, #tpu.dimension_semantics<arbitrary>], iteration_bounds = array<i64: 2, 2>, scalar_prefetch = 0 : i64, scratch_operands = 3 : i64, tpu.core_type = #tpu.core_type<tc>, window_params = [{transform_indices = @transform_0, window_bounds = array<i64: 1, 8, 256>}, {transform_indices = @transform_1, window_bounds = array<i64: 1, 1, 256>}, {transform_indices = @transform_2, window_bounds = array<i64: 1, 1, 256>}, {transform_indices = @transform_3, window_bounds = array<i64: 1, 256, 768>}, {transform_indices = @transform_4, window_bounds = array<i64: 1, 1, 768>}, {transform_indices = @transform_5, window_bounds = array<i64: 1, 256, 256>}, {transform_indices = @transform_6, window_bounds = array<i64: 1, 1, 256>}, {transform_indices = @transform_7, window_bounds = array<i64: 1, 1, 256>}, {transform_indices = @transform_8, window_bounds = array<i64: 1, 1, 256>}, {transform_indices = @transform_9, window_bounds = array<i64: 1, 256, 1024>}, {transform_indices = @transform_10, window_bounds = array<i64: 1, 1, 1024>}, {transform_indices = @transform_11, window_bounds = array<i64: 1, 1024, 256>}, {transform_indices = @transform_12, window_bounds = array<i64: 1, 1, 256>}, {transform_indices = @transform_13, window_bounds = array<i64: 1, 1, 256>}]} {
    %c0_i32 = arith.constant 0 : i32
    %0 = arith.cmpi eq, %arg1, %c0_i32 : i32
    %1 = arith.extui %0 : i1 to i32
    %c0_i32_0 = arith.constant 0 : i32
    %2 = arith.cmpi ne, %1, %c0_i32_0 : i32
    scf.if %2 {
      %c0_91 = arith.constant 0 : index
      %c0_92 = arith.constant 0 : index
      %c0_93 = arith.constant 0 : index
      %179 = vector.load %arg2[%c0_91, %c0_92, %c0_93] : memref<1x8x256xf32, #tpu.memory_space<vmem>>, vector<1x8x256xf32>
      %180 = vector.shape_cast %179 : vector<1x8x256xf32> to vector<8x256xf32>
      %c0_94 = arith.constant 0 : index
      %c0_95 = arith.constant 0 : index
      %181 = vector.load %arg16[%c0_94, %c0_95] : memref<8x256xf32, #tpu.memory_space<vmem>>, vector<8x256xf32>
      tpu.vector_store %arg16[%c0_94, %c0_95], %180 {strides = array<i32>} : memref<8x256xf32, #tpu.memory_space<vmem>>, vector<8x256xf32>,
    } else {
    }
    %c0 = arith.constant 0 : index
    %c0_1 = arith.constant 0 : index
    %3 = vector.load %arg16[%c0, %c0_1] : memref<8x256xf32, #tpu.memory_space<vmem>>, vector<8x256xf32>
    %c0_2 = arith.constant 0 : index
    %c0_3 = arith.constant 0 : index
    %c0_4 = arith.constant 0 : index
    %4 = vector.load %arg3[%c0_2, %c0_3, %c0_4] : memref<1x1x256xf32, #tpu.memory_space<vmem>>, vector<1x1x256xf32>
    %5 = vector.shape_cast %4 : vector<1x1x256xf32> to vector<1x256xf32>
    %c0_5 = arith.constant 0 : index
    %c0_6 = arith.constant 0 : index
    %c0_7 = arith.constant 0 : index
    %6 = vector.load %arg4[%c0_5, %c0_6, %c0_7] : memref<1x1x256xf32, #tpu.memory_space<vmem>>, vector<1x1x256xf32>
    %7 = vector.shape_cast %6 : vector<1x1x256xf32> to vector<1x256xf32>
    %cst = arith.constant dense<0.000000e+00> : vector<8xf32>
    %8 = vector.multi_reduction <add>, %3, %cst [1] : vector<8x256xf32> to vector<8xf32>
    %9 = vector.shape_cast %8 : vector<8xf32> to vector<8x1xf32>
    %cst_8 = arith.constant 2.560000e+02 : f32
    %10 = vector.broadcast %cst_8 : f32 to vector<8x1xf32>
    %11 = arith.divf %9, %10 : vector<8x1xf32>
    %12 = vector.broadcast %11 : vector<8x1xf32> to vector<8x256xf32>
    %13 = arith.subf %3, %12 : vector<8x256xf32>
    %14 = arith.mulf %13, %13 : vector<8x256xf32>
    %cst_9 = arith.constant dense<0.000000e+00> : vector<8xf32>
    %15 = vector.multi_reduction <add>, %14, %cst_9 [1] : vector<8x256xf32> to vector<8xf32>
    %16 = vector.shape_cast %15 : vector<8xf32> to vector<8x1xf32>
    %cst_10 = arith.constant 2.560000e+02 : f32
    %17 = vector.broadcast %cst_10 : f32 to vector<8x1xf32>
    %18 = arith.divf %16, %17 : vector<8x1xf32>
    %cst_11 = arith.constant 9.99999974E-6 : f32
    %19 = vector.broadcast %cst_11 : f32 to vector<8x1xf32>
    %20 = arith.addf %18, %19 : vector<8x1xf32>
    %21 = math.rsqrt %20 : vector<8x1xf32>
    %22 = vector.broadcast %21 : vector<8x1xf32> to vector<8x256xf32>
    %23 = arith.mulf %13, %22 : vector<8x256xf32>
    %24 = vector.broadcast %5 : vector<1x256xf32> to vector<8x256xf32>
    %25 = arith.mulf %23, %24 : vector<8x256xf32>
    %26 = vector.broadcast %7 : vector<1x256xf32> to vector<8x256xf32>
    %27 = arith.addf %25, %26 : vector<8x256xf32>
    %28 = tpu.iota {dimensions = array<i32: 1>} : vector<1x768xi32>
    %c256_i32 = arith.constant 256 : i32
    %29 = vector.broadcast %c256_i32 : i32 to vector<1x768xi32>
    %30 = arith.cmpi slt, %28, %29 : vector<1x768xi32>
    %cst_12 = arith.constant 0.0883883461 : f32
    %cst_13 = arith.constant 1.000000e+00 : f32
    %31 = vector.broadcast %cst_12 : f32 to vector<1x768xf32>
    %32 = vector.broadcast %cst_13 : f32 to vector<1x768xf32>
    %33 = arith.select %30, %31, %32 : vector<1x768xi1>, vector<1x768xf32>
    %34 = arith.truncf %27 : vector<8x256xf32> to vector<8x256xbf16>
    %c0_14 = arith.constant 0 : index
    %c0_15 = arith.constant 0 : index
    %c0_16 = arith.constant 0 : index
    %35 = vector.load %arg5[%c0_14, %c0_15, %c0_16] : memref<1x256x768xbf16, #tpu.memory_space<vmem>>, vector<1x256x768xbf16>
    %36 = vector.shape_cast %35 : vector<1x256x768xbf16> to vector<256x768xbf16>
    %cst_17 = arith.constant dense<0.000000e+00> : vector<8x768xf32>
    %37 = tpu.matmul %34, %36, %cst_17 {dimension_numbers = #tpu.dot_dimension_numbers<[1], [0], [0], [1], [0, 0, 1, 1], [], []>} : vector<8x256xbf16>, vector<256x768xbf16>, vector<8x768xf32> -> vector<8x768xf32>
    %c0_18 = arith.constant 0 : index
    %c0_19 = arith.constant 0 : index
    %c0_20 = arith.constant 0 : index
    %38 = vector.load %arg6[%c0_18, %c0_19, %c0_20] : memref<1x1x768xf32, #tpu.memory_space<vmem>>, vector<1x1x768xf32>
    %39 = vector.shape_cast %38 : vector<1x1x768xf32> to vector<1x768xf32>
    %40 = vector.broadcast %39 : vector<1x768xf32> to vector<8x768xf32>
    %41 = arith.addf %37, %40 : vector<8x768xf32>
    %42 = vector.broadcast %33 : vector<1x768xf32> to vector<8x768xf32>
    %43 = arith.mulf %41, %42 : vector<8x768xf32>
    %44 = vector.shape_cast %43 : vector<8x768xf32> to vector<1x8x768xf32>
    %45 = arith.truncf %44 : vector<1x8x768xf32> to vector<1x8x768xbf16>
    %c0_21 = arith.constant 0 : index
    %c0_22 = arith.constant 0 : index
    %c0_23 = arith.constant 0 : index
    %46 = vector.load %arg17[%c0_21, %c0_22, %c0_23] : memref<1x8x768xbf16, #tpu.memory_space<vmem>>, vector<1x8x768xbf16>
    tpu.vector_store %arg17[%c0_21, %c0_22, %c0_23], %45 {strides = array<i32>} : memref<1x8x768xbf16, #tpu.memory_space<vmem>>, vector<1x8x768xbf16>,
    %47 = tpu.iota {dimensions = array<i32: 0>} : vector<8x8xi32>
    %48 = tpu.iota {dimensions = array<i32: 1>} : vector<8x8xi32>
    %49 = arith.cmpi sge, %47, %48 : vector<8x8xi32>
    %c0_i32_24 = arith.constant 0 : i32
    %50 = arith.index_cast %c0_i32_24 : i32 to index
    %c0_25 = arith.constant 0 : index
    %c0_26 = arith.constant 0 : index
    %51 = vector.load %arg17[%50, %c0_25, %c0_26] : memref<1x8x768xbf16, #tpu.memory_space<vmem>>, vector<1x8x128xbf16>
    %52 = vector.shape_cast %51 : vector<1x8x128xbf16> to vector<8x128xbf16>
    %53 = arith.index_cast %c0_i32_24 : i32 to index
    %c0_27 = arith.constant 0 : index
    %c256 = arith.constant 256 : index
    %54 = vector.load %arg17[%53, %c0_27, %c256] : memref<1x8x768xbf16, #tpu.memory_space<vmem>>, vector<1x8x128xbf16>
    %55 = vector.shape_cast %54 : vector<1x8x128xbf16> to vector<8x128xbf16>
    %56 = arith.index_cast %c0_i32_24 : i32 to index
    %c0_28 = arith.constant 0 : index
    %c512 = arith.constant 512 : index
    %57 = vector.load %arg17[%56, %c0_28, %c512] : memref<1x8x768xbf16, #tpu.memory_space<vmem>>, vector<1x8x128xbf16>
    %58 = vector.shape_cast %57 : vector<1x8x128xbf16> to vector<8x128xbf16>
    %cst_29 = arith.constant dense<0.000000e+00> : vector<8x8xf32>
    %59 = tpu.matmul %52, %55, %cst_29 {dimension_numbers = #tpu.dot_dimension_numbers<[1], [1], [0], [0], [0, 0, 1, 0], [], []>} : vector<8x128xbf16>, vector<8x128xbf16>, vector<8x8xf32> -> vector<8x8xf32>
    %cst_30 = arith.constant -1.000000e+30 : f32
    %60 = vector.broadcast %cst_30 : f32 to vector<8x8xf32>
    %61 = arith.select %49, %59, %60 : vector<8x8xi1>, vector<8x8xf32>
    %cst_31 = arith.constant dense<0xFF800000> : vector<8xf32>
    %62 = vector.multi_reduction <maximumf>, %61, %cst_31 [1] : vector<8x8xf32> to vector<8xf32>
    %63 = vector.shape_cast %62 : vector<8xf32> to vector<8x1xf32>
    %64 = vector.broadcast %63 : vector<8x1xf32> to vector<8x8xf32>
    %65 = arith.subf %61, %64 : vector<8x8xf32>
    %66 = math.exp %65 : vector<8x8xf32>
    %cst_32 = arith.constant dense<0.000000e+00> : vector<8xf32>
    %67 = vector.multi_reduction <add>, %66, %cst_32 [1] : vector<8x8xf32> to vector<8xf32>
    %68 = vector.shape_cast %67 : vector<8xf32> to vector<8x1xf32>
    %69 = tpu.reciprocal %68 {approx = true} : vector<8x1xf32> -> vector<8x1xf32>
    %70 = vector.broadcast %69 : vector<8x1xf32> to vector<8x8xf32>
    %71 = arith.mulf %66, %70 : vector<8x8xf32>
    %72 = arith.truncf %71 : vector<8x8xf32> to vector<8x8xbf16>
    %cst_33 = arith.constant dense<0.000000e+00> : vector<8x128xf32>
    %73 = tpu.matmul %72, %58, %cst_33 {dimension_numbers = #tpu.dot_dimension_numbers<[1], [0], [0], [1], [0, 0, 1, 1], [], []>} : vector<8x8xbf16>, vector<8x128xbf16>, vector<8x128xf32> -> vector<8x128xf32>
    %74 = arith.truncf %73 : vector<8x128xf32> to vector<8x128xbf16>
    %75 = arith.index_cast %c0_i32_24 : i32 to index
    %c0_34 = arith.constant 0 : index
    %c0_35 = arith.constant 0 : index
    %76 = vector.load %arg18[%75, %c0_34, %c0_35] : memref<1x8x256xbf16, #tpu.memory_space<vmem>>, vector<1x8x128xbf16>
    %77 = vector.shape_cast %76 : vector<1x8x128xbf16> to vector<8x128xbf16>
    %78 = vector.shape_cast %74 : vector<8x128xbf16> to vector<1x8x128xbf16>
    tpu.vector_store %arg18[%75, %c0_34, %c0_35], %78 {strides = array<i32>} : memref<1x8x256xbf16, #tpu.memory_space<vmem>>, vector<1x8x128xbf16>,
    %79 = arith.index_cast %c0_i32_24 : i32 to index
    %c0_36 = arith.constant 0 : index
    %c128 = arith.constant 128 : index
    %80 = vector.load %arg17[%79, %c0_36, %c128] : memref<1x8x768xbf16, #tpu.memory_space<vmem>>, vector<1x8x128xbf16>
    %81 = vector.shape_cast %80 : vector<1x8x128xbf16> to vector<8x128xbf16>
    %82 = arith.index_cast %c0_i32_24 : i32 to index
    %c0_37 = arith.constant 0 : index
    %c384 = arith.constant 384 : index
    %83 = vector.load %arg17[%82, %c0_37, %c384] : memref<1x8x768xbf16, #tpu.memory_space<vmem>>, vector<1x8x128xbf16>
    %84 = vector.shape_cast %83 : vector<1x8x128xbf16> to vector<8x128xbf16>
    %85 = arith.index_cast %c0_i32_24 : i32 to index
    %c0_38 = arith.constant 0 : index
    %c640 = arith.constant 640 : index
    %86 = vector.load %arg17[%85, %c0_38, %c640] : memref<1x8x768xbf16, #tpu.memory_space<vmem>>, vector<1x8x128xbf16>
    %87 = vector.shape_cast %86 : vector<1x8x128xbf16> to vector<8x128xbf16>
    %cst_39 = arith.constant dense<0.000000e+00> : vector<8x8xf32>
    %88 = tpu.matmul %81, %84, %cst_39 {dimension_numbers = #tpu.dot_dimension_numbers<[1], [1], [0], [0], [0, 0, 1, 0], [], []>} : vector<8x128xbf16>, vector<8x128xbf16>, vector<8x8xf32> -> vector<8x8xf32>
    %cst_40 = arith.constant -1.000000e+30 : f32
    %89 = vector.broadcast %cst_40 : f32 to vector<8x8xf32>
    %90 = arith.select %49, %88, %89 : vector<8x8xi1>, vector<8x8xf32>
    %cst_41 = arith.constant dense<0xFF800000> : vector<8xf32>
    %91 = vector.multi_reduction <maximumf>, %90, %cst_41 [1] : vector<8x8xf32> to vector<8xf32>
    %92 = vector.shape_cast %91 : vector<8xf32> to vector<8x1xf32>
    %93 = vector.broadcast %92 : vector<8x1xf32> to vector<8x8xf32>
    %94 = arith.subf %90, %93 : vector<8x8xf32>
    %95 = math.exp %94 : vector<8x8xf32>
    %cst_42 = arith.constant dense<0.000000e+00> : vector<8xf32>
    %96 = vector.multi_reduction <add>, %95, %cst_42 [1] : vector<8x8xf32> to vector<8xf32>
    %97 = vector.shape_cast %96 : vector<8xf32> to vector<8x1xf32>
    %98 = tpu.reciprocal %97 {approx = true} : vector<8x1xf32> -> vector<8x1xf32>
    %99 = vector.broadcast %98 : vector<8x1xf32> to vector<8x8xf32>
    %100 = arith.mulf %95, %99 : vector<8x8xf32>
    %101 = arith.truncf %100 : vector<8x8xf32> to vector<8x8xbf16>
    %cst_43 = arith.constant dense<0.000000e+00> : vector<8x128xf32>
    %102 = tpu.matmul %101, %87, %cst_43 {dimension_numbers = #tpu.dot_dimension_numbers<[1], [0], [0], [1], [0, 0, 1, 1], [], []>} : vector<8x8xbf16>, vector<8x128xbf16>, vector<8x128xf32> -> vector<8x128xf32>
    %103 = arith.truncf %102 : vector<8x128xf32> to vector<8x128xbf16>
    %104 = arith.index_cast %c0_i32_24 : i32 to index
    %c0_44 = arith.constant 0 : index
    %c128_45 = arith.constant 128 : index
    %105 = vector.load %arg18[%104, %c0_44, %c128_45] : memref<1x8x256xbf16, #tpu.memory_space<vmem>>, vector<1x8x128xbf16>
    %106 = vector.shape_cast %105 : vector<1x8x128xbf16> to vector<8x128xbf16>
    %107 = vector.shape_cast %103 : vector<8x128xbf16> to vector<1x8x128xbf16>
    tpu.vector_store %arg18[%104, %c0_44, %c128_45], %107 {strides = array<i32>} : memref<1x8x256xbf16, #tpu.memory_space<vmem>>, vector<1x8x128xbf16>,
    %c1_i32 = arith.constant 1 : i32
    %c0_46 = arith.constant 0 : index
    %c0_47 = arith.constant 0 : index
    %c0_48 = arith.constant 0 : index
    %108 = vector.load %arg18[%c0_46, %c0_47, %c0_48] : memref<1x8x256xbf16, #tpu.memory_space<vmem>>, vector<1x8x256xbf16>
    %109 = vector.shape_cast %108 : vector<1x8x256xbf16> to vector<8x256xbf16>
    %c0_49 = arith.constant 0 : index
    %c0_50 = arith.constant 0 : index
    %c0_51 = arith.constant 0 : index
    %110 = vector.load %arg7[%c0_49, %c0_50, %c0_51] : memref<1x256x256xbf16, #tpu.memory_space<vmem>>, vector<1x256x256xbf16>
    %111 = vector.shape_cast %110 : vector<1x256x256xbf16> to vector<256x256xbf16>
    %cst_52 = arith.constant dense<0.000000e+00> : vector<8x256xf32>
    %112 = tpu.matmul %109, %111, %cst_52 {dimension_numbers = #tpu.dot_dimension_numbers<[1], [0], [0], [1], [0, 0, 1, 1], [], []>} : vector<8x256xbf16>, vector<256x256xbf16>, vector<8x256xf32> -> vector<8x256xf32>
    %113 = arith.addf %3, %112 : vector<8x256xf32>
    %c0_53 = arith.constant 0 : index
    %c0_54 = arith.constant 0 : index
    %c0_55 = arith.constant 0 : index
    %114 = vector.load %arg8[%c0_53, %c0_54, %c0_55] : memref<1x1x256xf32, #tpu.memory_space<vmem>>, vector<1x1x256xf32>
    %115 = vector.shape_cast %114 : vector<1x1x256xf32> to vector<1x256xf32>
    %116 = vector.broadcast %115 : vector<1x256xf32> to vector<8x256xf32>
    %117 = arith.addf %113, %116 : vector<8x256xf32>
    %c0_56 = arith.constant 0 : index
    %c0_57 = arith.constant 0 : index
    %c0_58 = arith.constant 0 : index
    %118 = vector.load %arg9[%c0_56, %c0_57, %c0_58] : memref<1x1x256xf32, #tpu.memory_space<vmem>>, vector<1x1x256xf32>
    %119 = vector.shape_cast %118 : vector<1x1x256xf32> to vector<1x256xf32>
    %c0_59 = arith.constant 0 : index
    %c0_60 = arith.constant 0 : index
    %c0_61 = arith.constant 0 : index
    %120 = vector.load %arg10[%c0_59, %c0_60, %c0_61] : memref<1x1x256xf32, #tpu.memory_space<vmem>>, vector<1x1x256xf32>
    %121 = vector.shape_cast %120 : vector<1x1x256xf32> to vector<1x256xf32>
    %cst_62 = arith.constant dense<0.000000e+00> : vector<8xf32>
    %122 = vector.multi_reduction <add>, %117, %cst_62 [1] : vector<8x256xf32> to vector<8xf32>
    %123 = vector.shape_cast %122 : vector<8xf32> to vector<8x1xf32>
    %cst_63 = arith.constant 2.560000e+02 : f32
    %124 = vector.broadcast %cst_63 : f32 to vector<8x1xf32>
    %125 = arith.divf %123, %124 : vector<8x1xf32>
    %126 = vector.broadcast %125 : vector<8x1xf32> to vector<8x256xf32>
    %127 = arith.subf %117, %126 : vector<8x256xf32>
    %128 = arith.mulf %127, %127 : vector<8x256xf32>
    %cst_64 = arith.constant dense<0.000000e+00> : vector<8xf32>
    %129 = vector.multi_reduction <add>, %128, %cst_64 [1] : vector<8x256xf32> to vector<8xf32>
    %130 = vector.shape_cast %129 : vector<8xf32> to vector<8x1xf32>
    %cst_65 = arith.constant 2.560000e+02 : f32
    %131 = vector.broadcast %cst_65 : f32 to vector<8x1xf32>
    %132 = arith.divf %130, %131 : vector<8x1xf32>
    %cst_66 = arith.constant 9.99999974E-6 : f32
    %133 = vector.broadcast %cst_66 : f32 to vector<8x1xf32>
    %134 = arith.addf %132, %133 : vector<8x1xf32>
    %135 = math.rsqrt %134 : vector<8x1xf32>
    %136 = vector.broadcast %135 : vector<8x1xf32> to vector<8x256xf32>
    %137 = arith.mulf %127, %136 : vector<8x256xf32>
    %138 = vector.broadcast %119 : vector<1x256xf32> to vector<8x256xf32>
    %139 = arith.mulf %137, %138 : vector<8x256xf32>
    %140 = vector.broadcast %121 : vector<1x256xf32> to vector<8x256xf32>
    %141 = arith.addf %139, %140 : vector<8x256xf32>
    %142 = arith.truncf %141 : vector<8x256xf32> to vector<8x256xbf16>
    %cst_67 = arith.constant 0.000000e+00 : f32
    %143 = vector.broadcast %cst_67 : f32 to vector<8x256xf32>
    %c0_68 = arith.constant 0 : index
    %c0_69 = arith.constant 0 : index
    %c0_70 = arith.constant 0 : index
    %144 = vector.load %arg11[%c0_68, %c0_69, %c0_70] : memref<1x256x1024xbf16, #tpu.memory_space<vmem>>, vector<1x256x1024xbf16>
    %145 = vector.shape_cast %144 : vector<1x256x1024xbf16> to vector<256x1024xbf16>
    %cst_71 = arith.constant dense<0.000000e+00> : vector<8x1024xf32>
    %146 = tpu.matmul %142, %145, %cst_71 {dimension_numbers = #tpu.dot_dimension_numbers<[1], [0], [0], [1], [0, 0, 1, 1], [], []>} : vector<8x256xbf16>, vector<256x1024xbf16>, vector<8x1024xf32> -> vector<8x1024xf32>
    %c0_72 = arith.constant 0 : index
    %c0_73 = arith.constant 0 : index
    %c0_74 = arith.constant 0 : index
    %147 = vector.load %arg12[%c0_72, %c0_73, %c0_74] : memref<1x1x1024xf32, #tpu.memory_space<vmem>>, vector<1x1x1024xf32>
    %148 = vector.shape_cast %147 : vector<1x1x1024xf32> to vector<1x1024xf32>
    %149 = vector.broadcast %148 : vector<1x1024xf32> to vector<8x1024xf32>
    %150 = arith.addf %146, %149 : vector<8x1024xf32>
    %151 = arith.mulf %150, %150 : vector<8x1024xf32>
    %cst_75 = arith.constant 5.000000e-01 : f32
    %152 = vector.broadcast %cst_75 : f32 to vector<8x1024xf32>
    %153 = arith.mulf %152, %150 : vector<8x1024xf32>
    %cst_76 = arith.constant 0.797884583 : f32
    %154 = vector.broadcast %cst_76 : f32 to vector<8x1024xf32>
    %155 = arith.mulf %154, %150 : vector<8x1024xf32>
    %cst_77 = arith.constant 4.471500e-02 : f32
    %156 = vector.broadcast %cst_77 : f32 to vector<8x1024xf32>
    %157 = arith.mulf %156, %151 : vector<8x1024xf32>
    %cst_78 = arith.constant 1.000000e+00 : f32
    %158 = vector.broadcast %cst_78 : f32 to vector<8x1024xf32>
    %159 = arith.addf %158, %157 : vector<8x1024xf32>
    %160 = arith.mulf %155, %159 : vector<8x1024xf32>
    %161 = math.tanh %160 : vector<8x1024xf32>
    %cst_79 = arith.constant 1.000000e+00 : f32
    %162 = vector.broadcast %cst_79 : f32 to vector<8x1024xf32>
    %163 = arith.addf %162, %161 : vector<8x1024xf32>
    %164 = arith.mulf %153, %163 : vector<8x1024xf32>
    %165 = arith.truncf %164 : vector<8x1024xf32> to vector<8x1024xbf16>
    %c0_80 = arith.constant 0 : index
    %c0_81 = arith.constant 0 : index
    %c0_82 = arith.constant 0 : index
    %166 = vector.load %arg13[%c0_80, %c0_81, %c0_82] : memref<1x1024x256xbf16, #tpu.memory_space<vmem>>, vector<1x1024x256xbf16>
    %167 = vector.shape_cast %166 : vector<1x1024x256xbf16> to vector<1024x256xbf16>
    %cst_83 = arith.constant dense<0.000000e+00> : vector<8x256xf32>
    %168 = tpu.matmul %165, %167, %cst_83 {dimension_numbers = #tpu.dot_dimension_numbers<[1], [0], [0], [1], [0, 0, 1, 1], [], []>} : vector<8x1024xbf16>, vector<1024x256xbf16>, vector<8x256xf32> -> vector<8x256xf32>
    %169 = arith.addf %143, %168 : vector<8x256xf32>
    %170 = arith.addf %117, %169 : vector<8x256xf32>
    %c0_84 = arith.constant 0 : index
    %c0_85 = arith.constant 0 : index
    %c0_86 = arith.constant 0 : index
    %171 = vector.load %arg14[%c0_84, %c0_85, %c0_86] : memref<1x1x256xf32, #tpu.memory_space<vmem>>, vector<1x1x256xf32>
    %172 = vector.shape_cast %171 : vector<1x1x256xf32> to vector<1x256xf32>
    %173 = vector.broadcast %172 : vector<1x256xf32> to vector<8x256xf32>
    %174 = arith.addf %170, %173 : vector<8x256xf32>
    %c0_87 = arith.constant 0 : index
    %c0_88 = arith.constant 0 : index
    %175 = vector.load %arg16[%c0_87, %c0_88] : memref<8x256xf32, #tpu.memory_space<vmem>>, vector<8x256xf32>
    tpu.vector_store %arg16[%c0_87, %c0_88], %174 {strides = array<i32>} : memref<8x256xf32, #tpu.memory_space<vmem>>, vector<8x256xf32>,
    %c1_i32_89 = arith.constant 1 : i32
    %176 = arith.cmpi eq, %arg1, %c1_i32_89 : i32
    %177 = arith.extui %176 : i1 to i32
    %c0_i32_90 = arith.constant 0 : i32
    %178 = arith.cmpi ne, %177, %c0_i32_90 : i32
    scf.if %178 {
      %c7 = arith.constant 7 : index
      %c0_91 = arith.constant 0 : index
      %179 = vector.load %arg16[%c7, %c0_91] : memref<8x256xf32, #tpu.memory_space<vmem>>, vector<1x256xf32>
      %c0_92 = arith.constant 0 : index
      %c0_93 = arith.constant 0 : index
      %c0_94 = arith.constant 0 : index
      %180 = vector.load %arg15[%c0_92, %c0_93, %c0_94] : memref<1x1x256xf32, #tpu.memory_space<vmem>>, vector<1x1x256xf32>
      %181 = vector.shape_cast %180 : vector<1x1x256xf32> to vector<1x256xf32>
      %182 = vector.shape_cast %179 : vector<1x256xf32> to vector<1x1x256xf32>
      tpu.vector_store %arg15[%c0_92, %c0_93, %c0_94], %182 {strides = array<i32>} : memref<1x1x256xf32, #tpu.memory_space<vmem>>, vector<1x1x256xf32>,
    } else {
    }
    return
  }
  func.func @transform_0(%arg0: i32, %arg1: i32) -> (i32, i32, i32) {
    %c0_i32 = arith.constant 0 : i32
    %c0_i32_0 = arith.constant 0 : i32
    %c0_i32_1 = arith.constant 0 : i32
    return %arg0, %c0_i32, %c0_i32_0 : i32, i32, i32
  }
  func.func @transform_1(%arg0: i32, %arg1: i32) -> (i32, i32, i32) {
    %c0_i32 = arith.constant 0 : i32
    %c0_i32_0 = arith.constant 0 : i32
    %c0_i32_1 = arith.constant 0 : i32
    return %arg1, %c0_i32, %c0_i32_0 : i32, i32, i32
  }
  func.func @transform_2(%arg0: i32, %arg1: i32) -> (i32, i32, i32) {
    %c0_i32 = arith.constant 0 : i32
    %c0_i32_0 = arith.constant 0 : i32
    %c0_i32_1 = arith.constant 0 : i32
    return %arg1, %c0_i32, %c0_i32_0 : i32, i32, i32
  }
  func.func @transform_3(%arg0: i32, %arg1: i32) -> (i32, i32, i32) {
    %c0_i32 = arith.constant 0 : i32
    %c0_i32_0 = arith.constant 0 : i32
    %c0_i32_1 = arith.constant 0 : i32
    return %arg1, %c0_i32, %c0_i32_0 : i32, i32, i32
  }
  func.func @transform_4(%arg0: i32, %arg1: i32) -> (i32, i32, i32) {
    %c0_i32 = arith.constant 0 : i32
    %c0_i32_0 = arith.constant 0 : i32
    %c0_i32_1 = arith.constant 0 : i32
    return %arg1, %c0_i32, %c0_i32_0 : i32, i32, i32
  }
  func.func @transform_5(%arg0: i32, %arg1: i32) -> (i32, i32, i32) {
    %c0_i32 = arith.constant 0 : i32
    %c0_i32_0 = arith.constant 0 : i32
    %c0_i32_1 = arith.constant 0 : i32
    return %arg1, %c0_i32, %c0_i32_0 : i32, i32, i32
  }
  func.func @transform_6(%arg0: i32, %arg1: i32) -> (i32, i32, i32) {
    %c0_i32 = arith.constant 0 : i32
    %c0_i32_0 = arith.constant 0 : i32
    %c0_i32_1 = arith.constant 0 : i32
    return %arg1, %c0_i32, %c0_i32_0 : i32, i32, i32
  }
  func.func @transform_7(%arg0: i32, %arg1: i32) -> (i32, i32, i32) {
    %c0_i32 = arith.constant 0 : i32
    %c0_i32_0 = arith.constant 0 : i32
    %c0_i32_1 = arith.constant 0 : i32
    return %arg1, %c0_i32, %c0_i32_0 : i32, i32, i32
  }
  func.func @transform_8(%arg0: i32, %arg1: i32) -> (i32, i32, i32) {
    %c0_i32 = arith.constant 0 : i32
    %c0_i32_0 = arith.constant 0 : i32
    %c0_i32_1 = arith.constant 0 : i32
    return %arg1, %c0_i32, %c0_i32_0 : i32, i32, i32
  }
  func.func @transform_9(%arg0: i32, %arg1: i32) -> (i32, i32, i32) {
    %c0_i32 = arith.constant 0 : i32
    %c0_i32_0 = arith.constant 0 : i32
    %c0_i32_1 = arith.constant 0 : i32
    return %arg1, %c0_i32, %c0_i32_0 : i32, i32, i32
  }
  func.func @transform_10(%arg0: i32, %arg1: i32) -> (i32, i32, i32) {
    %c0_i32 = arith.constant 0 : i32
    %c0_i32_0 = arith.constant 0 : i32
    %c0_i32_1 = arith.constant 0 : i32
    return %arg1, %c0_i32, %c0_i32_0 : i32, i32, i32
  }
  func.func @transform_11(%arg0: i32, %arg1: i32) -> (i32, i32, i32) {
    %c0_i32 = arith.constant 0 : i32
    %c0_i32_0 = arith.constant 0 : i32
    %c0_i32_1 = arith.constant 0 : i32
    return %arg1, %c0_i32, %c0_i32_0 : i32, i32, i32
  }
  func.func @transform_12(%arg0: i32, %arg1: i32) -> (i32, i32, i32) {
    %c0_i32 = arith.constant 0 : i32
    %c0_i32_0 = arith.constant 0 : i32
    %c0_i32_1 = arith.constant 0 : i32
    return %arg1, %c0_i32, %c0_i32_0 : i32, i32, i32
  }
  func.func @transform_13(%arg0: i32, %arg1: i32) -> (i32, i32, i32) {
    %c0_i32 = arith.constant 0 : i32
    %c0_i32_0 = arith.constant 0 : i32
    %c0_i32_1 = arith.constant 0 : i32
    return %arg0, %c0_i32, %c0_i32_0 : i32, i32, i32
  }
}

</mosaic_0001>

<llo_original>
// kernel: tpu_custom_call.1
$region0: #{tpu_custom_call.1}
  #allocation0 [shape = 'u32[]', space=smem, size = 0x4, offset = 0x4, fixed_abs, tag = 'smem constant byte address 0x4 - core index']
  #allocation1 [shape = 'u32[72,128]{1,0:T(1,128)}', space=vmem, size = 0x9000, scoped, tag = 'internal scratch']
  #allocation2 [shape = 'f32[8,256]{1,0:T(8,128)}', space=vmem, size = 0x2000, scoped, tag = 'scratch operand']
  #allocation3 [shape = 'bf16[1,8,768]{2,1,0:T(8,128)(2,1)}', space=vmem, size = 0x3000, scoped, tag = 'scratch operand']
  #allocation4 [shape = 'bf16[1,8,256]{2,1,0:T(8,128)(2,1)}', space=vmem, size = 0x1000, scoped, tag = 'scratch operand']
  %s0 = inlined_call_operand.hbm [shape: f32[2,8,256], index: 0, kind: input, shape index: {}]
  %s1 = inlined_call_operand.hbm [shape: f32[2,1,256], index: 1, kind: input, shape index: {}]
  %s2 = inlined_call_operand.hbm [shape: f32[2,1,256], index: 2, kind: input, shape index: {}]
  %s3 = inlined_call_operand.hbm [shape: bf16[2,256,768], index: 3, kind: input, shape index: {}]
  %s4 = inlined_call_operand.hbm [shape: f32[2,1,768], index: 4, kind: input, shape index: {}]
  %s5 = inlined_call_operand.hbm [shape: bf16[2,256,256], index: 5, kind: input, shape index: {}]
  %s6 = inlined_call_operand.vmem [shape: f32[2,1,256], index: 6, kind: input, shape index: {}]
  %s7 = inlined_call_operand.hbm [shape: f32[2,1,256], index: 7, kind: input, shape index: {}]
  %s8 = inlined_call_operand.hbm [shape: f32[2,1,256], index: 8, kind: input, shape index: {}]
  %s9 = inlined_call_operand.hbm [shape: bf16[2,256,1024], index: 9, kind: input, shape index: {}]
  %s10 = inlined_call_operand.hbm [shape: f32[2,1,1024], index: 10, kind: input, shape index: {}]
  %s11 = inlined_call_operand.hbm [shape: bf16[2,1024,256], index: 11, kind: input, shape index: {}]
  %s12 = inlined_call_operand.vmem [shape: f32[2,1,256], index: 12, kind: input, shape index: {}]
  %s13 = inlined_call_operand.hbm [shape: f32[2,1,256], index: 13, kind: output, shape index: {}]
  %s14 = sld [smem:[#allocation0]]
  $region137: #{tpu_custom_call.1} parent=0
    _
  %s16 = ssub.s32 1, %s14
  %s17 = scalar_select 0, %s16, %s14
  $region1: #{tpu_custom_call.1} parent=0
    #allocation5 [shape = 'u8[16384]{0}', space=vmem, size = 0x4000, scoped, tag = 'input window, operand 0']
    #allocation6 [shape = 's32[2]{0}', space=sflag, size = 0x8, scoped, tag = 'scoped memory for tpu_custom_call.1']
    #allocation7 [shape = 's32[2]{0}', space=sflag, size = 0x8, scoped, tag = 'scoped memory for tpu_custom_call.1']
    #allocation8 [shape = 'u8[2048]{0}', space=vmem, size = 0x800, scoped, tag = 'input window, operand 1']
    #allocation9 [shape = 's32[2]{0}', space=sflag, size = 0x8, scoped, tag = 'scoped memory for tpu_custom_call.1']
    #allocation10 [shape = 'u8[2048]{0}', space=vmem, size = 0x800, scoped, tag = 'input window, operand 2']
    #allocation11 [shape = 'u8[786432]{0}', space=vmem, size = 0xc0000, scoped, tag = 'input window, operand 3']
    #allocation12 [shape = 's32[2]{0}', space=sflag, size = 0x8, scoped, tag = 'scoped memory for tpu_custom_call.1']
    #allocation13 [shape = 'u8[6144]{0}', space=vmem, size = 0x1800, scoped, tag = 'input window, operand 4']
    #allocation14 [shape = 'u8[262144]{0}', space=vmem, size = 0x40000, scoped, tag = 'input window, operand 5']
    #allocation15 [shape = 's32[2]{0}', space=sflag, size = 0x8, scoped, tag = 'scoped memory for tpu_custom_call.1']
    #allocation16 [shape = 'u8[2048]{0}', space=vmem, size = 0x800, scoped, tag = 'input window, operand 7']
    #allocation17 [shape = 'u8[2048]{0}', space=vmem, size = 0x800, scoped, tag = 'input window, operand 8']
    #allocation18 [shape = 's32[2]{0}', space=sflag, size = 0x8, scoped, tag = 'scoped memory for tpu_custom_call.1']
    #allocation19 [shape = 'u8[1048576]{0}', space=vmem, size = 0x100000, scoped, tag = 'input window, operand 9']
    #allocation20 [shape = 'u8[8192]{0}', space=vmem, size = 0x2000, scoped, tag = 'input window, operand 10']
    #allocation21 [shape = 's32[2]{0}', space=sflag, size = 0x8, scoped, tag = 'scoped memory for tpu_custom_call.1']
    #allocation22 [shape = 'u8[1048576]{0}', space=vmem, size = 0x100000, scoped, tag = 'input window, operand 11']
    #allocation23 [shape = 'u8[2048]{0}', space=vmem, size = 0x800, scoped, tag = 'output window, operand 0']
    %18 = vsyncpa [#allocation6], 0
    %s19 = scalar_lea.sflag [#allocation6], 1
    %20 = vsyncpa %s19, 0
    %21 = vsyncpa [#allocation9], 0
    %s22 = scalar_lea.sflag [#allocation9], 1
    %23 = vsyncpa %s22, 0
    %24 = vsyncpa [#allocation12], 0
    %s25 = scalar_lea.sflag [#allocation12], 1
    %26 = vsyncpa %s25, 0
    %27 = vsyncpa [#allocation15], 0
    %s28 = scalar_lea.sflag [#allocation15], 1
    %29 = vsyncpa %s28, 0
    %30 = vsyncpa [#allocation18], 0
    %s31 = scalar_lea.sflag [#allocation18], 1
    %32 = vsyncpa %s31, 0
    %33 = vsyncpa [#allocation21], 0
    %s34 = scalar_lea.sflag [#allocation21], 1
    %35 = vsyncpa %s34, 0
    %36 = vsyncpa [#allocation7], 0
    %s37 = scalar_lea.sflag [#allocation7], 1
    %38 = vsyncpa %s37, 0
    loop: start=0, step=1, limit=6
    $region2: #{tpu_custom_call.1} parent=1 // loop_pre_header
      _
    $region3: #{tpu_custom_call.1} parent=1 // loop_header
      %s40 = sphi 0, %s44
      %p41 = scmp.ge.s32.totalorder %s40, 6
      %s47 = sphi 0, %s59
      %s48 = sphi 0, %s55
      %s49 = sphi 0, %s47
      %s50 = sphi 0, %s48
      %s51 = sphi 0, %s49
      %s52 = sphi 0, %s50
      %s62 = sphi 0, %s64
      %s65 = sphi 0, %s62
      %s66 = sphi 0, %s65
      %s82 = sphi 0, %s66
      %s88 = sphi 0, %s90
      %s91 = sphi 0, %s88
      %s92 = sphi 0, %s91
      %s108 = sphi 0, %s92
      %s114 = sphi 0, %s116
      %s117 = sphi 0, %s114
      %s118 = sphi 0, %s117
      %s134 = sphi 0, %s118
      %s140 = sphi 0, %s142
      %s143 = sphi 0, %s140
      %s144 = sphi 0, %s143
      %s160 = sphi 0, %s144
      %s166 = sphi 0, %s168
      %s169 = sphi 0, %s166
      %s170 = sphi 0, %s169
      %s186 = sphi 0, %s170
      %s192 = sphi 0, %s194
      %s195 = sphi 0, %s192
      %s196 = sphi 0, %s195
      %s212 = sphi 0, %s196
      %s218 = sphi 0, %s220
      %s221 = sphi 0, %s218
      %s222 = sphi 0, %s221
      %s238 = sphi 0, %s222
      %s244 = sphi 0, %s246
      %s247 = sphi 0, %s244
      %s248 = sphi 0, %s247
      %s264 = sphi 0, %s248
      %s270 = sphi 0, %s272
      %s273 = sphi 0, %s270
      %s274 = sphi 0, %s273
      %s290 = sphi 0, %s274
      %s296 = sphi 0, %s298
      %s299 = sphi 0, %s296
      %s300 = sphi 0, %s299
      %s316 = sphi 0, %s300
      %s322 = sphi 0, %s324
      %s325 = sphi 0, %s322
      %s326 = sphi 0, %s325
      %s342 = sphi 0, %s326
      %s348 = sphi 0, %s350
      %s351 = sphi 0, %s348
      %s352 = sphi 0, %s351
      %s368 = sphi 0, %s352
      %s374 = sphi 0, %s376
      %s377 = sphi 0, %s374
      %s378 = sphi 0, %s377
      %s394 = sphi 0, %s378
      %s400 = sphi 0, %s402
      %s403 = sphi 0, %s400
      %s404 = sphi 0, %s403
      %s420 = sphi 0, %s404
    $region4: #{tpu_custom_call.1} parent=1 // loop_header_branch
      %43 = sbr.rel (%p41) target = $region8
    $region5: #{tpu_custom_call.1} parent=1 // loop_body
      %s45 = ssub.s32 %s40, 1
      %s46 = ssub.s32 %s40, 2
      %s53 = sadd.s32 1, %s48
      %p54 = scmp.ge.s32.totalorder %s53, 2
      %s55 = scalar_select %p54, 0, %s53
      %s56 = sadd.s32 1, %s47
      %s57 = scalar_select %p54, %s56, %s47
      %p58 = scmp.ge.s32.totalorder %s57, 2
      %s59 = scalar_select %p58, 0, %s57
      %s60 = ssub.s32 %s47, %s59
      %p61 = scmp.eq.s32.totalorder %s60, 0
      %s63 = sadd.s32 %s62, 1
      %s64 = scalar_select %p61, %s62, %s63
      %p67 = pneg %p61
      %p68 = scmp.eq.s32.totalorder %s40, 3
      %p69 = por %p67, %p68
      %p70 = scmp.ne.s32.totalorder %s62, %s65
      %p71 = scmp.eq.s32.totalorder %s40, 0
      %p72 = por %p70, %p71
      %p73 = scmp.ne.s32.totalorder %s62, %s65
      %p74 = scmp.eq.s32.totalorder %s45, 3
      %p75 = por %p73, %p74
      %p76 = scmp.ne.s32.totalorder %s65, %s66
      %p77 = scmp.eq.s32.totalorder %s45, 0
      %p78 = por %p76, %p77
      %p79 = scmp.ne.s32.totalorder %s65, %s66
      %p80 = scmp.eq.s32.totalorder %s46, 3
      %p81 = por %p79, %p80
      %p83 = scmp.ne.s32.totalorder %s66, %s82
      %p84 = scmp.eq.s32.totalorder %s46, 0
      %p85 = por %p83, %p84
      %s86 = ssub.s32 %s48, %s55
      %p87 = scmp.eq.s32.totalorder %s86, 0
      %s89 = sadd.s32 %s88, 1
      %s90 = scalar_select %p87, %s88, %s89
      %p93 = pneg %p87
      %p94 = scmp.eq.s32.totalorder %s40, 3
      %p95 = por %p93, %p94
      %p96 = scmp.ne.s32.totalorder %s88, %s91
      %p97 = scmp.eq.s32.totalorder %s40, 0
      %p98 = por %p96, %p97
      %p99 = scmp.ne.s32.totalorder %s88, %s91
      %p100 = scmp.eq.s32.totalorder %s45, 3
      %p101 = por %p99, %p100
      %p102 = scmp.ne.s32.totalorder %s91, %s92
      %p103 = scmp.eq.s32.totalorder %s45, 0
      %p104 = por %p102, %p103
      %p105 = scmp.ne.s32.totalorder %s91, %s92
      %p106 = scmp.eq.s32.totalorder %s46, 3
      %p107 = por %p105, %p106
      %p109 = scmp.ne.s32.totalorder %s92, %s108
      %p110 = scmp.eq.s32.totalorder %s46, 0
      %p111 = por %p109, %p110
      %s112 = ssub.s32 %s48, %s55
      %p113 = scmp.eq.s32.totalorder %s112, 0
      %s115 = sadd.s32 %s114, 1
      %s116 = scalar_select %p113, %s114, %s115
      %p119 = pneg %p113
      %p120 = scmp.eq.s32.totalorder %s40, 3
      %p121 = por %p119, %p120
      %p122 = scmp.ne.s32.totalorder %s114, %s117
      %p123 = scmp.eq.s32.totalorder %s40, 0
      %p124 = por %p122, %p123
      %p125 = scmp.ne.s32.totalorder %s114, %s117
      %p126 = scmp.eq.s32.totalorder %s45, 3
      %p127 = por %p125, %p126
      %p128 = scmp.ne.s32.totalorder %s117, %s118
      %p129 = scmp.eq.s32.totalorder %s45, 0
      %p130 = por %p128, %p129
      %p131 = scmp.ne.s32.totalorder %s117, %s118
      %p132 = scmp.eq.s32.totalorder %s46, 3
      %p133 = por %p131, %p132
      %p135 = scmp.ne.s32.totalorder %s118, %s134
      %p136 = scmp.eq.s32.totalorder %s46, 0
      %p137 = por %p135, %p136
      %s138 = ssub.s32 %s48, %s55
      %p139 = scmp.eq.s32.totalorder %s138, 0
      %s141 = sadd.s32 %s140, 1
      %s142 = scalar_select %p139, %s140, %s141
      %p145 = pneg %p139
      %p146 = scmp.eq.s32.totalorder %s40, 3
      %p147 = por %p145, %p146
      %p148 = scmp.ne.s32.totalorder %s140, %s143
      %p149 = scmp.eq.s32.totalorder %s40, 0
      %p150 = por %p148, %p149
      %p151 = scmp.ne.s32.totalorder %s140, %s143
      %p152 = scmp.eq.s32.totalorder %s45, 3
      %p153 = por %p151, %p152
      %p154 = scmp.ne.s32.totalorder %s143, %s144
      %p155 = scmp.eq.s32.totalorder %s45, 0
      %p156 = por %p154, %p155
      %p157 = scmp.ne.s32.totalorder %s143, %s144
      %p158 = scmp.eq.s32.totalorder %s46, 3
      %p159 = por %p157, %p158
      %p161 = scmp.ne.s32.totalorder %s144, %s160
      %p162 = scmp.eq.s32.totalorder %s46, 0
      %p163 = por %p161, %p162
      %s164 = ssub.s32 %s48, %s55
      %p165 = scmp.eq.s32.totalorder %s164, 0
      %s167 = sadd.s32 %s166, 1
      %s168 = scalar_select %p165, %s166, %s167
      %p171 = pneg %p165
      %p172 = scmp.eq.s32.totalorder %s40, 3
      %p173 = por %p171, %p172
      %p174 = scmp.ne.s32.totalorder %s166, %s169
      %p175 = scmp.eq.s32.totalorder %s40, 0
      %p176 = por %p174, %p175
      %p177 = scmp.ne.s32.totalorder %s166, %s169
      %p178 = scmp.eq.s32.totalorder %s45, 3
      %p179 = por %p177, %p178
      %p180 = scmp.ne.s32.totalorder %s169, %s170
      %p181 = scmp.eq.s32.totalorder %s45, 0
      %p182 = por %p180, %p181
      %p183 = scmp.ne.s32.totalorder %s169, %s170
      %p184 = scmp.eq.s32.totalorder %s46, 3
      %p185 = por %p183, %p184
      %p187 = scmp.ne.s32.totalorder %s170, %s186
      %p188 = scmp.eq.s32.totalorder %s46, 0
      %p189 = por %p187, %p188
      %s190 = ssub.s32 %s48, %s55
      %p191 = scmp.eq.s32.totalorder %s190, 0
      %s193 = sadd.s32 %s192, 1
      %s194 = scalar_select %p191, %s192, %s193
      %p197 = pneg %p191
      %p198 = scmp.eq.s32.totalorder %s40, 3
      %p199 = por %p197, %p198
      %p200 = scmp.ne.s32.totalorder %s192, %s195
      %p201 = scmp.eq.s32.totalorder %s40, 0
      %p202 = por %p200, %p201
      %p203 = scmp.ne.s32.totalorder %s192, %s195
      %p204 = scmp.eq.s32.totalorder %s45, 3
      %p205 = por %p203, %p204
      %p206 = scmp.ne.s32.totalorder %s195, %s196
      %p207 = scmp.eq.s32.totalorder %s45, 0
      %p208 = por %p206, %p207
      %p209 = scmp.ne.s32.totalorder %s195, %s196
      %p210 = scmp.eq.s32.totalorder %s46, 3
      %p211 = por %p209, %p210
      %p213 = scmp.ne.s32.totalorder %s196, %s212
      %p214 = scmp.eq.s32.totalorder %s46, 0
      %p215 = por %p213, %p214
      %s216 = ssub.s32 %s48, %s55
      %p217 = scmp.eq.s32.totalorder %s216, 0
      %s219 = sadd.s32 %s218, 1
      %s220 = scalar_select %p217, %s218, %s219
      %p223 = pneg %p217
      %p224 = scmp.eq.s32.totalorder %s40, 3
      %p225 = por %p223, %p224
      %p226 = scmp.ne.s32.totalorder %s218, %s221
      %p227 = scmp.eq.s32.totalorder %s40, 0
      %p228 = por %p226, %p227
      %p229 = scmp.ne.s32.totalorder %s218, %s221
      %p230 = scmp.eq.s32.totalorder %s45, 3
      %p231 = por %p229, %p230
      %p232 = scmp.ne.s32.totalorder %s221, %s222
      %p233 = scmp.eq.s32.totalorder %s45, 0
      %p234 = por %p232, %p233
      %p235 = scmp.ne.s32.totalorder %s221, %s222
      %p236 = scmp.eq.s32.totalorder %s46, 3
      %p237 = por %p235, %p236
      %p239 = scmp.ne.s32.totalorder %s222, %s238
      %p240 = scmp.eq.s32.totalorder %s46, 0
      %p241 = por %p239, %p240
      %s242 = ssub.s32 %s48, %s55
      %p243 = scmp.eq.s32.totalorder %s242, 0
      %s245 = sadd.s32 %s244, 1
      %s246 = scalar_select %p243, %s244, %s245
      %p249 = pneg %p243
      %p250 = scmp.eq.s32.totalorder %s40, 3
      %p251 = por %p249, %p250
      %p252 = scmp.ne.s32.totalorder %s244, %s247
      %p253 = scmp.eq.s32.totalorder %s40, 0
      %p254 = por %p252, %p253
      %p255 = scmp.ne.s32.totalorder %s244, %s247
      %p256 = scmp.eq.s32.totalorder %s45, 3
      %p257 = por %p255, %p256
      %p258 = scmp.ne.s32.totalorder %s247, %s248
      %p259 = scmp.eq.s32.totalorder %s45, 0
      %p260 = por %p258, %p259
      %p261 = scmp.ne.s32.totalorder %s247, %s248
      %p262 = scmp.eq.s32.totalorder %s46, 3
      %p263 = por %p261, %p262
      %p265 = scmp.ne.s32.totalorder %s248, %s264
      %p266 = scmp.eq.s32.totalorder %s46, 0
      %p267 = por %p265, %p266
      %s268 = ssub.s32 %s48, %s55
      %p269 = scmp.eq.s32.totalorder %s268, 0
      %s271 = sadd.s32 %s270, 1
      %s272 = scalar_select %p269, %s270, %s271
      %p275 = pneg %p269
      %p276 = scmp.eq.s32.totalorder %s40, 3
      %p277 = por %p275, %p276
      %p278 = scmp.ne.s32.totalorder %s270, %s273
      %p279 = scmp.eq.s32.totalorder %s40, 0
      %p280 = por %p278, %p279
      %p281 = scmp.ne.s32.totalorder %s270, %s273
      %p282 = scmp.eq.s32.totalorder %s45, 3
      %p283 = por %p281, %p282
      %p284 = scmp.ne.s32.totalorder %s273, %s274
      %p285 = scmp.eq.s32.totalorder %s45, 0
      %p286 = por %p284, %p285
      %p287 = scmp.ne.s32.totalorder %s273, %s274
      %p288 = scmp.eq.s32.totalorder %s46, 3
      %p289 = por %p287, %p288
      %p291 = scmp.ne.s32.totalorder %s274, %s290
      %p292 = scmp.eq.s32.totalorder %s46, 0
      %p293 = por %p291, %p292
      %s294 = ssub.s32 %s48, %s55
      %p295 = scmp.eq.s32.totalorder %s294, 0
      %s297 = sadd.s32 %s296, 1
      %s298 = scalar_select %p295, %s296, %s297
      %p301 = pneg %p295
      %p302 = scmp.eq.s32.totalorder %s40, 3
      %p303 = por %p301, %p302
      %p304 = scmp.ne.s32.totalorder %s296, %s299
      %p305 = scmp.eq.s32.totalorder %s40, 0
      %p306 = por %p304, %p305
      %p307 = scmp.ne.s32.totalorder %s296, %s299
      %p308 = scmp.eq.s32.totalorder %s45, 3
      %p309 = por %p307, %p308
      %p310 = scmp.ne.s32.totalorder %s299, %s300
      %p311 = scmp.eq.s32.totalorder %s45, 0
      %p312 = por %p310, %p311
      %p313 = scmp.ne.s32.totalorder %s299, %s300
      %p314 = scmp.eq.s32.totalorder %s46, 3
      %p315 = por %p313, %p314
      %p317 = scmp.ne.s32.totalorder %s300, %s316
      %p318 = scmp.eq.s32.totalorder %s46, 0
      %p319 = por %p317, %p318
      %s320 = ssub.s32 %s48, %s55
      %p321 = scmp.eq.s32.totalorder %s320, 0
      %s323 = sadd.s32 %s322, 1
      %s324 = scalar_select %p321, %s322, %s323
      %p327 = pneg %p321
      %p328 = scmp.eq.s32.totalorder %s40, 3
      %p329 = por %p327, %p328
      %p330 = scmp.ne.s32.totalorder %s322, %s325
      %p331 = scmp.eq.s32.totalorder %s40, 0
      %p332 = por %p330, %p331
      %p333 = scmp.ne.s32.totalorder %s322, %s325
      %p334 = scmp.eq.s32.totalorder %s45, 3
      %p335 = por %p333, %p334
      %p336 = scmp.ne.s32.totalorder %s325, %s326
      %p337 = scmp.eq.s32.totalorder %s45, 0
      %p338 = por %p336, %p337
      %p339 = scmp.ne.s32.totalorder %s325, %s326
      %p340 = scmp.eq.s32.totalorder %s46, 3
      %p341 = por %p339, %p340
      %p343 = scmp.ne.s32.totalorder %s326, %s342
      %p344 = scmp.eq.s32.totalorder %s46, 0
      %p345 = por %p343, %p344
      %s346 = ssub.s32 %s48, %s55
      %p347 = scmp.eq.s32.totalorder %s346, 0
      %s349 = sadd.s32 %s348, 1
      %s350 = scalar_select %p347, %s348, %s349
      %p353 = pneg %p347
      %p354 = scmp.eq.s32.totalorder %s40, 3
      %p355 = por %p353, %p354
      %p356 = scmp.ne.s32.totalorder %s348, %s351
      %p357 = scmp.eq.s32.totalorder %s40, 0
      %p358 = por %p356, %p357
      %p359 = scmp.ne.s32.totalorder %s348, %s351
      %p360 = scmp.eq.s32.totalorder %s45, 3
      %p361 = por %p359, %p360
      %p362 = scmp.ne.s32.totalorder %s351, %s352
      %p363 = scmp.eq.s32.totalorder %s45, 0
      %p364 = por %p362, %p363
      %p365 = scmp.ne.s32.totalorder %s351, %s352
      %p366 = scmp.eq.s32.totalorder %s46, 3
      %p367 = por %p365, %p366
      %p369 = scmp.ne.s32.totalorder %s352, %s368
      %p370 = scmp.eq.s32.totalorder %s46, 0
      %p371 = por %p369, %p370
      %s372 = ssub.s32 %s48, %s55
      %p373 = scmp.eq.s32.totalorder %s372, 0
      %s375 = sadd.s32 %s374, 1
      %s376 = scalar_select %p373, %s374, %s375
      %p379 = pneg %p373
      %p380 = scmp.eq.s32.totalorder %s40, 3
      %p381 = por %p379, %p380
      %p382 = scmp.ne.s32.totalorder %s374, %s377
      %p383 = scmp.eq.s32.totalorder %s40, 0
      %p384 = por %p382, %p383
      %p385 = scmp.ne.s32.totalorder %s374, %s377
      %p386 = scmp.eq.s32.totalorder %s45, 3
      %p387 = por %p385, %p386
      %p388 = scmp.ne.s32.totalorder %s377, %s378
      %p389 = scmp.eq.s32.totalorder %s45, 0
      %p390 = por %p388, %p389
      %p391 = scmp.ne.s32.totalorder %s377, %s378
      %p392 = scmp.eq.s32.totalorder %s46, 3
      %p393 = por %p391, %p392
      %p395 = scmp.ne.s32.totalorder %s378, %s394
      %p396 = scmp.eq.s32.totalorder %s46, 0
      %p397 = por %p395, %p396
      %s398 = ssub.s32 %s47, %s59
      %p399 = scmp.eq.s32.totalorder %s398, 0
      %s401 = sadd.s32 %s400, 1
      %s402 = scalar_select %p399, %s400, %s401
      %p405 = pneg %p399
      %p406 = scmp.eq.s32.totalorder %s40, 3
      %p407 = por %p405, %p406
      %p408 = scmp.ne.s32.totalorder %s400, %s403
      %p409 = scmp.eq.s32.totalorder %s40, 0
      %p410 = por %p408, %p409
      %p411 = scmp.ne.s32.totalorder %s400, %s403
      %p412 = scmp.eq.s32.totalorder %s45, 3
      %p413 = por %p411, %p412
      %p414 = scmp.ne.s32.totalorder %s403, %s404
      %p415 = scmp.eq.s32.totalorder %s45, 0
      %p416 = por %p414, %p415
      %p417 = scmp.ne.s32.totalorder %s403, %s404
      %p418 = scmp.eq.s32.totalorder %s46, 3
      %p419 = por %p417, %p418
      %p421 = scmp.ne.s32.totalorder %s404, %s420
      %p422 = scmp.eq.s32.totalorder %s46, 0
      %p423 = por %p421, %p422
      %p424 = scmp.le.s32.totalorder 1, %s40
      %p425 = scmp.lt.s32.totalorder %s40, 5
      %p426 = pnand %p424, %p425
      %p427 = pneg %p426
      // Predicated region
      $region9: #{tpu_custom_call.1} parent=5 // pred_check
        _
      $region10: #{tpu_custom_call.1} parent=5 // pred_check_branch
        %429 = sbr.rel (%p426) target = $region12
      $region11: #{tpu_custom_call.1} parent=5 // pred_region
        %s430 = ssub.s32 %s40, 1
      $region12: #{tpu_custom_call.1} parent=5 // pred_fallthru
        _
      %p431 = scmp.lt.s32.totalorder %s40, 4
      // Predicated region
      $region13: #{tpu_custom_call.1} parent=5 // pred_check
        %p432 = pneg %p431
      $region14: #{tpu_custom_call.1} parent=5 // pred_check_branch
        %434 = sbr.rel (%p432) target = $region16
      $region15: #{tpu_custom_call.1} parent=5 // pred_region
        // Predicated region
        $region17: #{tpu_custom_call.1} parent=15 // pred_check
          %p435 = pneg %p72
        $region18: #{tpu_custom_call.1} parent=15 // pred_check_branch
          %437 = sbr.rel (%p435) target = $region20
        $region19: #{tpu_custom_call.1} parent=15 // pred_region
          %s438 = sand.u32 %s62, 1
          %s439 = scalar_lea.sflag [#allocation6], %s438
          %s440 = sand.u32 %s62, 1
          %s441 = smul.addr %s440, 16
          %s442 = scalar_lea.vmem [#allocation5], %s441
          %444 = vsyncadd %s439, 0
          %s445 = smul.addr %s47, 2
          %s446 = smul.addr %s445, 8
          %s447 = scalar_lea.hbm %s0, %s446
          %s449 = sshll.u32 %s447, 4
          %s450 = int_to_ptr.hbm [resolvable:$true] %s449
          %s451 = sshll.u32 %s442, 4
          %s452 = int_to_ptr.vmem [resolvable:$true] %s451
          %454 = dma.hbm_to_vmem [thread:$0]  %s450, 256, %s452, %s439
        $region20: #{tpu_custom_call.1} parent=15 // pred_fallthru
          _
        // Predicated region
        $region21: #{tpu_custom_call.1} parent=15 // pred_check
          %p455 = pneg %p98
        $region22: #{tpu_custom_call.1} parent=15 // pred_check_branch
          %457 = sbr.rel (%p455) target = $region24
        $region23: #{tpu_custom_call.1} parent=15 // pred_region
          %s458 = sand.u32 %s40, 1
          %s459 = scalar_lea.sflag [#allocation9], %s458
          %s460 = sand.u32 %s88, 1
          %s461 = smul.addr %s460, 2
          %s462 = scalar_lea.vmem [#allocation8], %s461
          %464 = vsyncadd %s459, 0
          %s465 = smul.addr %s48, 2
          %s466 = scalar_lea.hbm %s1, %s465
          %s468 = sshll.u32 %s466, 4
          %s469 = int_to_ptr.hbm [resolvable:$true] %s468
          %s470 = sshll.u32 %s462, 4
          %s471 = int_to_ptr.vmem [resolvable:$true] %s470
          %473 = dma.hbm_to_vmem [thread:$0]  %s469, 32, %s471, %s459
        $region24: #{tpu_custom_call.1} parent=15 // pred_fallthru
          _
        // Predicated region
        $region25: #{tpu_custom_call.1} parent=15 // pred_check
          %p474 = pneg %p124
        $region26: #{tpu_custom_call.1} parent=15 // pred_check_branch
          %476 = sbr.rel (%p474) target = $region28
        $region27: #{tpu_custom_call.1} parent=15 // pred_region
          %s477 = sand.u32 %s40, 1
          %s478 = scalar_lea.sflag [#allocation9], %s477
          %s479 = sand.u32 %s114, 1
          %s480 = smul.addr %s479, 2
          %s481 = scalar_lea.vmem [#allocation10], %s480
          %483 = vsyncadd %s478, 0
          %s484 = smul.addr %s48, 2
          %s485 = scalar_lea.hbm %s2, %s484
          %s487 = sshll.u32 %s485, 4
          %s488 = int_to_ptr.hbm [resolvable:$true] %s487
          %s489 = sshll.u32 %s481, 4
          %s490 = int_to_ptr.vmem [resolvable:$true] %s489
          %492 = dma.hbm_to_vmem [thread:$0]  %s488, 32, %s490, %s478
        $region28: #{tpu_custom_call.1} parent=15 // pred_fallthru
          _
        // Predicated region
        $region29: #{tpu_custom_call.1} parent=15 // pred_check
          %p493 = pneg %p150
        $region30: #{tpu_custom_call.1} parent=15 // pred_check_branch
          %495 = sbr.rel (%p493) target = $region32
        $region31: #{tpu_custom_call.1} parent=15 // pred_region
          %s496 = sand.u32 %s40, 1
          %s497 = scalar_lea.sflag [#allocation12], %s496
          %s498 = sand.u32 %s140, 1
          %s499 = smul.addr %s498, 768
          %s500 = scalar_lea.vmem [#allocation11], %s499
          %502 = vsyncadd %s497, 0
          %s503 = smul.addr %s48, 192
          %s504 = smul.addr %s503, 4
          %s505 = scalar_lea.hbm %s3, %s504
          %s506 = sshll.u32 %s505, 4
          %s507 = int_to_ptr.hbm [resolvable:$true] %s506
          %s508 = sshll.u32 %s500, 4
          %s509 = int_to_ptr.vmem [resolvable:$true] %s508
          %514 = dma.hbm_to_vmem [thread:$0]  %s507, 12288, %s509, %s497, 384, 384, 24
        $region32: #{tpu_custom_call.1} parent=15 // pred_fallthru
          _
        // Predicated region
        $region33: #{tpu_custom_call.1} parent=15 // pred_check
          %p515 = pneg %p176
        $region34: #{tpu_custom_call.1} parent=15 // pred_check_branch
          %517 = sbr.rel (%p515) target = $region36
        $region35: #{tpu_custom_call.1} parent=15 // pred_region
          %s518 = sand.u32 %s40, 1
          %s519 = scalar_lea.sflag [#allocation12], %s518
          %s520 = sand.u32 %s166, 1
          %s521 = smul.addr %s520, 6
          %s522 = scalar_lea.vmem [#allocation13], %s521
          %524 = vsyncadd %s519, 0
          %s525 = smul.addr %s48, 6
          %s526 = scalar_lea.hbm %s4, %s525
          %s528 = sshll.u32 %s526, 4
          %s529 = int_to_ptr.hbm [resolvable:$true] %s528
          %s530 = sshll.u32 %s522, 4
          %s531 = int_to_ptr.vmem [resolvable:$true] %s530
          %533 = dma.hbm_to_vmem [thread:$0]  %s529, 96, %s531, %s519
        $region36: #{tpu_custom_call.1} parent=15 // pred_fallthru
          _
        // Predicated region
        $region37: #{tpu_custom_call.1} parent=15 // pred_check
          %p534 = pneg %p202
        $region38: #{tpu_custom_call.1} parent=15 // pred_check_branch
          %536 = sbr.rel (%p534) target = $region40
        $region39: #{tpu_custom_call.1} parent=15 // pred_region
          %s537 = sand.u32 %s40, 1
          %s538 = scalar_lea.sflag [#allocation15], %s537
          %s539 = sand.u32 %s192, 1
          %s540 = smul.addr %s539, 256
          %s541 = scalar_lea.vmem [#allocation14], %s540
          %543 = vsyncadd %s538, 0
          %s544 = smul.addr %s48, 64
          %s545 = smul.addr %s544, 4
          %s546 = scalar_lea.hbm %s5, %s545
          %s547 = sshll.u32 %s546, 4
          %s548 = int_to_ptr.hbm [resolvable:$true] %s547
          %s549 = sshll.u32 %s541, 4
          %s550 = int_to_ptr.vmem [resolvable:$true] %s549
          %555 = dma.hbm_to_vmem [thread:$0]  %s548, 4096, %s550, %s538, 128, 128, 8
        $region40: #{tpu_custom_call.1} parent=15 // pred_fallthru
          _
        // Predicated region
        $region41: #{tpu_custom_call.1} parent=15 // pred_check
          %p556 = pneg %p228
        $region42: #{tpu_custom_call.1} parent=15 // pred_check_branch
          %558 = sbr.rel (%p556) target = $region44
        $region43: #{tpu_custom_call.1} parent=15 // pred_region
          %p559 = scmp.lt.s32.totalorder %s48, 1
          %s560 = scalar_select %p559, %s48, 1
          %s561 = smul.addr %s560, 2
          %s562 = scalar_lea.vmem %s6, %s561
        $region44: #{tpu_custom_call.1} parent=15 // pred_fallthru
          _
        // Predicated region
        $region45: #{tpu_custom_call.1} parent=15 // pred_check
          %p563 = pneg %p254
        $region46: #{tpu_custom_call.1} parent=15 // pred_check_branch
          %565 = sbr.rel (%p563) target = $region48
        $region47: #{tpu_custom_call.1} parent=15 // pred_region
          %s566 = sand.u32 %s40, 1
          %s567 = scalar_lea.sflag [#allocation15], %s566
          %s568 = sand.u32 %s244, 1
          %s569 = smul.addr %s568, 2
          %s570 = scalar_lea.vmem [#allocation16], %s569
          %572 = vsyncadd %s567, 0
          %s573 = smul.addr %s48, 2
          %s574 = scalar_lea.hbm %s7, %s573
          %s576 = sshll.u32 %s574, 4
          %s577 = int_to_ptr.hbm [resolvable:$true] %s576
          %s578 = sshll.u32 %s570, 4
          %s579 = int_to_ptr.vmem [resolvable:$true] %s578
          %581 = dma.hbm_to_vmem [thread:$0]  %s577, 32, %s579, %s567
        $region48: #{tpu_custom_call.1} parent=15 // pred_fallthru
          _
        // Predicated region
        $region49: #{tpu_custom_call.1} parent=15 // pred_check
          %p582 = pneg %p280
        $region50: #{tpu_custom_call.1} parent=15 // pred_check_branch
          %584 = sbr.rel (%p582) target = $region52
        $region51: #{tpu_custom_call.1} parent=15 // pred_region
          %s585 = sand.u32 %s40, 1
          %s586 = scalar_lea.sflag [#allocation18], %s585
          %s587 = sand.u32 %s270, 1
          %s588 = smul.addr %s587, 2
          %s589 = scalar_lea.vmem [#allocation17], %s588
          %591 = vsyncadd %s586, 0
          %s592 = smul.addr %s48, 2
          %s593 = scalar_lea.hbm %s8, %s592
          %s595 = sshll.u32 %s593, 4
          %s596 = int_to_ptr.hbm [resolvable:$true] %s595
          %s597 = sshll.u32 %s589, 4
          %s598 = int_to_ptr.vmem [resolvable:$true] %s597
          %600 = dma.hbm_to_vmem [thread:$0]  %s596, 32, %s598, %s586
        $region52: #{tpu_custom_call.1} parent=15 // pred_fallthru
          _
        // Predicated region
        $region53: #{tpu_custom_call.1} parent=15 // pred_check
          %p601 = pneg %p306
        $region54: #{tpu_custom_call.1} parent=15 // pred_check_branch
          %603 = sbr.rel (%p601) target = $region56
        $region55: #{tpu_custom_call.1} parent=15 // pred_region
          %s604 = sand.u32 %s40, 1
          %s605 = scalar_lea.sflag [#allocation18], %s604
          %s606 = sand.u32 %s296, 1
          %s607 = smul.addr %s606, 1024
          %s608 = scalar_lea.vmem [#allocation19], %s607
          %610 = vsyncadd %s605, 0
          %s611 = smul.addr %s48, 256
          %s612 = smul.addr %s611, 4
          %s613 = scalar_lea.hbm %s9, %s612
          %s614 = sshll.u32 %s613, 4
          %s615 = int_to_ptr.hbm [resolvable:$true] %s614
          %s616 = sshll.u32 %s608, 4
          %s617 = int_to_ptr.vmem [resolvable:$true] %s616
          %622 = dma.hbm_to_vmem [thread:$0]  %s615, 16384, %s617, %s605, 512, 512, 32
        $region56: #{tpu_custom_call.1} parent=15 // pred_fallthru
          _
        // Predicated region
        $region57: #{tpu_custom_call.1} parent=15 // pred_check
          %p623 = pneg %p332
        $region58: #{tpu_custom_call.1} parent=15 // pred_check_branch
          %625 = sbr.rel (%p623) target = $region60
        $region59: #{tpu_custom_call.1} parent=15 // pred_region
          %s626 = sand.u32 %s40, 1
          %s627 = scalar_lea.sflag [#allocation21], %s626
          %s628 = sand.u32 %s322, 1
          %s629 = smul.addr %s628, 8
          %s630 = scalar_lea.vmem [#allocation20], %s629
          %632 = vsyncadd %s627, 0
          %s633 = smul.addr %s48, 8
          %s634 = scalar_lea.hbm %s10, %s633
          %s636 = sshll.u32 %s634, 4
          %s637 = int_to_ptr.hbm [resolvable:$true] %s636
          %s638 = sshll.u32 %s630, 4
          %s639 = int_to_ptr.vmem [resolvable:$true] %s638
          %641 = dma.hbm_to_vmem [thread:$0]  %s637, 128, %s639, %s627
        $region60: #{tpu_custom_call.1} parent=15 // pred_fallthru
          _
        // Predicated region
        $region61: #{tpu_custom_call.1} parent=15 // pred_check
          %p642 = pneg %p358
        $region62: #{tpu_custom_call.1} parent=15 // pred_check_branch
          %644 = sbr.rel (%p642) target = $region64
        $region63: #{tpu_custom_call.1} parent=15 // pred_region
          %s645 = sand.u32 %s40, 1
          %s646 = scalar_lea.sflag [#allocation21], %s645
          %s647 = sand.u32 %s348, 1
          %s648 = smul.addr %s647, 1024
          %s649 = scalar_lea.vmem [#allocation22], %s648
          %651 = vsyncadd %s646, 0
          %s652 = smul.addr %s48, 256
          %s653 = smul.addr %s652, 4
          %s654 = scalar_lea.hbm %s11, %s653
          %s655 = sshll.u32 %s654, 4
          %s656 = int_to_ptr.hbm [resolvable:$true] %s655
          %s657 = sshll.u32 %s649, 4
          %s658 = int_to_ptr.vmem [resolvable:$true] %s657
          %663 = dma.hbm_to_vmem [thread:$0]  %s656, 16384, %s658, %s646, 128, 128, 8
        $region64: #{tpu_custom_call.1} parent=15 // pred_fallthru
          _
        // Predicated region
        $region65: #{tpu_custom_call.1} parent=15 // pred_check
          %p664 = pneg %p384
        $region66: #{tpu_custom_call.1} parent=15 // pred_check_branch
          %666 = sbr.rel (%p664) target = $region68
        $region67: #{tpu_custom_call.1} parent=15 // pred_region
          %p667 = scmp.lt.s32.totalorder %s48, 1
          %s668 = scalar_select %p667, %s48, 1
          %s669 = smul.addr %s668, 2
          %s670 = scalar_lea.vmem %s12, %s669
        $region68: #{tpu_custom_call.1} parent=15 // pred_fallthru
          _
      $region16: #{tpu_custom_call.1} parent=5 // pred_fallthru
        _
      %p671 = scmp.le.s32.totalorder 1, %s40
      %p672 = scmp.lt.s32.totalorder %s40, 5
      %p673 = pnand %p671, %p672
      %p674 = pneg %p673
      // Predicated region
      $region69: #{tpu_custom_call.1} parent=5 // pred_check
        _
      $region70: #{tpu_custom_call.1} parent=5 // pred_check_branch
        %676 = sbr.rel (%p673) target = $region72
      $region71: #{tpu_custom_call.1} parent=5 // pred_region
        %s677 = ssub.s32 %s40, 1
        %s678 = sand.u32 %s65, 1
        %s679 = scalar_lea.sflag [#allocation6], %s678
        %s680 = sand.u32 %s65, 1
        %s681 = smul.addr %s680, 16
        %s682 = scalar_lea.vmem [#allocation5], %s681
        // Predicated region
        $region73: #{tpu_custom_call.1} parent=71 // pred_check
          %p683 = pneg %p78
        $region74: #{tpu_custom_call.1} parent=71 // pred_check_branch
          %685 = sbr.rel (%p683) target = $region76
        $region75: #{tpu_custom_call.1} parent=71 // pred_region
          %687 = dma.done %s679, 256
        $region76: #{tpu_custom_call.1} parent=71 // pred_fallthru
          _
        %s688 = sand.u32 %s45, 1
        %s689 = scalar_lea.sflag [#allocation9], %s688
        %s690 = sand.u32 %s91, 1
        %s691 = smul.addr %s690, 2
        %s692 = scalar_lea.vmem [#allocation8], %s691
        // Predicated region
        $region77: #{tpu_custom_call.1} parent=71 // pred_check
          %p693 = pneg %p104
        $region78: #{tpu_custom_call.1} parent=71 // pred_check_branch
          %695 = sbr.rel (%p693) target = $region80
        $region79: #{tpu_custom_call.1} parent=71 // pred_region
          %697 = dma.done %s689, 32
        $region80: #{tpu_custom_call.1} parent=71 // pred_fallthru
          _
        %s698 = sand.u32 %s45, 1
        %s699 = scalar_lea.sflag [#allocation9], %s698
        %s700 = sand.u32 %s117, 1
        %s701 = smul.addr %s700, 2
        %s702 = scalar_lea.vmem [#allocation10], %s701
        // Predicated region
        $region81: #{tpu_custom_call.1} parent=71 // pred_check
          %p703 = pneg %p130
        $region82: #{tpu_custom_call.1} parent=71 // pred_check_branch
          %705 = sbr.rel (%p703) target = $region84
        $region83: #{tpu_custom_call.1} parent=71 // pred_region
          %707 = dma.done %s699, 32
        $region84: #{tpu_custom_call.1} parent=71 // pred_fallthru
          _
        %s708 = sand.u32 %s45, 1
        %s709 = scalar_lea.sflag [#allocation12], %s708
        %s710 = sand.u32 %s143, 1
        %s711 = smul.addr %s710, 768
        %s712 = scalar_lea.vmem [#allocation11], %s711
        // Predicated region
        $region85: #{tpu_custom_call.1} parent=71 // pred_check
          %p713 = pneg %p156
        $region86: #{tpu_custom_call.1} parent=71 // pred_check_branch
          %715 = sbr.rel (%p713) target = $region88
        $region87: #{tpu_custom_call.1} parent=71 // pred_region
          %717 = dma.done %s709, 12288
        $region88: #{tpu_custom_call.1} parent=71 // pred_fallthru
          _
        %s718 = sand.u32 %s45, 1
        %s719 = scalar_lea.sflag [#allocation12], %s718
        %s720 = sand.u32 %s169, 1
        %s721 = smul.addr %s720, 6
        %s722 = scalar_lea.vmem [#allocation13], %s721
        // Predicated region
        $region89: #{tpu_custom_call.1} parent=71 // pred_check
          %p723 = pneg %p182
        $region90: #{tpu_custom_call.1} parent=71 // pred_check_branch
          %725 = sbr.rel (%p723) target = $region92
        $region91: #{tpu_custom_call.1} parent=71 // pred_region
          %727 = dma.done %s719, 96
        $region92: #{tpu_custom_call.1} parent=71 // pred_fallthru
          _
        %s728 = sand.u32 %s45, 1
        %s729 = scalar_lea.sflag [#allocation15], %s728
        %s730 = sand.u32 %s195, 1
        %s731 = smul.addr %s730, 256
        %s732 = scalar_lea.vmem [#allocation14], %s731
        // Predicated region
        $region93: #{tpu_custom_call.1} parent=71 // pred_check
          %p733 = pneg %p208
        $region94: #{tpu_custom_call.1} parent=71 // pred_check_branch
          %735 = sbr.rel (%p733) target = $region96
        $region95: #{tpu_custom_call.1} parent=71 // pred_region
          %737 = dma.done %s729, 4096
        $region96: #{tpu_custom_call.1} parent=71 // pred_fallthru
          _
        %s738 = sand.u32 %s45, 1
        %s739 = scalar_lea.sflag [#allocation15], %s738
        %s740 = sand.u32 %s247, 1
        %s741 = smul.addr %s740, 2
        %s742 = scalar_lea.vmem [#allocation16], %s741
        // Predicated region
        $region97: #{tpu_custom_call.1} parent=71 // pred_check
          %p743 = pneg %p260
        $region98: #{tpu_custom_call.1} parent=71 // pred_check_branch
          %745 = sbr.rel (%p743) target = $region100
        $region99: #{tpu_custom_call.1} parent=71 // pred_region
          %747 = dma.done %s739, 32
        $region100: #{tpu_custom_call.1} parent=71 // pred_fallthru
          _
        %s748 = sand.u32 %s45, 1
        %s749 = scalar_lea.sflag [#allocation18], %s748
        %s750 = sand.u32 %s273, 1
        %s751 = smul.addr %s750, 2
        %s752 = scalar_lea.vmem [#allocation17], %s751
        // Predicated region
        $region101: #{tpu_custom_call.1} parent=71 // pred_check
          %p753 = pneg %p286
        $region102: #{tpu_custom_call.1} parent=71 // pred_check_branch
          %755 = sbr.rel (%p753) target = $region104
        $region103: #{tpu_custom_call.1} parent=71 // pred_region
          %757 = dma.done %s749, 32
        $region104: #{tpu_custom_call.1} parent=71 // pred_fallthru
          _
        %s758 = sand.u32 %s45, 1
        %s759 = scalar_lea.sflag [#allocation18], %s758
        %s760 = sand.u32 %s299, 1
        %s761 = smul.addr %s760, 1024
        %s762 = scalar_lea.vmem [#allocation19], %s761
        // Predicated region
        $region105: #{tpu_custom_call.1} parent=71 // pred_check
          %p763 = pneg %p312
        $region106: #{tpu_custom_call.1} parent=71 // pred_check_branch
          %765 = sbr.rel (%p763) target = $region108
        $region107: #{tpu_custom_call.1} parent=71 // pred_region
          %767 = dma.done %s759, 16384
        $region108: #{tpu_custom_call.1} parent=71 // pred_fallthru
          _
        %s768 = sand.u32 %s45, 1
        %s769 = scalar_lea.sflag [#allocation21], %s768
        %s770 = sand.u32 %s325, 1
        %s771 = smul.addr %s770, 8
        %s772 = scalar_lea.vmem [#allocation20], %s771
        // Predicated region
        $region109: #{tpu_custom_call.1} parent=71 // pred_check
          %p773 = pneg %p338
        $region110: #{tpu_custom_call.1} parent=71 // pred_check_branch
          %775 = sbr.rel (%p773) target = $region112
        $region111: #{tpu_custom_call.1} parent=71 // pred_region
          %777 = dma.done %s769, 128
        $region112: #{tpu_custom_call.1} parent=71 // pred_fallthru
          _
        %s778 = sand.u32 %s45, 1
        %s779 = scalar_lea.sflag [#allocation21], %s778
        %s780 = sand.u32 %s351, 1
        %s781 = smul.addr %s780, 1024
        %s782 = scalar_lea.vmem [#allocation22], %s781
        // Predicated region
        $region113: #{tpu_custom_call.1} parent=71 // pred_check
          %p783 = pneg %p364
        $region114: #{tpu_custom_call.1} parent=71 // pred_check_branch
          %785 = sbr.rel (%p783) target = $region116
        $region115: #{tpu_custom_call.1} parent=71 // pred_region
          %787 = dma.done %s779, 16384
        $region116: #{tpu_custom_call.1} parent=71 // pred_fallthru
          _
        %s788 = sand.u32 %s65, 1
        %s789 = scalar_lea.sflag [#allocation6], %s788
        %s790 = sand.u32 %s65, 1
        %s791 = smul.addr %s790, 16
        %s792 = scalar_lea.vmem [#allocation5], %s791
        %p793 = pneg %p78
        %p794 = pneg %p75
        %s795 = sand.u32 %s45, 1
        %s796 = scalar_lea.sflag [#allocation9], %s795
        %s797 = sand.u32 %s91, 1
        %s798 = smul.addr %s797, 2
        %s799 = scalar_lea.vmem [#allocation8], %s798
        %p800 = pneg %p104
        %p801 = pneg %p101
        %s802 = sand.u32 %s45, 1
        %s803 = scalar_lea.sflag [#allocation9], %s802
        %s804 = sand.u32 %s117, 1
        %s805 = smul.addr %s804, 2
        %s806 = scalar_lea.vmem [#allocation10], %s805
        %p807 = pneg %p130
        %p808 = pneg %p127
        %s809 = sand.u32 %s45, 1
        %s810 = scalar_lea.sflag [#allocation12], %s809
        %s811 = sand.u32 %s143, 1
        %s812 = smul.addr %s811, 768
        %s813 = scalar_lea.vmem [#allocation11], %s812
        %p814 = pneg %p156
        %p815 = pneg %p153
        %s816 = sand.u32 %s45, 1
        %s817 = scalar_lea.sflag [#allocation12], %s816
        %s818 = sand.u32 %s169, 1
        %s819 = smul.addr %s818, 6
        %s820 = scalar_lea.vmem [#allocation13], %s819
        %p821 = pneg %p182
        %p822 = pneg %p179
        %s823 = sand.u32 %s45, 1
        %s824 = scalar_lea.sflag [#allocation15], %s823
        %s825 = sand.u32 %s195, 1
        %s826 = smul.addr %s825, 256
        %s827 = scalar_lea.vmem [#allocation14], %s826
        %p828 = pneg %p208
        %p829 = pneg %p205
        %p830 = scmp.lt.s32.totalorder %s50, 1
        %s831 = scalar_select %p830, %s50, 1
        %s832 = smul.addr %s831, 2
        %s833 = scalar_lea.vmem %s6, %s832
        %p834 = pneg %p234
        %p835 = pneg %p231
        %s836 = sand.u32 %s45, 1
        %s837 = scalar_lea.sflag [#allocation15], %s836
        %s838 = sand.u32 %s247, 1
        %s839 = smul.addr %s838, 2
        %s840 = scalar_lea.vmem [#allocation16], %s839
        %p841 = pneg %p260
        %p842 = pneg %p257
        %s843 = sand.u32 %s45, 1
        %s844 = scalar_lea.sflag [#allocation18], %s843
        %s845 = sand.u32 %s273, 1
        %s846 = smul.addr %s845, 2
        %s847 = scalar_lea.vmem [#allocation17], %s846
        %p848 = pneg %p286
        %p849 = pneg %p283
        %s850 = sand.u32 %s45, 1
        %s851 = scalar_lea.sflag [#allocation18], %s850
        %s852 = sand.u32 %s299, 1
        %s853 = smul.addr %s852, 1024
        %s854 = scalar_lea.vmem [#allocation19], %s853
        %p855 = pneg %p312
        %p856 = pneg %p309
        %s857 = sand.u32 %s45, 1
        %s858 = scalar_lea.sflag [#allocation21], %s857
        %s859 = sand.u32 %s325, 1
        %s860 = smul.addr %s859, 8
        %s861 = scalar_lea.vmem [#allocation20], %s860
        %p862 = pneg %p338
        %p863 = pneg %p335
        %s864 = sand.u32 %s45, 1
        %s865 = scalar_lea.sflag [#allocation21], %s864
        %s866 = sand.u32 %s351, 1
        %s867 = smul.addr %s866, 1024
        %s868 = scalar_lea.vmem [#allocation22], %s867
        %p869 = pneg %p364
        %p870 = pneg %p361
        %p871 = scmp.lt.s32.totalorder %s50, 1
        %s872 = scalar_select %p871, %s50, 1
        %s873 = smul.addr %s872, 2
        %s874 = scalar_lea.vmem %s12, %s873
        %p875 = pneg %p390
        %p876 = pneg %p387
        %p877 = pneg %p416
        %p878 = pneg %p413
        %s879 = sand.u32 %s403, 1
        %s880 = scalar_lea.sflag [#allocation7], %s879
        %s881 = sand.u32 %s403, 1
        %s882 = smul.addr %s881, 2
        %s883 = scalar_lea.vmem [#allocation23], %s882
        %p884 = scmp.lt.s32.totalorder %s50, 1
        %s885 = scalar_select %p884, %s50, 1
        %s886 = smul.addr %s885, 2
        %s887 = scalar_lea.vmem %s6, %s886
        %p888 = scmp.lt.s32.totalorder %s50, 1
        %s889 = scalar_select %p888, %s50, 1
        %s890 = smul.addr %s889, 2
        %s891 = scalar_lea.vmem %s12, %s890
        %p893 = scmp.eq.s32.totalorder %s50, 0
        // Predicated region
        $region117: #{tpu_custom_call.1} parent=71 // pred_check
          %p894 = pneg %p893
        $region118: #{tpu_custom_call.1} parent=71 // pred_check_branch
          %896 = sbr.rel (%p894) target = $region120
        $region119: #{tpu_custom_call.1} parent=71 // pred_region
          %v897 = vld [vmem:[%s682] sm:$0xff]
          %v898 = vld [vmem:[%s682 + $0x8] sm:$0xff]
          %899 = vst [vmem:[#allocation2] sm:$0xff] %v897
          %900 = vst [vmem:[#allocation2 + $0x8] sm:$0xff] %v898
        $region120: #{tpu_custom_call.1} parent=71 // pred_fallthru
          _
        %v901 = vld [vmem:[#allocation2] sm:$0xff]
        %v902 = vld [vmem:[#allocation2 + $0x8] sm:$0xff]
        %v903 = vld [vmem:[%s692] sm:$0x3]
        %v904 = vld [vmem:[%s702] sm:$0x3]
        %v905 = vadd.f32 %v901, %v902
        %906 = vadd.xlane.f32.xlu0 %v905
        %v907 = vpop.xlane.xlu0 %906
        %v908 = vrcp.pop 256.0
        %v909 = vmul.f32 256.0, %v908
        %v910 = vsub.f32 1.0, %v909
        %v911 = vmul.f32 %v908, %v910
        %v912 = vadd.f32 %v908, %v911
        %vm913 = vweird.f32 %v908
        %v914 = vsel %vm913, %v908, %v912
        %v915 = vmul.f32 %v907, %v914
        %v916 = vsub.f32 %v901, %v915
        %v917 = vsub.f32 %v902, %v915
        %v918 = vmul.f32 %v916, %v916
        %v919 = vmul.f32 %v917, %v917
        %v920 = vadd.f32 %v918, %v919
        %921 = vadd.xlane.f32.xlu0 %v920
        %v922 = vpop.xlane.xlu0 %921
        %v923 = vmul.f32 %v922, %v914
        %v924 = vadd.f32 %v923, 1e-05
        %v925 = vrsqrt.pop %v924
        %v926 = vmul.f32 %v925, %v924
        %v927 = vmul.f32 %v926, %v925
        %v928 = vmul.f32 0.5, %v927
        %v929 = vsub.f32 1.5, %v928
        %v930 = vmul.f32 %v925, %v929
        %vm931 = vweird.f32 %v924
        %vm932 = vweird.f32 %v925
        %vm933 = vmor %vm931, %vm932
        %v934 = vsel %vm933, %v925, %v930
        %v935 = vmul.f32 %v916, %v934
        %v936 = vmul.f32 %v917, %v934
        %v938 = vperm.slane %v903, 0
        %v939 = vperm.slane %v903, 1
        %v942 = vmul.f32 %v935, %v938
        %v943 = vmul.f32 %v936, %v939
        %v945 = vperm.slane %v904, 0
        %v946 = vperm.slane %v904, 1
        %v949 = vadd.f32 %v942, %v945
        %v950 = vadd.f32 %v943, %v946
        %v951 = vlaneseq
        %v952 = vand.u32 %v951, 127
        %v953 = vadd.s32 %v952, 128
        %v954 = vadd.s32 %v952, 256
        %v955 = vadd.s32 %v952, 384
        %v956 = vadd.s32 %v952, 512
        %v957 = vadd.s32 %v952, 640
        %vm958 = vcmp.lt.s32.totalorder %v952, 256
        %vm959 = vcmp.lt.s32.totalorder %v953, 256
        %vm960 = vcmp.lt.s32.totalorder %v954, 256
        %vm961 = vcmp.lt.s32.totalorder %v955, 256
        %vm962 = vcmp.lt.s32.totalorder %v956, 256
        %vm963 = vcmp.lt.s32.totalorder %v957, 256
        %v964 = vsel %vm958, 0.088388346, 1.0
        %v965 = vsel %vm959, 0.088388346, 1.0
        %v966 = vsel %vm960, 0.088388346, 1.0
        %v967 = vsel %vm961, 0.088388346, 1.0
        %v968 = vsel %vm962, 0.088388346, 1.0
        %v969 = vsel %vm963, 0.088388346, 1.0
        %v970 = vpack.c.bf16 %v949, %v949
        %v971 = vpack.c.bf16 %v950, %v950
        %v972 = vld [vmem:[%s712] sm:$0xff]
        %v973 = vld [vmem:[%s712 + $0x8] sm:$0xff]
        %v974 = vld [vmem:[%s712 + $0x10] sm:$0xff]
        %v975 = vld [vmem:[%s712 + $0x18] sm:$0xff]
        %v976 = vld [vmem:[%s712 + $0x20] sm:$0xff]
        %v977 = vld [vmem:[%s712 + $0x28] sm:$0xff]
        %v978 = vld [vmem:[%s712 + $0x30] sm:$0xff]
        %v979 = vld [vmem:[%s712 + $0x38] sm:$0xff]
        %v980 = vld [vmem:[%s712 + $0x40] sm:$0xff]
        %v981 = vld [vmem:[%s712 + $0x48] sm:$0xff]
        %v982 = vld [vmem:[%s712 + $0x50] sm:$0xff]
        %v983 = vld [vmem:[%s712 + $0x58] sm:$0xff]
        %v984 = vld [vmem:[%s712 + $0x60] sm:$0xff]
        %v985 = vld [vmem:[%s712 + $0x68] sm:$0xff]
        %v986 = vld [vmem:[%s712 + $0x70] sm:$0xff]
        %v987 = vld [vmem:[%s712 + $0x78] sm:$0xff]
        %v988 = vld [vmem:[%s712 + $0x80] sm:$0xff]
        %v989 = vld [vmem:[%s712 + $0x88] sm:$0xff]
        %v990 = vld [vmem:[%s712 + $0x90] sm:$0xff]
        %v991 = vld [vmem:[%s712 + $0x98] sm:$0xff]
        %v992 = vld [vmem:[%s712 + $0xa0] sm:$0xff]
        %v993 = vld [vmem:[%s712 + $0xa8] sm:$0xff]
        %v994 = vld [vmem:[%s712 + $0xb0] sm:$0xff]
        %v995 = vld [vmem:[%s712 + $0xb8] sm:$0xff]
        %v996 = vld [vmem:[%s712 + $0xc0] sm:$0xff]
        %v997 = vld [vmem:[%s712 + $0xc8] sm:$0xff]
        %v998 = vld [vmem:[%s712 + $0xd0] sm:$0xff]
        %v999 = vld [vmem:[%s712 + $0xd8] sm:$0xff]
        %v1000 = vld [vmem:[%s712 + $0xe0] sm:$0xff]
        %v1001 = vld [vmem:[%s712 + $0xe8] sm:$0xff]
        %v1002 = vld [vmem:[%s712 + $0xf0] sm:$0xff]
        %v1003 = vld [vmem:[%s712 + $0xf8] sm:$0xff]
        %v1004 = vld [vmem:[%s712 + $0x100] sm:$0xff]
        %v1005 = vld [vmem:[%s712 + $0x108] sm:$0xff]
        %v1006 = vld [vmem:[%s712 + $0x110] sm:$0xff]
        %v1007 = vld [vmem:[%s712 + $0x118] sm:$0xff]
        %v1008 = vld [vmem:[%s712 + $0x120] sm:$0xff]
        %v1009 = vld [vmem:[%s712 + $0x128] sm:$0xff]
        %v1010 = vld [vmem:[%s712 + $0x130] sm:$0xff]
        %v1011 = vld [vmem:[%s712 + $0x138] sm:$0xff]
        %v1012 = vld [vmem:[%s712 + $0x140] sm:$0xff]
        %v1013 = vld [vmem:[%s712 + $0x148] sm:$0xff]
        %v1014 = vld [vmem:[%s712 + $0x150] sm:$0xff]
        %v1015 = vld [vmem:[%s712 + $0x158] sm:$0xff]
        %v1016 = vld [vmem:[%s712 + $0x160] sm:$0xff]
        %v1017 = vld [vmem:[%s712 + $0x168] sm:$0xff]
        %v1018 = vld [vmem:[%s712 + $0x170] sm:$0xff]
        %v1019 = vld [vmem:[%s712 + $0x178] sm:$0xff]
        %v1020 = vld [vmem:[%s712 + $0x180] sm:$0xff]
        %v1021 = vld [vmem:[%s712 + $0x188] sm:$0xff]
        %v1022 = vld [vmem:[%s712 + $0x190] sm:$0xff]
        %v1023 = vld [vmem:[%s712 + $0x198] sm:$0xff]
        %v1024 = vld [vmem:[%s712 + $0x1a0] sm:$0xff]
        %v1025 = vld [vmem:[%s712 + $0x1a8] sm:$0xff]
        %v1026 = vld [vmem:[%s712 + $0x1b0] sm:$0xff]
        %v1027 = vld [vmem:[%s712 + $0x1b8] sm:$0xff]
        %v1028 = vld [vmem:[%s712 + $0x1c0] sm:$0xff]
        %v1029 = vld [vmem:[%s712 + $0x1c8] sm:$0xff]
        %v1030 = vld [vmem:[%s712 + $0x1d0] sm:$0xff]
        %v1031 = vld [vmem:[%s712 + $0x1d8] sm:$0xff]
        %v1032 = vld [vmem:[%s712 + $0x1e0] sm:$0xff]
        %v1033 = vld [vmem:[%s712 + $0x1e8] sm:$0xff]
        %v1034 = vld [vmem:[%s712 + $0x1f0] sm:$0xff]
        %v1035 = vld [vmem:[%s712 + $0x1f8] sm:$0xff]
        %v1036 = vld [vmem:[%s712 + $0x200] sm:$0xff]
        %v1037 = vld [vmem:[%s712 + $0x208] sm:$0xff]
        %v1038 = vld [vmem:[%s712 + $0x210] sm:$0xff]
        %v1039 = vld [vmem:[%s712 + $0x218] sm:$0xff]
        %v1040 = vld [vmem:[%s712 + $0x220] sm:$0xff]
        %v1041 = vld [vmem:[%s712 + $0x228] sm:$0xff]
        %v1042 = vld [vmem:[%s712 + $0x230] sm:$0xff]
        %v1043 = vld [vmem:[%s712 + $0x238] sm:$0xff]
        %v1044 = vld [vmem:[%s712 + $0x240] sm:$0xff]
        %v1045 = vld [vmem:[%s712 + $0x248] sm:$0xff]
        %v1046 = vld [vmem:[%s712 + $0x250] sm:$0xff]
        %v1047 = vld [vmem:[%s712 + $0x258] sm:$0xff]
        %v1048 = vld [vmem:[%s712 + $0x260] sm:$0xff]
        %v1049 = vld [vmem:[%s712 + $0x268] sm:$0xff]
        %v1050 = vld [vmem:[%s712 + $0x270] sm:$0xff]
        %v1051 = vld [vmem:[%s712 + $0x278] sm:$0xff]
        %v1052 = vld [vmem:[%s712 + $0x280] sm:$0xff]
        %v1053 = vld [vmem:[%s712 + $0x288] sm:$0xff]
        %v1054 = vld [vmem:[%s712 + $0x290] sm:$0xff]
        %v1055 = vld [vmem:[%s712 + $0x298] sm:$0xff]
        %v1056 = vld [vmem:[%s712 + $0x2a0] sm:$0xff]
        %v1057 = vld [vmem:[%s712 + $0x2a8] sm:$0xff]
        %v1058 = vld [vmem:[%s712 + $0x2b0] sm:$0xff]
        %v1059 = vld [vmem:[%s712 + $0x2b8] sm:$0xff]
        %v1060 = vld [vmem:[%s712 + $0x2c0] sm:$0xff]
        %v1061 = vld [vmem:[%s712 + $0x2c8] sm:$0xff]
        %v1062 = vld [vmem:[%s712 + $0x2d0] sm:$0xff]
        %v1063 = vld [vmem:[%s712 + $0x2d8] sm:$0xff]
        %v1064 = vld [vmem:[%s712 + $0x2e0] sm:$0xff]
        %v1065 = vld [vmem:[%s712 + $0x2e8] sm:$0xff]
        %v1066 = vld [vmem:[%s712 + $0x2f0] sm:$0xff]
        %v1067 = vld [vmem:[%s712 + $0x2f8] sm:$0xff]
        %v1068 = vld [vmem:[%s722] sm:$0x3f]
        %v1070 = vperm.slane %v1068, 0
        %v1071 = vperm.slane %v1068, 1
        %v1072 = vperm.slane %v1068, 2
        %v1073 = vperm.slane %v1068, 3
        %v1074 = vperm.slane %v1068, 4
        %v1075 = vperm.slane %v1068, 5
        %v1178 = vunpack.c.l.b16 %v972
        %v1179 = vunpack.c.h.b16 %v972
        %v1180 = vunpack.c.l.b16 %v973
        %v1181 = vunpack.c.h.b16 %v973
        %v1182 = vunpack.c.l.b16 %v974
        %v1183 = vunpack.c.h.b16 %v974
        %v1184 = vunpack.c.l.b16 %v975
        %v1185 = vunpack.c.h.b16 %v975
        %v1186 = vunpack.c.l.b16 %v976
        %v1187 = vunpack.c.h.b16 %v976
        %v1188 = vunpack.c.l.b16 %v977
        %v1189 = vunpack.c.h.b16 %v977
        %v1190 = vunpack.c.l.b16 %v978
        %v1191 = vunpack.c.h.b16 %v978
        %v1192 = vunpack.c.l.b16 %v979
        %v1193 = vunpack.c.h.b16 %v979
        %v1194 = vunpack.c.l.b16 %v980
        %v1195 = vunpack.c.h.b16 %v980
        %v1196 = vunpack.c.l.b16 %v981
        %v1197 = vunpack.c.h.b16 %v981
        %v1198 = vunpack.c.l.b16 %v982
        %v1199 = vunpack.c.h.b16 %v982
        %v1200 = vunpack.c.l.b16 %v983
        %v1201 = vunpack.c.h.b16 %v983
        %v1202 = vunpack.c.l.b16 %v984
        %v1203 = vunpack.c.h.b16 %v984
        %v1204 = vunpack.c.l.b16 %v985
        %v1205 = vunpack.c.h.b16 %v985
        %v1206 = vunpack.c.l.b16 %v986
        %v1207 = vunpack.c.h.b16 %v986
        %v1208 = vunpack.c.l.b16 %v987
        %v1209 = vunpack.c.h.b16 %v987
        %v1210 = vunpack.c.l.b16 %v988
        %v1211 = vunpack.c.h.b16 %v988
        %v1212 = vunpack.c.l.b16 %v989
        %v1213 = vunpack.c.h.b16 %v989
        %v1214 = vunpack.c.l.b16 %v990
        %v1215 = vunpack.c.h.b16 %v990
        %v1216 = vunpack.c.l.b16 %v991
        %v1217 = vunpack.c.h.b16 %v991
        %v1218 = vunpack.c.l.b16 %v992
        %v1219 = vunpack.c.h.b16 %v992
        %v1220 = vunpack.c.l.b16 %v993
        %v1221 = vunpack.c.h.b16 %v993
        %v1222 = vunpack.c.l.b16 %v994
        %v1223 = vunpack.c.h.b16 %v994
        %v1224 = vunpack.c.l.b16 %v995
        %v1225 = vunpack.c.h.b16 %v995
        %v1226 = vunpack.c.l.b16 %v996
        %v1227 = vunpack.c.h.b16 %v996
        %v1228 = vunpack.c.l.b16 %v997
        %v1229 = vunpack.c.h.b16 %v997
        %v1230 = vunpack.c.l.b16 %v998
        %v1231 = vunpack.c.h.b16 %v998
        %v1232 = vunpack.c.l.b16 %v999
        %v1233 = vunpack.c.h.b16 %v999
        %v1234 = vunpack.c.l.b16 %v1000
        %v1235 = vunpack.c.h.b16 %v1000
        %v1236 = vunpack.c.l.b16 %v1001
        %v1237 = vunpack.c.h.b16 %v1001
        %v1238 = vunpack.c.l.b16 %v1002
        %v1239 = vunpack.c.h.b16 %v1002
        %v1240 = vunpack.c.l.b16 %v1003
        %v1241 = vunpack.c.h.b16 %v1003
        %v1242 = vunpack.c.l.b16 %v1004
        %v1243 = vunpack.c.h.b16 %v1004
        %v1244 = vunpack.c.l.b16 %v1005
        %v1245 = vunpack.c.h.b16 %v1005
        %v1246 = vunpack.c.l.b16 %v1006
        %v1247 = vunpack.c.h.b16 %v1006
        %v1248 = vunpack.c.l.b16 %v1007
        %v1249 = vunpack.c.h.b16 %v1007
        %v1250 = vunpack.c.l.b16 %v1008
        %v1251 = vunpack.c.h.b16 %v1008
        %v1252 = vunpack.c.l.b16 %v1009
        %v1253 = vunpack.c.h.b16 %v1009
        %v1254 = vunpack.c.l.b16 %v1010
        %v1255 = vunpack.c.h.b16 %v1010
        %v1256 = vunpack.c.l.b16 %v1011
        %v1257 = vunpack.c.h.b16 %v1011
        %v1258 = vunpack.c.l.b16 %v1012
        %v1259 = vunpack.c.h.b16 %v1012
        %v1260 = vunpack.c.l.b16 %v1013
        %v1261 = vunpack.c.h.b16 %v1013
        %v1262 = vunpack.c.l.b16 %v1014
        %v1263 = vunpack.c.h.b16 %v1014
        %v1264 = vunpack.c.l.b16 %v1015
        %v1265 = vunpack.c.h.b16 %v1015
        %v1266 = vunpack.c.l.b16 %v1016
        %v1267 = vunpack.c.h.b16 %v1016
        %v1268 = vunpack.c.l.b16 %v1017
        %v1269 = vunpack.c.h.b16 %v1017
        %v1270 = vunpack.c.l.b16 %v1018
        %v1271 = vunpack.c.h.b16 %v1018
        %v1272 = vunpack.c.l.b16 %v1019
        %v1273 = vunpack.c.h.b16 %v1019
        %v1274 = vunpack.c.l.b16 %v1020
        %v1275 = vunpack.c.h.b16 %v1020
        %v1276 = vunpack.c.l.b16 %v1021
        %v1277 = vunpack.c.h.b16 %v1021
        %v1278 = vunpack.c.l.b16 %v1022
        %v1279 = vunpack.c.h.b16 %v1022
        %v1280 = vunpack.c.l.b16 %v1023
        %v1281 = vunpack.c.h.b16 %v1023
        %v1282 = vunpack.c.l.b16 %v1024
        %v1283 = vunpack.c.h.b16 %v1024
        %v1284 = vunpack.c.l.b16 %v1025
        %v1285 = vunpack.c.h.b16 %v1025
        %v1286 = vunpack.c.l.b16 %v1026
        %v1287 = vunpack.c.h.b16 %v1026
        %v1288 = vunpack.c.l.b16 %v1027
        %v1289 = vunpack.c.h.b16 %v1027
        %v1290 = vunpack.c.l.b16 %v1028
        %v1291 = vunpack.c.h.b16 %v1028
        %v1292 = vunpack.c.l.b16 %v1029
        %v1293 = vunpack.c.h.b16 %v1029
        %v1294 = vunpack.c.l.b16 %v1030
        %v1295 = vunpack.c.h.b16 %v1030
        %v1296 = vunpack.c.l.b16 %v1031
        %v1297 = vunpack.c.h.b16 %v1031
        %v1298 = vunpack.c.l.b16 %v1032
        %v1299 = vunpack.c.h.b16 %v1032
        %v1300 = vunpack.c.l.b16 %v1033
        %v1301 = vunpack.c.h.b16 %v1033
        %v1302 = vunpack.c.l.b16 %v1034
        %v1303 = vunpack.c.h.b16 %v1034
        %v1304 = vunpack.c.l.b16 %v1035
        %v1305 = vunpack.c.h.b16 %v1035
        %v1306 = vunpack.c.l.b16 %v1036
        %v1307 = vunpack.c.h.b16 %v1036
        %v1308 = vunpack.c.l.b16 %v1037
        %v1309 = vunpack.c.h.b16 %v1037
        %v1310 = vunpack.c.l.b16 %v1038
        %v1311 = vunpack.c.h.b16 %v1038
        %v1312 = vunpack.c.l.b16 %v1039
        %v1313 = vunpack.c.h.b16 %v1039
        %v1314 = vunpack.c.l.b16 %v1040
        %v1315 = vunpack.c.h.b16 %v1040
        %v1316 = vunpack.c.l.b16 %v1041
        %v1317 = vunpack.c.h.b16 %v1041
        %v1318 = vunpack.c.l.b16 %v1042
        %v1319 = vunpack.c.h.b16 %v1042
        %v1320 = vunpack.c.l.b16 %v1043
        %v1321 = vunpack.c.h.b16 %v1043
        %v1322 = vunpack.c.l.b16 %v1044
        %v1323 = vunpack.c.h.b16 %v1044
        %v1324 = vunpack.c.l.b16 %v1045
        %v1325 = vunpack.c.h.b16 %v1045
        %v1326 = vunpack.c.l.b16 %v1046
        %v1327 = vunpack.c.h.b16 %v1046
        %v1328 = vunpack.c.l.b16 %v1047
        %v1329 = vunpack.c.h.b16 %v1047
        %v1330 = vunpack.c.l.b16 %v1048
        %v1331 = vunpack.c.h.b16 %v1048
        %v1332 = vunpack.c.l.b16 %v1049
        %v1333 = vunpack.c.h.b16 %v1049
        %v1334 = vunpack.c.l.b16 %v1050
        %v1335 = vunpack.c.h.b16 %v1050
        %v1336 = vunpack.c.l.b16 %v1051
        %v1337 = vunpack.c.h.b16 %v1051
        %v1338 = vunpack.c.l.b16 %v1052
        %v1339 = vunpack.c.h.b16 %v1052
        %v1340 = vunpack.c.l.b16 %v1053
        %v1341 = vunpack.c.h.b16 %v1053
        %v1342 = vunpack.c.l.b16 %v1054
        %v1343 = vunpack.c.h.b16 %v1054
        %v1344 = vunpack.c.l.b16 %v1055
        %v1345 = vunpack.c.h.b16 %v1055
        %v1346 = vunpack.c.l.b16 %v1056
        %v1347 = vunpack.c.h.b16 %v1056
        %v1348 = vunpack.c.l.b16 %v1057
        %v1349 = vunpack.c.h.b16 %v1057
        %v1350 = vunpack.c.l.b16 %v1058
        %v1351 = vunpack.c.h.b16 %v1058
        %v1352 = vunpack.c.l.b16 %v1059
        %v1353 = vunpack.c.h.b16 %v1059
        %v1354 = vunpack.c.l.b16 %v1060
        %v1355 = vunpack.c.h.b16 %v1060
        %v1356 = vunpack.c.l.b16 %v1061
        %v1357 = vunpack.c.h.b16 %v1061
        %v1358 = vunpack.c.l.b16 %v1062
        %v1359 = vunpack.c.h.b16 %v1062
        %v1360 = vunpack.c.l.b16 %v1063
        %v1361 = vunpack.c.h.b16 %v1063
        %v1362 = vunpack.c.l.b16 %v1064
        %v1363 = vunpack.c.h.b16 %v1064
        %v1364 = vunpack.c.l.b16 %v1065
        %v1365 = vunpack.c.h.b16 %v1065
        %v1366 = vunpack.c.l.b16 %v1066
        %v1367 = vunpack.c.h.b16 %v1066
        %v1368 = vunpack.c.l.b16 %v1067
        %v1369 = vunpack.c.h.b16 %v1067
        %v1370 = vpack.c.b16 %v1184, %v1178
        %v1371 = vpack.c.b16 %v1185, %v1179
        %v1372 = vpack.c.b16 %v1186, %v1180
        %v1373 = vpack.c.b16 %v1187, %v1181
        %v1374 = vpack.c.b16 %v1188, %v1182
        %v1375 = vpack.c.b16 %v1189, %v1183
        %v1376 = vpack.c.b16 %v1196, %v1190
        %v1377 = vpack.c.b16 %v1197, %v1191
        %v1378 = vpack.c.b16 %v1198, %v1192
        %v1379 = vpack.c.b16 %v1199, %v1193
        %v1380 = vpack.c.b16 %v1200, %v1194
        %v1381 = vpack.c.b16 %v1201, %v1195
        %v1382 = vpack.c.b16 %v1208, %v1202
        %v1383 = vpack.c.b16 %v1209, %v1203
        %v1384 = vpack.c.b16 %v1210, %v1204
        %v1385 = vpack.c.b16 %v1211, %v1205
        %v1386 = vpack.c.b16 %v1212, %v1206
        %v1387 = vpack.c.b16 %v1213, %v1207
        %v1388 = vpack.c.b16 %v1220, %v1214
        %v1389 = vpack.c.b16 %v1221, %v1215
        %v1390 = vpack.c.b16 %v1222, %v1216
        %v1391 = vpack.c.b16 %v1223, %v1217
        %v1392 = vpack.c.b16 %v1224, %v1218
        %v1393 = vpack.c.b16 %v1225, %v1219
        %v1394 = vpack.c.b16 %v1232, %v1226
        %v1395 = vpack.c.b16 %v1233, %v1227
        %v1396 = vpack.c.b16 %v1234, %v1228
        %v1397 = vpack.c.b16 %v1235, %v1229
        %v1398 = vpack.c.b16 %v1236, %v1230
        %v1399 = vpack.c.b16 %v1237, %v1231
        %v1400 = vpack.c.b16 %v1244, %v1238
        %v1401 = vpack.c.b16 %v1245, %v1239
        %v1402 = vpack.c.b16 %v1246, %v1240
        %v1403 = vpack.c.b16 %v1247, %v1241
        %v1404 = vpack.c.b16 %v1248, %v1242
        %v1405 = vpack.c.b16 %v1249, %v1243
        %v1406 = vpack.c.b16 %v1256, %v1250
        %v1407 = vpack.c.b16 %v1257, %v1251
        %v1408 = vpack.c.b16 %v1258, %v1252
        %v1409 = vpack.c.b16 %v1259, %v1253
        %v1410 = vpack.c.b16 %v1260, %v1254
        %v1411 = vpack.c.b16 %v1261, %v1255
        %v1412 = vpack.c.b16 %v1268, %v1262
        %v1413 = vpack.c.b16 %v1269, %v1263
        %v1414 = vpack.c.b16 %v1270, %v1264
        %v1415 = vpack.c.b16 %v1271, %v1265
        %v1416 = vpack.c.b16 %v1272, %v1266
        %v1417 = vpack.c.b16 %v1273, %v1267
        %v1418 = vpack.c.b16 %v1280, %v1274
        %v1419 = vpack.c.b16 %v1281, %v1275
        %v1420 = vpack.c.b16 %v1282, %v1276
        %v1421 = vpack.c.b16 %v1283, %v1277
        %v1422 = vpack.c.b16 %v1284, %v1278
        %v1423 = vpack.c.b16 %v1285, %v1279
        %v1424 = vpack.c.b16 %v1292, %v1286
        %v1425 = vpack.c.b16 %v1293, %v1287
        %v1426 = vpack.c.b16 %v1294, %v1288
        %v1427 = vpack.c.b16 %v1295, %v1289
        %v1428 = vpack.c.b16 %v1296, %v1290
        %v1429 = vpack.c.b16 %v1297, %v1291
        %v1430 = vpack.c.b16 %v1304, %v1298
        %v1431 = vpack.c.b16 %v1305, %v1299
        %v1432 = vpack.c.b16 %v1306, %v1300
        %v1433 = vpack.c.b16 %v1307, %v1301
        %v1434 = vpack.c.b16 %v1308, %v1302
        %v1435 = vpack.c.b16 %v1309, %v1303
        %v1436 = vpack.c.b16 %v1316, %v1310
        %v1437 = vpack.c.b16 %v1317, %v1311
        %v1438 = vpack.c.b16 %v1318, %v1312
        %v1439 = vpack.c.b16 %v1319, %v1313
        %v1440 = vpack.c.b16 %v1320, %v1314
        %v1441 = vpack.c.b16 %v1321, %v1315
        %v1442 = vpack.c.b16 %v1328, %v1322
        %v1443 = vpack.c.b16 %v1329, %v1323
        %v1444 = vpack.c.b16 %v1330, %v1324
        %v1445 = vpack.c.b16 %v1331, %v1325
        %v1446 = vpack.c.b16 %v1332, %v1326
        %v1447 = vpack.c.b16 %v1333, %v1327
        %v1448 = vpack.c.b16 %v1340, %v1334
        %v1449 = vpack.c.b16 %v1341, %v1335
        %v1450 = vpack.c.b16 %v1342, %v1336
        %v1451 = vpack.c.b16 %v1343, %v1337
        %v1452 = vpack.c.b16 %v1344, %v1338
        %v1453 = vpack.c.b16 %v1345, %v1339
        %v1454 = vpack.c.b16 %v1352, %v1346
        %v1455 = vpack.c.b16 %v1353, %v1347
        %v1456 = vpack.c.b16 %v1354, %v1348
        %v1457 = vpack.c.b16 %v1355, %v1349
        %v1458 = vpack.c.b16 %v1356, %v1350
        %v1459 = vpack.c.b16 %v1357, %v1351
        %v1460 = vpack.c.b16 %v1364, %v1358
        %v1461 = vpack.c.b16 %v1365, %v1359
        %v1462 = vpack.c.b16 %v1366, %v1360
        %v1463 = vpack.c.b16 %v1367, %v1361
        %v1464 = vpack.c.b16 %v1368, %v1362
        %v1465 = vpack.c.b16 %v1369, %v1363
        %1562 = vmatpush.bf16.msra.mxu0 %v1412
        %1563 = vmatpush.bf16.msra.mxu0 %v1406
        %1564 = vmatpush.bf16.msra.mxu0 %v1400
        %1565 = vmatpush.bf16.msra.mxu0 %v1394
        %1566 = vmatpush.bf16.msra.mxu0 %v1388
        %1567 = vmatpush.bf16.msra.mxu0 %v1382
        %1568 = vmatpush.bf16.msra.mxu0 %v1376
        %1569 = vmatpush.bf16.msra.mxu0 %v1370
        %1570 = vmatmul.bf16.gmra.mxu0 %v970
        %v1571 = vpop.f32.mrf.mxu0
        %v1572 = vadd.f32 %v1070, %v1571
        %v1573 = vpop.f32.mrf.mxu0
        %1574 = vdwg.mxu0
        %1575 = vmatpush.bf16.msra.mxu0 %v1460
        %1576 = vmatpush.bf16.msra.mxu0 %v1454
        %1577 = vmatpush.bf16.msra.mxu0 %v1448
        %1578 = vmatpush.bf16.msra.mxu0 %v1442
        %1579 = vmatpush.bf16.msra.mxu0 %v1436
        %1580 = vmatpush.bf16.msra.mxu0 %v1430
        %1581 = vmatpush.bf16.msra.mxu0 %v1424
        %1582 = vmatpush.bf16.msra.mxu0 %v1418
        %1583 = vmatmul.bf16.gmra.mxu0 %v971
        %v1584 = vpop.f32.mrf.mxu0
        %v1585 = vadd.f32 %v1572, %v1584
        %v1586 = vpop.f32.mrf.mxu0
        %1587 = vdwg.mxu0
        %1588 = vmatpush.bf16.msra.mxu0 %v1413
        %1589 = vmatpush.bf16.msra.mxu0 %v1407
        %1590 = vmatpush.bf16.msra.mxu0 %v1401
        %1591 = vmatpush.bf16.msra.mxu0 %v1395
        %1592 = vmatpush.bf16.msra.mxu0 %v1389
        %1593 = vmatpush.bf16.msra.mxu0 %v1383
        %1594 = vmatpush.bf16.msra.mxu0 %v1377
        %1595 = vmatpush.bf16.msra.mxu0 %v1371
        %1596 = vmatmul.bf16.gmra.mxu0 %v970
        %v1597 = vpop.f32.mrf.mxu0
        %v1598 = vadd.f32 %v1071, %v1597
        %v1599 = vpop.f32.mrf.mxu0
        %1600 = vdwg.mxu0
        %1601 = vmatpush.bf16.msra.mxu0 %v1461
        %1602 = vmatpush.bf16.msra.mxu0 %v1455
        %1603 = vmatpush.bf16.msra.mxu0 %v1449
        %1604 = vmatpush.bf16.msra.mxu0 %v1443
        %1605 = vmatpush.bf16.msra.mxu0 %v1437
        %1606 = vmatpush.bf16.msra.mxu0 %v1431
        %1607 = vmatpush.bf16.msra.mxu0 %v1425
        %1608 = vmatpush.bf16.msra.mxu0 %v1419
        %1609 = vmatmul.bf16.gmra.mxu0 %v971
        %v1610 = vpop.f32.mrf.mxu0
        %v1611 = vadd.f32 %v1598, %v1610
        %v1612 = vpop.f32.mrf.mxu0
        %1613 = vdwg.mxu0
        %1614 = vmatpush.bf16.msra.mxu0 %v1414
        %1615 = vmatpush.bf16.msra.mxu0 %v1408
        %1616 = vmatpush.bf16.msra.mxu0 %v1402
        %1617 = vmatpush.bf16.msra.mxu0 %v1396
        %1618 = vmatpush.bf16.msra.mxu0 %v1390
        %1619 = vmatpush.bf16.msra.mxu0 %v1384
        %1620 = vmatpush.bf16.msra.mxu0 %v1378
        %1621 = vmatpush.bf16.msra.mxu0 %v1372
        %1622 = vmatmul.bf16.gmra.mxu0 %v970
        %v1623 = vpop.f32.mrf.mxu0
        %v1624 = vadd.f32 %v1072, %v1623
        %v1625 = vpop.f32.mrf.mxu0
        %1626 = vdwg.mxu0
        %1627 = vmatpush.bf16.msra.mxu0 %v1462
        %1628 = vmatpush.bf16.msra.mxu0 %v1456
        %1629 = vmatpush.bf16.msra.mxu0 %v1450
        %1630 = vmatpush.bf16.msra.mxu0 %v1444
        %1631 = vmatpush.bf16.msra.mxu0 %v1438
        %1632 = vmatpush.bf16.msra.mxu0 %v1432
        %1633 = vmatpush.bf16.msra.mxu0 %v1426
        %1634 = vmatpush.bf16.msra.mxu0 %v1420
        %1635 = vmatmul.bf16.gmra.mxu0 %v971
        %v1636 = vpop.f32.mrf.mxu0
        %v1637 = vadd.f32 %v1624, %v1636
        %v1638 = vpop.f32.mrf.mxu0
        %1639 = vdwg.mxu0
        %1640 = vmatpush.bf16.msra.mxu0 %v1415
        %1641 = vmatpush.bf16.msra.mxu0 %v1409
        %1642 = vmatpush.bf16.msra.mxu0 %v1403
        %1643 = vmatpush.bf16.msra.mxu0 %v1397
        %1644 = vmatpush.bf16.msra.mxu0 %v1391
        %1645 = vmatpush.bf16.msra.mxu0 %v1385
        %1646 = vmatpush.bf16.msra.mxu0 %v1379
        %1647 = vmatpush.bf16.msra.mxu0 %v1373
        %1648 = vmatmul.bf16.gmra.mxu0 %v970
        %v1649 = vpop.f32.mrf.mxu0
        %v1650 = vadd.f32 %v1073, %v1649
        %v1651 = vpop.f32.mrf.mxu0
        %1652 = vdwg.mxu0
        %1653 = vmatpush.bf16.msra.mxu0 %v1463
        %1654 = vmatpush.bf16.msra.mxu0 %v1457
        %1655 = vmatpush.bf16.msra.mxu0 %v1451
        %1656 = vmatpush.bf16.msra.mxu0 %v1445
        %1657 = vmatpush.bf16.msra.mxu0 %v1439
        %1658 = vmatpush.bf16.msra.mxu0 %v1433
        %1659 = vmatpush.bf16.msra.mxu0 %v1427
        %1660 = vmatpush.bf16.msra.mxu0 %v1421
        %1661 = vmatmul.bf16.gmra.mxu0 %v971
        %v1662 = vpop.f32.mrf.mxu0
        %v1663 = vadd.f32 %v1650, %v1662
        %v1664 = vpop.f32.mrf.mxu0
        %1665 = vdwg.mxu0
        %1666 = vmatpush.bf16.msra.mxu0 %v1416
        %1667 = vmatpush.bf16.msra.mxu0 %v1410
        %1668 = vmatpush.bf16.msra.mxu0 %v1404
        %1669 = vmatpush.bf16.msra.mxu0 %v1398
        %1670 = vmatpush.bf16.msra.mxu0 %v1392
        %1671 = vmatpush.bf16.msra.mxu0 %v1386
        %1672 = vmatpush.bf16.msra.mxu0 %v1380
        %1673 = vmatpush.bf16.msra.mxu0 %v1374
        %1674 = vmatmul.bf16.gmra.mxu0 %v970
        %v1675 = vpop.f32.mrf.mxu0
        %v1676 = vadd.f32 %v1074, %v1675
        %v1677 = vpop.f32.mrf.mxu0
        %1678 = vdwg.mxu0
        %1679 = vmatpush.bf16.msra.mxu0 %v1464
        %1680 = vmatpush.bf16.msra.mxu0 %v1458
        %1681 = vmatpush.bf16.msra.mxu0 %v1452
        %1682 = vmatpush.bf16.msra.mxu0 %v1446
        %1683 = vmatpush.bf16.msra.mxu0 %v1440
        %1684 = vmatpush.bf16.msra.mxu0 %v1434
        %1685 = vmatpush.bf16.msra.mxu0 %v1428
        %1686 = vmatpush.bf16.msra.mxu0 %v1422
        %1687 = vmatmul.bf16.gmra.mxu0 %v971
        %v1688 = vpop.f32.mrf.mxu0
        %v1689 = vadd.f32 %v1676, %v1688
        %v1690 = vpop.f32.mrf.mxu0
        %1691 = vdwg.mxu0
        %1692 = vmatpush.bf16.msra.mxu0 %v1417
        %1693 = vmatpush.bf16.msra.mxu0 %v1411
        %1694 = vmatpush.bf16.msra.mxu0 %v1405
        %1695 = vmatpush.bf16.msra.mxu0 %v1399
        %1696 = vmatpush.bf16.msra.mxu0 %v1393
        %1697 = vmatpush.bf16.msra.mxu0 %v1387
        %1698 = vmatpush.bf16.msra.mxu0 %v1381
        %1699 = vmatpush.bf16.msra.mxu0 %v1375
        %1700 = vmatmul.bf16.gmra.mxu0 %v970
        %v1701 = vpop.f32.mrf.mxu0
        %v1702 = vadd.f32 %v1075, %v1701
        %v1703 = vpop.f32.mrf.mxu0
        %1704 = vdwg.mxu0
        %1705 = vmatpush.bf16.msra.mxu0 %v1465
        %1706 = vmatpush.bf16.msra.mxu0 %v1459
        %1707 = vmatpush.bf16.msra.mxu0 %v1453
        %1708 = vmatpush.bf16.msra.mxu0 %v1447
        %1709 = vmatpush.bf16.msra.mxu0 %v1441
        %1710 = vmatpush.bf16.msra.mxu0 %v1435
        %1711 = vmatpush.bf16.msra.mxu0 %v1429
        %1712 = vmatpush.bf16.msra.mxu0 %v1423
        %1713 = vmatmul.bf16.gmra.mxu0 %v971
        %v1714 = vpop.f32.mrf.mxu0
        %v1715 = vadd.f32 %v1702, %v1714
        %v1716 = vpop.f32.mrf.mxu0
        %1717 = vdwg.mxu0
        %v1718 = vmul.f32 %v1585, %v964
        %v1719 = vmul.f32 %v1611, %v965
        %v1720 = vmul.f32 %v1637, %v966
        %v1721 = vmul.f32 %v1663, %v967
        %v1722 = vmul.f32 %v1689, %v968
        %v1723 = vmul.f32 %v1715, %v969
        %v1724 = vpack.c.bf16 %v1719, %v1718
        %v1725 = vpack.c.bf16 %v1721, %v1720
        %v1726 = vpack.c.bf16 %v1723, %v1722
        %1727 = vst [vmem:[#allocation3] sm:$0xff] %v1724
        %1728 = vst [vmem:[#allocation3 + $0x8] sm:$0xff] %v1725
        %1729 = vst [vmem:[#allocation3 + $0x10] sm:$0xff] %v1726
        %v1730 = vlaneseq
        %v1731 = vshrl.u32 %v1730, 7
        %vm1732 = vcmp.ge.s32.totalorder %v1731, %v952
        %v1733 = vld [vmem:[#allocation3] sm:$0xf]
        %v1734 = vld [vmem:[#allocation3 + $0x8] sm:$0xf]
        %v1735 = vld [vmem:[#allocation3 + $0x10] sm:$0xf]
        %1736 = vmatpush.bf16.xpose.msra.mxu0 0
        %1737 = vmatpush.bf16.xpose.msra.mxu0 0
        %1738 = vmatpush.bf16.xpose.msra.mxu0 0
        %1739 = vmatpush.bf16.xpose.msra.mxu0 0
        %1740 = vmatpush.bf16.xpose.msra.mxu0 0
        %1741 = vmatpush.bf16.xpose.msra.mxu0 0
        %1742 = vmatpush.bf16.xpose.msra.mxu0 0
        %1743 = vmatpush.bf16.xpose.msra.mxu0 %v1734
        %1744 = vmatmul.bf16.gmra.mxu0 %v1733
        %v1745 = vpop.f32.mrf.mxu0
        %v1746 = vadd.f32 0.0, %v1745
        %v1747 = vpop.f32.mrf.mxu0
        %1748 = vdwg.mxu0
        %v1749 = vsel %vm1732, %v1746, -1e+30
        %vm1750 = vcmask 64512
        %v1751 = vsel %vm1750, %v1749, -inf
        %1752 = vmax.xlane.f32.xlu0 %v1751
        %v1753 = vpop.xlane.xlu0 %1752
        %v1754 = vsub.f32 %v1749, %v1753
        %v1755 = vmul.f32 %v1754, 1.442695
        %v1756 = vpow.pop %v1755
        %v1757 = vsel %vm1750, %v1756, 0.0
        %1758 = vadd.xlane.f32.xlu0 %v1757
        %v1759 = vpop.xlane.xlu0 %1758
        %v1760 = vrcp.pop %v1759
        %v1761 = vmul.f32 %v1756, %v1760
        %v1762 = vpack.c.bf16 %v1761, %v1761
        %v1764 = vsel %vm1750, %v1762, 0
        %vm1766 = vcmask 1043456
        %v1768 = vsel %vm1766, %v1735, 0
        %1770 = vmatpush.bf16.msra.mxu0 0
        %1771 = vmatpush.bf16.msra.mxu0 0
        %1772 = vmatpush.bf16.msra.mxu0 0
        %1773 = vmatpush.bf16.msra.mxu0 0
        %1774 = vmatpush.bf16.msra.mxu0 0
        %1775 = vmatpush.bf16.msra.mxu0 0
        %1776 = vmatpush.bf16.msra.mxu0 0
        %1777 = vmatpush.bf16.msra.mxu0 %v1768
        %1778 = vmatmul.bf16.gmra.mxu0 %v1764
        %v1779 = vpop.f32.mrf.mxu0
        %v1780 = vadd.f32 0.0, %v1779
        %v1781 = vpop.f32.mrf.mxu0
        %1782 = vdwg.mxu0
        %v1783 = vpack.c.bf16 %v1780, %v1780
        %1784 = vst [vmem:[#allocation4] sm:$0xf] %v1783
        %v1785 = vld [vmem:[#allocation3 + $0x4] sm:$0xf]
        %v1786 = vld [vmem:[#allocation3 + $0xc] sm:$0xf]
        %v1787 = vld [vmem:[#allocation3 + $0x14] sm:$0xf]
        %1788 = vmatpush.bf16.xpose.msra.mxu0 0
        %1789 = vmatpush.bf16.xpose.msra.mxu0 0
        %1790 = vmatpush.bf16.xpose.msra.mxu0 0
        %1791 = vmatpush.bf16.xpose.msra.mxu0 0
        %1792 = vmatpush.bf16.xpose.msra.mxu0 0
        %1793 = vmatpush.bf16.xpose.msra.mxu0 0
        %1794 = vmatpush.bf16.xpose.msra.mxu0 0
        %1795 = vmatpush.bf16.xpose.msra.mxu0 %v1786
        %1796 = vmatmul.bf16.gmra.mxu0 %v1785
        %v1797 = vpop.f32.mrf.mxu0
        %v1798 = vadd.f32 0.0, %v1797
        %v1799 = vpop.f32.mrf.mxu0
        %1800 = vdwg.mxu0
        %v1801 = vsel %vm1732, %v1798, -1e+30
        %v1802 = vsel %vm1750, %v1801, -inf
        %1803 = vmax.xlane.f32.xlu0 %v1802
        %v1804 = vpop.xlane.xlu0 %1803
        %v1805 = vsub.f32 %v1801, %v1804
        %v1806 = vmul.f32 %v1805, 1.442695
        %v1807 = vpow.pop %v1806
        %v1808 = vsel %vm1750, %v1807, 0.0
        %1809 = vadd.xlane.f32.xlu0 %v1808
        %v1810 = vpop.xlane.xlu0 %1809
        %v1811 = vrcp.pop %v1810
        %v1812 = vmul.f32 %v1807, %v1811
        %v1813 = vpack.c.bf16 %v1812, %v1812
        %v1815 = vsel %vm1750, %v1813, 0
        %v1818 = vsel %vm1766, %v1787, 0
        %1820 = vmatpush.bf16.msra.mxu0 0
        %1821 = vmatpush.bf16.msra.mxu0 0
        %1822 = vmatpush.bf16.msra.mxu0 0
        %1823 = vmatpush.bf16.msra.mxu0 0
        %1824 = vmatpush.bf16.msra.mxu0 0
        %1825 = vmatpush.bf16.msra.mxu0 0
        %1826 = vmatpush.bf16.msra.mxu0 0
        %1827 = vmatpush.bf16.msra.mxu0 %v1818
        %1828 = vmatmul.bf16.gmra.mxu0 %v1815
        %v1829 = vpop.f32.mrf.mxu0
        %v1830 = vadd.f32 0.0, %v1829
        %v1831 = vpop.f32.mrf.mxu0
        %1832 = vdwg.mxu0
        %v1833 = vpack.c.bf16 %v1830, %v1830
        %1834 = vst [vmem:[#allocation4 + $0x4] sm:$0xf] %v1833
        %v1835 = vld [vmem:[#allocation4] sm:$0xff]
        %v1836 = vld [vmem:[%s732] sm:$0xff]
        %v1837 = vld [vmem:[%s732 + $0x8] sm:$0xff]
        %v1838 = vld [vmem:[%s732 + $0x10] sm:$0xff]
        %v1839 = vld [vmem:[%s732 + $0x18] sm:$0xff]
        %v1840 = vld [vmem:[%s732 + $0x20] sm:$0xff]
        %v1841 = vld [vmem:[%s732 + $0x28] sm:$0xff]
        %v1842 = vld [vmem:[%s732 + $0x30] sm:$0xff]
        %v1843 = vld [vmem:[%s732 + $0x38] sm:$0xff]
        %v1844 = vld [vmem:[%s732 + $0x40] sm:$0xff]
        %v1845 = vld [vmem:[%s732 + $0x48] sm:$0xff]
        %v1846 = vld [vmem:[%s732 + $0x50] sm:$0xff]
        %v1847 = vld [vmem:[%s732 + $0x58] sm:$0xff]
        %v1848 = vld [vmem:[%s732 + $0x60] sm:$0xff]
        %v1849 = vld [vmem:[%s732 + $0x68] sm:$0xff]
        %v1850 = vld [vmem:[%s732 + $0x70] sm:$0xff]
        %v1851 = vld [vmem:[%s732 + $0x78] sm:$0xff]
        %v1852 = vld [vmem:[%s732 + $0x80] sm:$0xff]
        %v1853 = vld [vmem:[%s732 + $0x88] sm:$0xff]
        %v1854 = vld [vmem:[%s732 + $0x90] sm:$0xff]
        %v1855 = vld [vmem:[%s732 + $0x98] sm:$0xff]
        %v1856 = vld [vmem:[%s732 + $0xa0] sm:$0xff]
        %v1857 = vld [vmem:[%s732 + $0xa8] sm:$0xff]
        %v1858 = vld [vmem:[%s732 + $0xb0] sm:$0xff]
        %v1859 = vld [vmem:[%s732 + $0xb8] sm:$0xff]
        %v1860 = vld [vmem:[%s732 + $0xc0] sm:$0xff]
        %v1861 = vld [vmem:[%s732 + $0xc8] sm:$0xff]
        %v1862 = vld [vmem:[%s732 + $0xd0] sm:$0xff]
        %v1863 = vld [vmem:[%s732 + $0xd8] sm:$0xff]
        %v1864 = vld [vmem:[%s732 + $0xe0] sm:$0xff]
        %v1865 = vld [vmem:[%s732 + $0xe8] sm:$0xff]
        %v1866 = vld [vmem:[%s732 + $0xf0] sm:$0xff]
        %v1867 = vld [vmem:[%s732 + $0xf8] sm:$0xff]
        %v1869 = vunpack.c.l.b16 %v1835
        %v1870 = vunpack.c.h.b16 %v1835
        %v1871 = vpack.c.b16 %v1869, %v1869
        %v1872 = vpack.c.b16 %v1870, %v1870
        %v1907 = vunpack.c.l.b16 %v1836
        %v1908 = vunpack.c.h.b16 %v1836
        %v1909 = vunpack.c.l.b16 %v1837
        %v1910 = vunpack.c.h.b16 %v1837
        %v1911 = vunpack.c.l.b16 %v1838
        %v1912 = vunpack.c.h.b16 %v1838
        %v1913 = vunpack.c.l.b16 %v1839
        %v1914 = vunpack.c.h.b16 %v1839
        %v1915 = vunpack.c.l.b16 %v1840
        %v1916 = vunpack.c.h.b16 %v1840
        %v1917 = vunpack.c.l.b16 %v1841
        %v1918 = vunpack.c.h.b16 %v1841
        %v1919 = vunpack.c.l.b16 %v1842
        %v1920 = vunpack.c.h.b16 %v1842
        %v1921 = vunpack.c.l.b16 %v1843
        %v1922 = vunpack.c.h.b16 %v1843
        %v1923 = vunpack.c.l.b16 %v1844
        %v1924 = vunpack.c.h.b16 %v1844
        %v1925 = vunpack.c.l.b16 %v1845
        %v1926 = vunpack.c.h.b16 %v1845
        %v1927 = vunpack.c.l.b16 %v1846
        %v1928 = vunpack.c.h.b16 %v1846
        %v1929 = vunpack.c.l.b16 %v1847
        %v1930 = vunpack.c.h.b16 %v1847
        %v1931 = vunpack.c.l.b16 %v1848
        %v1932 = vunpack.c.h.b16 %v1848
        %v1933 = vunpack.c.l.b16 %v1849
        %v1934 = vunpack.c.h.b16 %v1849
        %v1935 = vunpack.c.l.b16 %v1850
        %v1936 = vunpack.c.h.b16 %v1850
        %v1937 = vunpack.c.l.b16 %v1851
        %v1938 = vunpack.c.h.b16 %v1851
        %v1939 = vunpack.c.l.b16 %v1852
        %v1940 = vunpack.c.h.b16 %v1852
        %v1941 = vunpack.c.l.b16 %v1853
        %v1942 = vunpack.c.h.b16 %v1853
        %v1943 = vunpack.c.l.b16 %v1854
        %v1944 = vunpack.c.h.b16 %v1854
        %v1945 = vunpack.c.l.b16 %v1855
        %v1946 = vunpack.c.h.b16 %v1855
        %v1947 = vunpack.c.l.b16 %v1856
        %v1948 = vunpack.c.h.b16 %v1856
        %v1949 = vunpack.c.l.b16 %v1857
        %v1950 = vunpack.c.h.b16 %v1857
        %v1951 = vunpack.c.l.b16 %v1858
        %v1952 = vunpack.c.h.b16 %v1858
        %v1953 = vunpack.c.l.b16 %v1859
        %v1954 = vunpack.c.h.b16 %v1859
        %v1955 = vunpack.c.l.b16 %v1860
        %v1956 = vunpack.c.h.b16 %v1860
        %v1957 = vunpack.c.l.b16 %v1861
        %v1958 = vunpack.c.h.b16 %v1861
        %v1959 = vunpack.c.l.b16 %v1862
        %v1960 = vunpack.c.h.b16 %v1862
        %v1961 = vunpack.c.l.b16 %v1863
        %v1962 = vunpack.c.h.b16 %v1863
        %v1963 = vunpack.c.l.b16 %v1864
        %v1964 = vunpack.c.h.b16 %v1864
        %v1965 = vunpack.c.l.b16 %v1865
        %v1966 = vunpack.c.h.b16 %v1865
        %v1967 = vunpack.c.l.b16 %v1866
        %v1968 = vunpack.c.h.b16 %v1866
        %v1969 = vunpack.c.l.b16 %v1867
        %v1970 = vunpack.c.h.b16 %v1867
        %v1971 = vpack.c.b16 %v1909, %v1907
        %v1972 = vpack.c.b16 %v1910, %v1908
        %v1973 = vpack.c.b16 %v1913, %v1911
        %v1974 = vpack.c.b16 %v1914, %v1912
        %v1975 = vpack.c.b16 %v1917, %v1915
        %v1976 = vpack.c.b16 %v1918, %v1916
        %v1977 = vpack.c.b16 %v1921, %v1919
        %v1978 = vpack.c.b16 %v1922, %v1920
        %v1979 = vpack.c.b16 %v1925, %v1923
        %v1980 = vpack.c.b16 %v1926, %v1924
        %v1981 = vpack.c.b16 %v1929, %v1927
        %v1982 = vpack.c.b16 %v1930, %v1928
        %v1983 = vpack.c.b16 %v1933, %v1931
        %v1984 = vpack.c.b16 %v1934, %v1932
        %v1985 = vpack.c.b16 %v1937, %v1935
        %v1986 = vpack.c.b16 %v1938, %v1936
        %v1987 = vpack.c.b16 %v1941, %v1939
        %v1988 = vpack.c.b16 %v1942, %v1940
        %v1989 = vpack.c.b16 %v1945, %v1943
        %v1990 = vpack.c.b16 %v1946, %v1944
        %v1991 = vpack.c.b16 %v1949, %v1947
        %v1992 = vpack.c.b16 %v1950, %v1948
        %v1993 = vpack.c.b16 %v1953, %v1951
        %v1994 = vpack.c.b16 %v1954, %v1952
        %v1995 = vpack.c.b16 %v1957, %v1955
        %v1996 = vpack.c.b16 %v1958, %v1956
        %v1997 = vpack.c.b16 %v1961, %v1959
        %v1998 = vpack.c.b16 %v1962, %v1960
        %v1999 = vpack.c.b16 %v1965, %v1963
        %v2000 = vpack.c.b16 %v1966, %v1964
        %v2001 = vpack.c.b16 %v1969, %v1967
        %v2002 = vpack.c.b16 %v1970, %v1968
        %2035 = vmatpush.bf16.msra.mxu0 %v1985
        %2036 = vmatpush.bf16.msra.mxu0 %v1983
        %2037 = vmatpush.bf16.msra.mxu0 %v1981
        %2038 = vmatpush.bf16.msra.mxu0 %v1979
        %2039 = vmatpush.bf16.msra.mxu0 %v1977
        %2040 = vmatpush.bf16.msra.mxu0 %v1975
        %2041 = vmatpush.bf16.msra.mxu0 %v1973
        %2042 = vmatpush.bf16.msra.mxu0 %v1971
        %2043 = vmatmul.bf16.gmra.mxu0 %v1871
        %v2044 = vpop.f32.mrf.mxu0
        %v2045 = vadd.f32 0.0, %v2044
        %v2046 = vpop.f32.mrf.mxu0
        %2047 = vdwg.mxu0
        %2048 = vmatpush.bf16.msra.mxu0 %v2001
        %2049 = vmatpush.bf16.msra.mxu0 %v1999
        %2050 = vmatpush.bf16.msra.mxu0 %v1997
        %2051 = vmatpush.bf16.msra.mxu0 %v1995
        %2052 = vmatpush.bf16.msra.mxu0 %v1993
        %2053 = vmatpush.bf16.msra.mxu0 %v1991
        %2054 = vmatpush.bf16.msra.mxu0 %v1989
        %2055 = vmatpush.bf16.msra.mxu0 %v1987
        %2056 = vmatmul.bf16.gmra.mxu0 %v1872
        %v2057 = vpop.f32.mrf.mxu0
        %v2058 = vadd.f32 %v2045, %v2057
        %v2059 = vpop.f32.mrf.mxu0
        %2060 = vdwg.mxu0
        %2061 = vmatpush.bf16.msra.mxu0 %v1986
        %2062 = vmatpush.bf16.msra.mxu0 %v1984
        %2063 = vmatpush.bf16.msra.mxu0 %v1982
        %2064 = vmatpush.bf16.msra.mxu0 %v1980
        %2065 = vmatpush.bf16.msra.mxu0 %v1978
        %2066 = vmatpush.bf16.msra.mxu0 %v1976
        %2067 = vmatpush.bf16.msra.mxu0 %v1974
        %2068 = vmatpush.bf16.msra.mxu0 %v1972
        %2069 = vmatmul.bf16.gmra.mxu0 %v1871
        %v2070 = vpop.f32.mrf.mxu0
        %v2071 = vadd.f32 0.0, %v2070
        %v2072 = vpop.f32.mrf.mxu0
        %2073 = vdwg.mxu0
        %2074 = vmatpush.bf16.msra.mxu0 %v2002
        %2075 = vmatpush.bf16.msra.mxu0 %v2000
        %2076 = vmatpush.bf16.msra.mxu0 %v1998
        %2077 = vmatpush.bf16.msra.mxu0 %v1996
        %2078 = vmatpush.bf16.msra.mxu0 %v1994
        %2079 = vmatpush.bf16.msra.mxu0 %v1992
        %2080 = vmatpush.bf16.msra.mxu0 %v1990
        %2081 = vmatpush.bf16.msra.mxu0 %v1988
        %2082 = vmatmul.bf16.gmra.mxu0 %v1872
        %v2083 = vpop.f32.mrf.mxu0
        %v2084 = vadd.f32 %v2071, %v2083
        %v2085 = vpop.f32.mrf.mxu0
        %2086 = vdwg.mxu0
        %v2087 = vadd.f32 %v901, %v2058
        %v2088 = vadd.f32 %v902, %v2084
        %v2089 = vld [vmem:[%s887] sm:$0x3]
        %v2091 = vperm.slane %v2089, 0
        %v2092 = vperm.slane %v2089, 1
        %v2095 = vadd.f32 %v2087, %v2091
        %v2096 = vadd.f32 %v2088, %v2092
        %v2097 = vld [vmem:[%s742] sm:$0x3]
        %v2098 = vld [vmem:[%s752] sm:$0x3]
        %v2099 = vadd.f32 %v2095, %v2096
        %2100 = vadd.xlane.f32.xlu0 %v2099
        %v2101 = vpop.xlane.xlu0 %2100
        %v2102 = vmul.f32 %v2101, %v914
        %v2103 = vsub.f32 %v2095, %v2102
        %v2104 = vsub.f32 %v2096, %v2102
        %v2105 = vmul.f32 %v2103, %v2103
        %v2106 = vmul.f32 %v2104, %v2104
        %v2107 = vadd.f32 %v2105, %v2106
        %2108 = vadd.xlane.f32.xlu0 %v2107
        %v2109 = vpop.xlane.xlu0 %2108
        %v2110 = vmul.f32 %v2109, %v914
        %v2111 = vadd.f32 %v2110, 1e-05
        %v2112 = vrsqrt.pop %v2111
        %v2113 = vmul.f32 %v2112, %v2111
        %v2114 = vmul.f32 %v2113, %v2112
        %v2115 = vmul.f32 0.5, %v2114
        %v2116 = vsub.f32 1.5, %v2115
        %v2117 = vmul.f32 %v2112, %v2116
        %vm2118 = vweird.f32 %v2111
        %vm2119 = vweird.f32 %v2112
        %vm2120 = vmor %vm2118, %vm2119
        %v2121 = vsel %vm2120, %v2112, %v2117
        %v2122 = vmul.f32 %v2103, %v2121
        %v2123 = vmul.f32 %v2104, %v2121
        %v2125 = vperm.slane %v2097, 0
        %v2126 = vperm.slane %v2097, 1
        %v2129 = vmul.f32 %v2122, %v2125
        %v2130 = vmul.f32 %v2123, %v2126
        %v2132 = vperm.slane %v2098, 0
        %v2133 = vperm.slane %v2098, 1
        %v2136 = vadd.f32 %v2129, %v2132
        %v2137 = vadd.f32 %v2130, %v2133
        %v2138 = vpack.c.bf16 %v2136, %v2136
        %v2139 = vpack.c.bf16 %v2137, %v2137
        %v2140 = vld [vmem:[%s762] sm:$0xff]
        %v2141 = vld [vmem:[%s762 + $0x8] sm:$0xff]
        %v2142 = vld [vmem:[%s762 + $0x10] sm:$0xff]
        %v2143 = vld [vmem:[%s762 + $0x18] sm:$0xff]
        %v2144 = vld [vmem:[%s762 + $0x20] sm:$0xff]
        %v2145 = vld [vmem:[%s762 + $0x28] sm:$0xff]
        %v2146 = vld [vmem:[%s762 + $0x30] sm:$0xff]
        %v2147 = vld [vmem:[%s762 + $0x38] sm:$0xff]
        %v2148 = vld [vmem:[%s762 + $0x40] sm:$0xff]
        %v2149 = vld [vmem:[%s762 + $0x48] sm:$0xff]
        %v2150 = vld [vmem:[%s762 + $0x50] sm:$0xff]
        %v2151 = vld [vmem:[%s762 + $0x58] sm:$0xff]
        %v2152 = vld [vmem:[%s762 + $0x60] sm:$0xff]
        %v2153 = vld [vmem:[%s762 + $0x68] sm:$0xff]
        %v2154 = vld [vmem:[%s762 + $0x70] sm:$0xff]
        %v2155 = vld [vmem:[%s762 + $0x78] sm:$0xff]
        %v2156 = vld [vmem:[%s762 + $0x80] sm:$0xff]
        %v2157 = vld [vmem:[%s762 + $0x88] sm:$0xff]
        %v2158 = vld [vmem:[%s762 + $0x90] sm:$0xff]
        %v2159 = vld [vmem:[%s762 + $0x98] sm:$0xff]
        %v2160 = vld [vmem:[%s762 + $0xa0] sm:$0xff]
        %v2161 = vld [vmem:[%s762 + $0xa8] sm:$0xff]
        %v2162 = vld [vmem:[%s762 + $0xb0] sm:$0xff]
        %v2163 = vld [vmem:[%s762 + $0xb8] sm:$0xff]
        %v2164 = vld [vmem:[%s762 + $0xc0] sm:$0xff]
        %v2165 = vld [vmem:[%s762 + $0xc8] sm:$0xff]
        %v2166 = vld [vmem:[%s762 + $0xd0] sm:$0xff]
        %v2167 = vld [vmem:[%s762 + $0xd8] sm:$0xff]
        %v2168 = vld [vmem:[%s762 + $0xe0] sm:$0xff]
        %v2169 = vld [vmem:[%s762 + $0xe8] sm:$0xff]
        %v2170 = vld [vmem:[%s762 + $0xf0] sm:$0xff]
        %v2171 = vld [vmem:[%s762 + $0xf8] sm:$0xff]
        %v2172 = vld [vmem:[%s762 + $0x100] sm:$0xff]
        %v2173 = vld [vmem:[%s762 + $0x108] sm:$0xff]
        %v2174 = vld [vmem:[%s762 + $0x110] sm:$0xff]
        %v2175 = vld [vmem:[%s762 + $0x118] sm:$0xff]
        %v2176 = vld [vmem:[%s762 + $0x120] sm:$0xff]
        %v2177 = vld [vmem:[%s762 + $0x128] sm:$0xff]
        %v2178 = vld [vmem:[%s762 + $0x130] sm:$0xff]
        %v2179 = vld [vmem:[%s762 + $0x138] sm:$0xff]
        %v2180 = vld [vmem:[%s762 + $0x140] sm:$0xff]
        %v2181 = vld [vmem:[%s762 + $0x148] sm:$0xff]
        %v2182 = vld [vmem:[%s762 + $0x150] sm:$0xff]
        %v2183 = vld [vmem:[%s762 + $0x158] sm:$0xff]
        %v2184 = vld [vmem:[%s762 + $0x160] sm:$0xff]
        %v2185 = vld [vmem:[%s762 + $0x168] sm:$0xff]
        %v2186 = vld [vmem:[%s762 + $0x170] sm:$0xff]
        %v2187 = vld [vmem:[%s762 + $0x178] sm:$0xff]
        %v2188 = vld [vmem:[%s762 + $0x180] sm:$0xff]
        %v2189 = vld [vmem:[%s762 + $0x188] sm:$0xff]
        %v2190 = vld [vmem:[%s762 + $0x190] sm:$0xff]
        %v2191 = vld [vmem:[%s762 + $0x198] sm:$0xff]
        %v2192 = vld [vmem:[%s762 + $0x1a0] sm:$0xff]
        %v2193 = vld [vmem:[%s762 + $0x1a8] sm:$0xff]
        %v2194 = vld [vmem:[%s762 + $0x1b0] sm:$0xff]
        %v2195 = vld [vmem:[%s762 + $0x1b8] sm:$0xff]
        %v2196 = vld [vmem:[%s762 + $0x1c0] sm:$0xff]
        %v2197 = vld [vmem:[%s762 + $0x1c8] sm:$0xff]
        %v2198 = vld [vmem:[%s762 + $0x1d0] sm:$0xff]
        %v2199 = vld [vmem:[%s762 + $0x1d8] sm:$0xff]
        %v2200 = vld [vmem:[%s762 + $0x1e0] sm:$0xff]
        %v2201 = vld [vmem:[%s762 + $0x1e8] sm:$0xff]
        %v2202 = vld [vmem:[%s762 + $0x1f0] sm:$0xff]
        %v2203 = vld [vmem:[%s762 + $0x1f8] sm:$0xff]
        %v2204 = vld [vmem:[%s762 + $0x200] sm:$0xff]
        %v2205 = vld [vmem:[%s762 + $0x208] sm:$0xff]
        %v2206 = vld [vmem:[%s762 + $0x210] sm:$0xff]
        %v2207 = vld [vmem:[%s762 + $0x218] sm:$0xff]
        %v2208 = vld [vmem:[%s762 + $0x220] sm:$0xff]
        %v2209 = vld [vmem:[%s762 + $0x228] sm:$0xff]
        %v2210 = vld [vmem:[%s762 + $0x230] sm:$0xff]
        %v2211 = vld [vmem:[%s762 + $0x238] sm:$0xff]
        %v2212 = vld [vmem:[%s762 + $0x240] sm:$0xff]
        %v2213 = vld [vmem:[%s762 + $0x248] sm:$0xff]
        %v2214 = vld [vmem:[%s762 + $0x250] sm:$0xff]
        %v2215 = vld [vmem:[%s762 + $0x258] sm:$0xff]
        %v2216 = vld [vmem:[%s762 + $0x260] sm:$0xff]
        %v2217 = vld [vmem:[%s762 + $0x268] sm:$0xff]
        %v2218 = vld [vmem:[%s762 + $0x270] sm:$0xff]
        %v2219 = vld [vmem:[%s762 + $0x278] sm:$0xff]
        %v2220 = vld [vmem:[%s762 + $0x280] sm:$0xff]
        %v2221 = vld [vmem:[%s762 + $0x288] sm:$0xff]
        %v2222 = vld [vmem:[%s762 + $0x290] sm:$0xff]
        %v2223 = vld [vmem:[%s762 + $0x298] sm:$0xff]
        %v2224 = vld [vmem:[%s762 + $0x2a0] sm:$0xff]
        %v2225 = vld [vmem:[%s762 + $0x2a8] sm:$0xff]
        %v2226 = vld [vmem:[%s762 + $0x2b0] sm:$0xff]
        %v2227 = vld [vmem:[%s762 + $0x2b8] sm:$0xff]
        %v2228 = vld [vmem:[%s762 + $0x2c0] sm:$0xff]
        %v2229 = vld [vmem:[%s762 + $0x2c8] sm:$0xff]
        %v2230 = vld [vmem:[%s762 + $0x2d0] sm:$0xff]
        %v2231 = vld [vmem:[%s762 + $0x2d8] sm:$0xff]
        %v2232 = vld [vmem:[%s762 + $0x2e0] sm:$0xff]
        %v2233 = vld [vmem:[%s762 + $0x2e8] sm:$0xff]
        %v2234 = vld [vmem:[%s762 + $0x2f0] sm:$0xff]
        %v2235 = vld [vmem:[%s762 + $0x2f8] sm:$0xff]
        %v2236 = vld [vmem:[%s762 + $0x300] sm:$0xff]
        %v2237 = vld [vmem:[%s762 + $0x308] sm:$0xff]
        %v2238 = vld [vmem:[%s762 + $0x310] sm:$0xff]
        %v2239 = vld [vmem:[%s762 + $0x318] sm:$0xff]
        %v2240 = vld [vmem:[%s762 + $0x320] sm:$0xff]
        %v2241 = vld [vmem:[%s762 + $0x328] sm:$0xff]
        %v2242 = vld [vmem:[%s762 + $0x330] sm:$0xff]
        %v2243 = vld [vmem:[%s762 + $0x338] sm:$0xff]
        %v2244 = vld [vmem:[%s762 + $0x340] sm:$0xff]
        %v2245 = vld [vmem:[%s762 + $0x348] sm:$0xff]
        %v2246 = vld [vmem:[%s762 + $0x350] sm:$0xff]
        %v2247 = vld [vmem:[%s762 + $0x358] sm:$0xff]
        %v2248 = vld [vmem:[%s762 + $0x360] sm:$0xff]
        %v2249 = vld [vmem:[%s762 + $0x368] sm:$0xff]
        %v2250 = vld [vmem:[%s762 + $0x370] sm:$0xff]
        %v2251 = vld [vmem:[%s762 + $0x378] sm:$0xff]
        %v2252 = vld [vmem:[%s762 + $0x380] sm:$0xff]
        %v2253 = vld [vmem:[%s762 + $0x388] sm:$0xff]
        %v2254 = vld [vmem:[%s762 + $0x390] sm:$0xff]
        %v2255 = vld [vmem:[%s762 + $0x398] sm:$0xff]
        %v2256 = vld [vmem:[%s762 + $0x3a0] sm:$0xff]
        %v2257 = vld [vmem:[%s762 + $0x3a8] sm:$0xff]
        %v2258 = vld [vmem:[%s762 + $0x3b0] sm:$0xff]
        %v2259 = vld [vmem:[%s762 + $0x3b8] sm:$0xff]
        %v2260 = vld [vmem:[%s762 + $0x3c0] sm:$0xff]
        %v2261 = vld [vmem:[%s762 + $0x3c8] sm:$0xff]
        %v2262 = vld [vmem:[%s762 + $0x3d0] sm:$0xff]
        %v2263 = vld [vmem:[%s762 + $0x3d8] sm:$0xff]
        %v2264 = vld [vmem:[%s762 + $0x3e0] sm:$0xff]
        %v2265 = vld [vmem:[%s762 + $0x3e8] sm:$0xff]
        %v2266 = vld [vmem:[%s762 + $0x3f0] sm:$0xff]
        %v2267 = vld [vmem:[%s762 + $0x3f8] sm:$0xff]
        %v2268 = vld [vmem:[%s772] sm:$0xff]
        %v2270 = vperm.slane %v2268, 0
        %v2271 = vperm.slane %v2268, 1
        %v2272 = vperm.slane %v2268, 2
        %v2273 = vperm.slane %v2268, 3
        %v2274 = vperm.slane %v2268, 4
        %v2275 = vperm.slane %v2268, 5
        %v2276 = vperm.slane %v2268, 6
        %v2277 = vperm.slane %v2268, 7
        %v2414 = vunpack.c.l.b16 %v2140
        %v2415 = vunpack.c.h.b16 %v2140
        %v2416 = vunpack.c.l.b16 %v2141
        %v2417 = vunpack.c.h.b16 %v2141
        %v2418 = vunpack.c.l.b16 %v2142
        %v2419 = vunpack.c.h.b16 %v2142
        %v2420 = vunpack.c.l.b16 %v2143
        %v2421 = vunpack.c.h.b16 %v2143
        %v2422 = vunpack.c.l.b16 %v2144
        %v2423 = vunpack.c.h.b16 %v2144
        %v2424 = vunpack.c.l.b16 %v2145
        %v2425 = vunpack.c.h.b16 %v2145
        %v2426 = vunpack.c.l.b16 %v2146
        %v2427 = vunpack.c.h.b16 %v2146
        %v2428 = vunpack.c.l.b16 %v2147
        %v2429 = vunpack.c.h.b16 %v2147
        %v2430 = vunpack.c.l.b16 %v2148
        %v2431 = vunpack.c.h.b16 %v2148
        %v2432 = vunpack.c.l.b16 %v2149
        %v2433 = vunpack.c.h.b16 %v2149
        %v2434 = vunpack.c.l.b16 %v2150
        %v2435 = vunpack.c.h.b16 %v2150
        %v2436 = vunpack.c.l.b16 %v2151
        %v2437 = vunpack.c.h.b16 %v2151
        %v2438 = vunpack.c.l.b16 %v2152
        %v2439 = vunpack.c.h.b16 %v2152
        %v2440 = vunpack.c.l.b16 %v2153
        %v2441 = vunpack.c.h.b16 %v2153
        %v2442 = vunpack.c.l.b16 %v2154
        %v2443 = vunpack.c.h.b16 %v2154
        %v2444 = vunpack.c.l.b16 %v2155
        %v2445 = vunpack.c.h.b16 %v2155
        %v2446 = vunpack.c.l.b16 %v2156
        %v2447 = vunpack.c.h.b16 %v2156
        %v2448 = vunpack.c.l.b16 %v2157
        %v2449 = vunpack.c.h.b16 %v2157
        %v2450 = vunpack.c.l.b16 %v2158
        %v2451 = vunpack.c.h.b16 %v2158
        %v2452 = vunpack.c.l.b16 %v2159
        %v2453 = vunpack.c.h.b16 %v2159
        %v2454 = vunpack.c.l.b16 %v2160
        %v2455 = vunpack.c.h.b16 %v2160
        %v2456 = vunpack.c.l.b16 %v2161
        %v2457 = vunpack.c.h.b16 %v2161
        %v2458 = vunpack.c.l.b16 %v2162
        %v2459 = vunpack.c.h.b16 %v2162
        %v2460 = vunpack.c.l.b16 %v2163
        %v2461 = vunpack.c.h.b16 %v2163
        %v2462 = vunpack.c.l.b16 %v2164
        %v2463 = vunpack.c.h.b16 %v2164
        %v2464 = vunpack.c.l.b16 %v2165
        %v2465 = vunpack.c.h.b16 %v2165
        %v2466 = vunpack.c.l.b16 %v2166
        %v2467 = vunpack.c.h.b16 %v2166
        %v2468 = vunpack.c.l.b16 %v2167
        %v2469 = vunpack.c.h.b16 %v2167
        %v2470 = vunpack.c.l.b16 %v2168
        %v2471 = vunpack.c.h.b16 %v2168
        %v2472 = vunpack.c.l.b16 %v2169
        %v2473 = vunpack.c.h.b16 %v2169
        %v2474 = vunpack.c.l.b16 %v2170
        %v2475 = vunpack.c.h.b16 %v2170
        %v2476 = vunpack.c.l.b16 %v2171
        %v2477 = vunpack.c.h.b16 %v2171
        %v2478 = vunpack.c.l.b16 %v2172
        %v2479 = vunpack.c.h.b16 %v2172
        %v2480 = vunpack.c.l.b16 %v2173
        %v2481 = vunpack.c.h.b16 %v2173
        %v2482 = vunpack.c.l.b16 %v2174
        %v2483 = vunpack.c.h.b16 %v2174
        %v2484 = vunpack.c.l.b16 %v2175
        %v2485 = vunpack.c.h.b16 %v2175
        %v2486 = vunpack.c.l.b16 %v2176
        %v2487 = vunpack.c.h.b16 %v2176
        %v2488 = vunpack.c.l.b16 %v2177
        %v2489 = vunpack.c.h.b16 %v2177
        %v2490 = vunpack.c.l.b16 %v2178
        %v2491 = vunpack.c.h.b16 %v2178
        %v2492 = vunpack.c.l.b16 %v2179
        %v2493 = vunpack.c.h.b16 %v2179
        %v2494 = vunpack.c.l.b16 %v2180
        %v2495 = vunpack.c.h.b16 %v2180
        %v2496 = vunpack.c.l.b16 %v2181
        %v2497 = vunpack.c.h.b16 %v2181
        %v2498 = vunpack.c.l.b16 %v2182
        %v2499 = vunpack.c.h.b16 %v2182
        %v2500 = vunpack.c.l.b16 %v2183
        %v2501 = vunpack.c.h.b16 %v2183
        %v2502 = vunpack.c.l.b16 %v2184
        %v2503 = vunpack.c.h.b16 %v2184
        %v2504 = vunpack.c.l.b16 %v2185
        %v2505 = vunpack.c.h.b16 %v2185
        %v2506 = vunpack.c.l.b16 %v2186
        %v2507 = vunpack.c.h.b16 %v2186
        %v2508 = vunpack.c.l.b16 %v2187
        %v2509 = vunpack.c.h.b16 %v2187
        %v2510 = vunpack.c.l.b16 %v2188
        %v2511 = vunpack.c.h.b16 %v2188
        %v2512 = vunpack.c.l.b16 %v2189
        %v2513 = vunpack.c.h.b16 %v2189
        %v2514 = vunpack.c.l.b16 %v2190
        %v2515 = vunpack.c.h.b16 %v2190
        %v2516 = vunpack.c.l.b16 %v2191
        %v2517 = vunpack.c.h.b16 %v2191
        %v2518 = vunpack.c.l.b16 %v2192
        %v2519 = vunpack.c.h.b16 %v2192
        %v2520 = vunpack.c.l.b16 %v2193
        %v2521 = vunpack.c.h.b16 %v2193
        %v2522 = vunpack.c.l.b16 %v2194
        %v2523 = vunpack.c.h.b16 %v2194
        %v2524 = vunpack.c.l.b16 %v2195
        %v2525 = vunpack.c.h.b16 %v2195
        %v2526 = vunpack.c.l.b16 %v2196
        %v2527 = vunpack.c.h.b16 %v2196
        %v2528 = vunpack.c.l.b16 %v2197
        %v2529 = vunpack.c.h.b16 %v2197
        %v2530 = vunpack.c.l.b16 %v2198
        %v2531 = vunpack.c.h.b16 %v2198
        %v2532 = vunpack.c.l.b16 %v2199
        %v2533 = vunpack.c.h.b16 %v2199
        %v2534 = vunpack.c.l.b16 %v2200
        %v2535 = vunpack.c.h.b16 %v2200
        %v2536 = vunpack.c.l.b16 %v2201
        %v2537 = vunpack.c.h.b16 %v2201
        %v2538 = vunpack.c.l.b16 %v2202
        %v2539 = vunpack.c.h.b16 %v2202
        %v2540 = vunpack.c.l.b16 %v2203
        %v2541 = vunpack.c.h.b16 %v2203
        %v2542 = vunpack.c.l.b16 %v2204
        %v2543 = vunpack.c.h.b16 %v2204
        %v2544 = vunpack.c.l.b16 %v2205
        %v2545 = vunpack.c.h.b16 %v2205
        %v2546 = vunpack.c.l.b16 %v2206
        %v2547 = vunpack.c.h.b16 %v2206
        %v2548 = vunpack.c.l.b16 %v2207
        %v2549 = vunpack.c.h.b16 %v2207
        %v2550 = vunpack.c.l.b16 %v2208
        %v2551 = vunpack.c.h.b16 %v2208
        %v2552 = vunpack.c.l.b16 %v2209
        %v2553 = vunpack.c.h.b16 %v2209
        %v2554 = vunpack.c.l.b16 %v2210
        %v2555 = vunpack.c.h.b16 %v2210
        %v2556 = vunpack.c.l.b16 %v2211
        %v2557 = vunpack.c.h.b16 %v2211
        %v2558 = vunpack.c.l.b16 %v2212
        %v2559 = vunpack.c.h.b16 %v2212
        %v2560 = vunpack.c.l.b16 %v2213
        %v2561 = vunpack.c.h.b16 %v2213
        %v2562 = vunpack.c.l.b16 %v2214
        %v2563 = vunpack.c.h.b16 %v2214
        %v2564 = vunpack.c.l.b16 %v2215
        %v2565 = vunpack.c.h.b16 %v2215
        %v2566 = vunpack.c.l.b16 %v2216
        %v2567 = vunpack.c.h.b16 %v2216
        %v2568 = vunpack.c.l.b16 %v2217
        %v2569 = vunpack.c.h.b16 %v2217
        %v2570 = vunpack.c.l.b16 %v2218
        %v2571 = vunpack.c.h.b16 %v2218
        %v2572 = vunpack.c.l.b16 %v2219
        %v2573 = vunpack.c.h.b16 %v2219
        %v2574 = vunpack.c.l.b16 %v2220
        %v2575 = vunpack.c.h.b16 %v2220
        %v2576 = vunpack.c.l.b16 %v2221
        %v2577 = vunpack.c.h.b16 %v2221
        %v2578 = vunpack.c.l.b16 %v2222
        %v2579 = vunpack.c.h.b16 %v2222
        %v2580 = vunpack.c.l.b16 %v2223
        %v2581 = vunpack.c.h.b16 %v2223
        %v2582 = vunpack.c.l.b16 %v2224
        %v2583 = vunpack.c.h.b16 %v2224
        %v2584 = vunpack.c.l.b16 %v2225
        %v2585 = vunpack.c.h.b16 %v2225
        %v2586 = vunpack.c.l.b16 %v2226
        %v2587 = vunpack.c.h.b16 %v2226
        %v2588 = vunpack.c.l.b16 %v2227
        %v2589 = vunpack.c.h.b16 %v2227
        %v2590 = vunpack.c.l.b16 %v2228
        %v2591 = vunpack.c.h.b16 %v2228
        %v2592 = vunpack.c.l.b16 %v2229
        %v2593 = vunpack.c.h.b16 %v2229
        %v2594 = vunpack.c.l.b16 %v2230
        %v2595 = vunpack.c.h.b16 %v2230
        %v2596 = vunpack.c.l.b16 %v2231
        %v2597 = vunpack.c.h.b16 %v2231
        %v2598 = vunpack.c.l.b16 %v2232
        %v2599 = vunpack.c.h.b16 %v2232
        %v2600 = vunpack.c.l.b16 %v2233
        %v2601 = vunpack.c.h.b16 %v2233
        %v2602 = vunpack.c.l.b16 %v2234
        %v2603 = vunpack.c.h.b16 %v2234
        %v2604 = vunpack.c.l.b16 %v2235
        %v2605 = vunpack.c.h.b16 %v2235
        %v2606 = vunpack.c.l.b16 %v2236
        %v2607 = vunpack.c.h.b16 %v2236
        %v2608 = vunpack.c.l.b16 %v2237
        %v2609 = vunpack.c.h.b16 %v2237
        %v2610 = vunpack.c.l.b16 %v2238
        %v2611 = vunpack.c.h.b16 %v2238
        %v2612 = vunpack.c.l.b16 %v2239
        %v2613 = vunpack.c.h.b16 %v2239
        %v2614 = vunpack.c.l.b16 %v2240
        %v2615 = vunpack.c.h.b16 %v2240
        %v2616 = vunpack.c.l.b16 %v2241
        %v2617 = vunpack.c.h.b16 %v2241
        %v2618 = vunpack.c.l.b16 %v2242
        %v2619 = vunpack.c.h.b16 %v2242
        %v2620 = vunpack.c.l.b16 %v2243
        %v2621 = vunpack.c.h.b16 %v2243
        %v2622 = vunpack.c.l.b16 %v2244
        %v2623 = vunpack.c.h.b16 %v2244
        %v2624 = vunpack.c.l.b16 %v2245
        %v2625 = vunpack.c.h.b16 %v2245
        %v2626 = vunpack.c.l.b16 %v2246
        %v2627 = vunpack.c.h.b16 %v2246
        %v2628 = vunpack.c.l.b16 %v2247
        %v2629 = vunpack.c.h.b16 %v2247
        %v2630 = vunpack.c.l.b16 %v2248
        %v2631 = vunpack.c.h.b16 %v2248
        %v2632 = vunpack.c.l.b16 %v2249
        %v2633 = vunpack.c.h.b16 %v2249
        %v2634 = vunpack.c.l.b16 %v2250
        %v2635 = vunpack.c.h.b16 %v2250
        %v2636 = vunpack.c.l.b16 %v2251
        %v2637 = vunpack.c.h.b16 %v2251
        %v2638 = vunpack.c.l.b16 %v2252
        %v2639 = vunpack.c.h.b16 %v2252
        %v2640 = vunpack.c.l.b16 %v2253
        %v2641 = vunpack.c.h.b16 %v2253
        %v2642 = vunpack.c.l.b16 %v2254
        %v2643 = vunpack.c.h.b16 %v2254
        %v2644 = vunpack.c.l.b16 %v2255
        %v2645 = vunpack.c.h.b16 %v2255
        %v2646 = vunpack.c.l.b16 %v2256
        %v2647 = vunpack.c.h.b16 %v2256
        %v2648 = vunpack.c.l.b16 %v2257
        %v2649 = vunpack.c.h.b16 %v2257
        %v2650 = vunpack.c.l.b16 %v2258
        %v2651 = vunpack.c.h.b16 %v2258
        %v2652 = vunpack.c.l.b16 %v2259
        %v2653 = vunpack.c.h.b16 %v2259
        %v2654 = vunpack.c.l.b16 %v2260
        %v2655 = vunpack.c.h.b16 %v2260
        %v2656 = vunpack.c.l.b16 %v2261
        %v2657 = vunpack.c.h.b16 %v2261
        %v2658 = vunpack.c.l.b16 %v2262
        %v2659 = vunpack.c.h.b16 %v2262
        %v2660 = vunpack.c.l.b16 %v2263
        %v2661 = vunpack.c.h.b16 %v2263
        %v2662 = vunpack.c.l.b16 %v2264
        %v2663 = vunpack.c.h.b16 %v2264
        %v2664 = vunpack.c.l.b16 %v2265
        %v2665 = vunpack.c.h.b16 %v2265
        %v2666 = vunpack.c.l.b16 %v2266
        %v2667 = vunpack.c.h.b16 %v2266
        %v2668 = vunpack.c.l.b16 %v2267
        %v2669 = vunpack.c.h.b16 %v2267
        %v2670 = vpack.c.b16 %v2422, %v2414
        %v2671 = vpack.c.b16 %v2423, %v2415
        %v2672 = vpack.c.b16 %v2424, %v2416
        %v2673 = vpack.c.b16 %v2425, %v2417
        %v2674 = vpack.c.b16 %v2426, %v2418
        %v2675 = vpack.c.b16 %v2427, %v2419
        %v2676 = vpack.c.b16 %v2428, %v2420
        %v2677 = vpack.c.b16 %v2429, %v2421
        %v2678 = vpack.c.b16 %v2438, %v2430
        %v2679 = vpack.c.b16 %v2439, %v2431
        %v2680 = vpack.c.b16 %v2440, %v2432
        %v2681 = vpack.c.b16 %v2441, %v2433
        %v2682 = vpack.c.b16 %v2442, %v2434
        %v2683 = vpack.c.b16 %v2443, %v2435
        %v2684 = vpack.c.b16 %v2444, %v2436
        %v2685 = vpack.c.b16 %v2445, %v2437
        %v2686 = vpack.c.b16 %v2454, %v2446
        %v2687 = vpack.c.b16 %v2455, %v2447
        %v2688 = vpack.c.b16 %v2456, %v2448
        %v2689 = vpack.c.b16 %v2457, %v2449
        %v2690 = vpack.c.b16 %v2458, %v2450
        %v2691 = vpack.c.b16 %v2459, %v2451
        %v2692 = vpack.c.b16 %v2460, %v2452
        %v2693 = vpack.c.b16 %v2461, %v2453
        %v2694 = vpack.c.b16 %v2470, %v2462
        %v2695 = vpack.c.b16 %v2471, %v2463
        %v2696 = vpack.c.b16 %v2472, %v2464
        %v2697 = vpack.c.b16 %v2473, %v2465
        %v2698 = vpack.c.b16 %v2474, %v2466
        %v2699 = vpack.c.b16 %v2475, %v2467
        %v2700 = vpack.c.b16 %v2476, %v2468
        %v2701 = vpack.c.b16 %v2477, %v2469
        %v2702 = vpack.c.b16 %v2486, %v2478
        %v2703 = vpack.c.b16 %v2487, %v2479
        %v2704 = vpack.c.b16 %v2488, %v2480
        %v2705 = vpack.c.b16 %v2489, %v2481
        %v2706 = vpack.c.b16 %v2490, %v2482
        %v2707 = vpack.c.b16 %v2491, %v2483
        %v2708 = vpack.c.b16 %v2492, %v2484
        %v2709 = vpack.c.b16 %v2493, %v2485
        %v2710 = vpack.c.b16 %v2502, %v2494
        %v2711 = vpack.c.b16 %v2503, %v2495
        %v2712 = vpack.c.b16 %v2504, %v2496
        %v2713 = vpack.c.b16 %v2505, %v2497
        %v2714 = vpack.c.b16 %v2506, %v2498
        %v2715 = vpack.c.b16 %v2507, %v2499
        %v2716 = vpack.c.b16 %v2508, %v2500
        %v2717 = vpack.c.b16 %v2509, %v2501
        %v2718 = vpack.c.b16 %v2518, %v2510
        %v2719 = vpack.c.b16 %v2519, %v2511
        %v2720 = vpack.c.b16 %v2520, %v2512
        %v2721 = vpack.c.b16 %v2521, %v2513
        %v2722 = vpack.c.b16 %v2522, %v2514
        %v2723 = vpack.c.b16 %v2523, %v2515
        %v2724 = vpack.c.b16 %v2524, %v2516
        %v2725 = vpack.c.b16 %v2525, %v2517
        %v2726 = vpack.c.b16 %v2534, %v2526
        %v2727 = vpack.c.b16 %v2535, %v2527
        %v2728 = vpack.c.b16 %v2536, %v2528
        %v2729 = vpack.c.b16 %v2537, %v2529
        %v2730 = vpack.c.b16 %v2538, %v2530
        %v2731 = vpack.c.b16 %v2539, %v2531
        %v2732 = vpack.c.b16 %v2540, %v2532
        %v2733 = vpack.c.b16 %v2541, %v2533
        %v2734 = vpack.c.b16 %v2550, %v2542
        %v2735 = vpack.c.b16 %v2551, %v2543
        %v2736 = vpack.c.b16 %v2552, %v2544
        %v2737 = vpack.c.b16 %v2553, %v2545
        %v2738 = vpack.c.b16 %v2554, %v2546
        %v2739 = vpack.c.b16 %v2555, %v2547
        %v2740 = vpack.c.b16 %v2556, %v2548
        %v2741 = vpack.c.b16 %v2557, %v2549
        %v2742 = vpack.c.b16 %v2566, %v2558
        %v2743 = vpack.c.b16 %v2567, %v2559
        %v2744 = vpack.c.b16 %v2568, %v2560
        %v2745 = vpack.c.b16 %v2569, %v2561
        %v2746 = vpack.c.b16 %v2570, %v2562
        %v2747 = vpack.c.b16 %v2571, %v2563
        %v2748 = vpack.c.b16 %v2572, %v2564
        %v2749 = vpack.c.b16 %v2573, %v2565
        %v2750 = vpack.c.b16 %v2582, %v2574
        %v2751 = vpack.c.b16 %v2583, %v2575
        %v2752 = vpack.c.b16 %v2584, %v2576
        %v2753 = vpack.c.b16 %v2585, %v2577
        %v2754 = vpack.c.b16 %v2586, %v2578
        %v2755 = vpack.c.b16 %v2587, %v2579
        %v2756 = vpack.c.b16 %v2588, %v2580
        %v2757 = vpack.c.b16 %v2589, %v2581
        %v2758 = vpack.c.b16 %v2598, %v2590
        %v2759 = vpack.c.b16 %v2599, %v2591
        %v2760 = vpack.c.b16 %v2600, %v2592
        %v2761 = vpack.c.b16 %v2601, %v2593
        %v2762 = vpack.c.b16 %v2602, %v2594
        %v2763 = vpack.c.b16 %v2603, %v2595
        %v2764 = vpack.c.b16 %v2604, %v2596
        %v2765 = vpack.c.b16 %v2605, %v2597
        %v2766 = vpack.c.b16 %v2614, %v2606
        %v2767 = vpack.c.b16 %v2615, %v2607
        %v2768 = vpack.c.b16 %v2616, %v2608
        %v2769 = vpack.c.b16 %v2617, %v2609
        %v2770 = vpack.c.b16 %v2618, %v2610
        %v2771 = vpack.c.b16 %v2619, %v2611
        %v2772 = vpack.c.b16 %v2620, %v2612
        %v2773 = vpack.c.b16 %v2621, %v2613
        %v2774 = vpack.c.b16 %v2630, %v2622
        %v2775 = vpack.c.b16 %v2631, %v2623
        %v2776 = vpack.c.b16 %v2632, %v2624
        %v2777 = vpack.c.b16 %v2633, %v2625
        %v2778 = vpack.c.b16 %v2634, %v2626
        %v2779 = vpack.c.b16 %v2635, %v2627
        %v2780 = vpack.c.b16 %v2636, %v2628
        %v2781 = vpack.c.b16 %v2637, %v2629
        %v2782 = vpack.c.b16 %v2646, %v2638
        %v2783 = vpack.c.b16 %v2647, %v2639
        %v2784 = vpack.c.b16 %v2648, %v2640
        %v2785 = vpack.c.b16 %v2649, %v2641
        %v2786 = vpack.c.b16 %v2650, %v2642
        %v2787 = vpack.c.b16 %v2651, %v2643
        %v2788 = vpack.c.b16 %v2652, %v2644
        %v2789 = vpack.c.b16 %v2653, %v2645
        %v2790 = vpack.c.b16 %v2662, %v2654
        %v2791 = vpack.c.b16 %v2663, %v2655
        %v2792 = vpack.c.b16 %v2664, %v2656
        %v2793 = vpack.c.b16 %v2665, %v2657
        %v2794 = vpack.c.b16 %v2666, %v2658
        %v2795 = vpack.c.b16 %v2667, %v2659
        %v2796 = vpack.c.b16 %v2668, %v2660
        %v2797 = vpack.c.b16 %v2669, %v2661
        %2926 = vmatpush.bf16.msra.mxu0 %v2726
        %2927 = vmatpush.bf16.msra.mxu0 %v2718
        %2928 = vmatpush.bf16.msra.mxu0 %v2710
        %2929 = vmatpush.bf16.msra.mxu0 %v2702
        %2930 = vmatpush.bf16.msra.mxu0 %v2694
        %2931 = vmatpush.bf16.msra.mxu0 %v2686
        %2932 = vmatpush.bf16.msra.mxu0 %v2678
        %2933 = vmatpush.bf16.msra.mxu0 %v2670
        %2934 = vmatmul.bf16.gmra.mxu0 %v2138
        %v2935 = vpop.f32.mrf.mxu0
        %v2936 = vadd.f32 %v2270, %v2935
        %v2937 = vpop.f32.mrf.mxu0
        %2938 = vdwg.mxu0
        %2939 = vmatpush.bf16.msra.mxu0 %v2790
        %2940 = vmatpush.bf16.msra.mxu0 %v2782
        %2941 = vmatpush.bf16.msra.mxu0 %v2774
        %2942 = vmatpush.bf16.msra.mxu0 %v2766
        %2943 = vmatpush.bf16.msra.mxu0 %v2758
        %2944 = vmatpush.bf16.msra.mxu0 %v2750
        %2945 = vmatpush.bf16.msra.mxu0 %v2742
        %2946 = vmatpush.bf16.msra.mxu0 %v2734
        %2947 = vmatmul.bf16.gmra.mxu0 %v2139
        %v2948 = vpop.f32.mrf.mxu0
        %v2949 = vadd.f32 %v2936, %v2948
        %v2950 = vpop.f32.mrf.mxu0
        %2951 = vdwg.mxu0
        %2952 = vmatpush.bf16.msra.mxu0 %v2727
        %2953 = vmatpush.bf16.msra.mxu0 %v2719
        %2954 = vmatpush.bf16.msra.mxu0 %v2711
        %2955 = vmatpush.bf16.msra.mxu0 %v2703
        %2956 = vmatpush.bf16.msra.mxu0 %v2695
        %2957 = vmatpush.bf16.msra.mxu0 %v2687
        %2958 = vmatpush.bf16.msra.mxu0 %v2679
        %2959 = vmatpush.bf16.msra.mxu0 %v2671
        %2960 = vmatmul.bf16.gmra.mxu0 %v2138
        %v2961 = vpop.f32.mrf.mxu0
        %v2962 = vadd.f32 %v2271, %v2961
        %v2963 = vpop.f32.mrf.mxu0
        %2964 = vdwg.mxu0
        %2965 = vmatpush.bf16.msra.mxu0 %v2791
        %2966 = vmatpush.bf16.msra.mxu0 %v2783
        %2967 = vmatpush.bf16.msra.mxu0 %v2775
        %2968 = vmatpush.bf16.msra.mxu0 %v2767
        %2969 = vmatpush.bf16.msra.mxu0 %v2759
        %2970 = vmatpush.bf16.msra.mxu0 %v2751
        %2971 = vmatpush.bf16.msra.mxu0 %v2743
        %2972 = vmatpush.bf16.msra.mxu0 %v2735
        %2973 = vmatmul.bf16.gmra.mxu0 %v2139
        %v2974 = vpop.f32.mrf.mxu0
        %v2975 = vadd.f32 %v2962, %v2974
        %v2976 = vpop.f32.mrf.mxu0
        %2977 = vdwg.mxu0
        %2978 = vmatpush.bf16.msra.mxu0 %v2728
        %2979 = vmatpush.bf16.msra.mxu0 %v2720
        %2980 = vmatpush.bf16.msra.mxu0 %v2712
        %2981 = vmatpush.bf16.msra.mxu0 %v2704
        %2982 = vmatpush.bf16.msra.mxu0 %v2696
        %2983 = vmatpush.bf16.msra.mxu0 %v2688
        %2984 = vmatpush.bf16.msra.mxu0 %v2680
        %2985 = vmatpush.bf16.msra.mxu0 %v2672
        %2986 = vmatmul.bf16.gmra.mxu0 %v2138
        %v2987 = vpop.f32.mrf.mxu0
        %v2988 = vadd.f32 %v2272, %v2987
        %v2989 = vpop.f32.mrf.mxu0
        %2990 = vdwg.mxu0
        %2991 = vmatpush.bf16.msra.mxu0 %v2792
        %2992 = vmatpush.bf16.msra.mxu0 %v2784
        %2993 = vmatpush.bf16.msra.mxu0 %v2776
        %2994 = vmatpush.bf16.msra.mxu0 %v2768
        %2995 = vmatpush.bf16.msra.mxu0 %v2760
        %2996 = vmatpush.bf16.msra.mxu0 %v2752
        %2997 = vmatpush.bf16.msra.mxu0 %v2744
        %2998 = vmatpush.bf16.msra.mxu0 %v2736
        %2999 = vmatmul.bf16.gmra.mxu0 %v2139
        %v3000 = vpop.f32.mrf.mxu0
        %v3001 = vadd.f32 %v2988, %v3000
        %v3002 = vpop.f32.mrf.mxu0
        %3003 = vdwg.mxu0
        %3004 = vmatpush.bf16.msra.mxu0 %v2729
        %3005 = vmatpush.bf16.msra.mxu0 %v2721
        %3006 = vmatpush.bf16.msra.mxu0 %v2713
        %3007 = vmatpush.bf16.msra.mxu0 %v2705
        %3008 = vmatpush.bf16.msra.mxu0 %v2697
        %3009 = vmatpush.bf16.msra.mxu0 %v2689
        %3010 = vmatpush.bf16.msra.mxu0 %v2681
        %3011 = vmatpush.bf16.msra.mxu0 %v2673
        %3012 = vmatmul.bf16.gmra.mxu0 %v2138
        %v3013 = vpop.f32.mrf.mxu0
        %v3014 = vadd.f32 %v2273, %v3013
        %v3015 = vpop.f32.mrf.mxu0
        %3016 = vdwg.mxu0
        %3017 = vmatpush.bf16.msra.mxu0 %v2793
        %3018 = vmatpush.bf16.msra.mxu0 %v2785
        %3019 = vmatpush.bf16.msra.mxu0 %v2777
        %3020 = vmatpush.bf16.msra.mxu0 %v2769
        %3021 = vmatpush.bf16.msra.mxu0 %v2761
        %3022 = vmatpush.bf16.msra.mxu0 %v2753
        %3023 = vmatpush.bf16.msra.mxu0 %v2745
        %3024 = vmatpush.bf16.msra.mxu0 %v2737
        %3025 = vmatmul.bf16.gmra.mxu0 %v2139
        %v3026 = vpop.f32.mrf.mxu0
        %v3027 = vadd.f32 %v3014, %v3026
        %v3028 = vpop.f32.mrf.mxu0
        %3029 = vdwg.mxu0
        %3030 = vmatpush.bf16.msra.mxu0 %v2730
        %3031 = vmatpush.bf16.msra.mxu0 %v2722
        %3032 = vmatpush.bf16.msra.mxu0 %v2714
        %3033 = vmatpush.bf16.msra.mxu0 %v2706
        %3034 = vmatpush.bf16.msra.mxu0 %v2698
        %3035 = vmatpush.bf16.msra.mxu0 %v2690
        %3036 = vmatpush.bf16.msra.mxu0 %v2682
        %3037 = vmatpush.bf16.msra.mxu0 %v2674
        %3038 = vmatmul.bf16.gmra.mxu0 %v2138
        %v3039 = vpop.f32.mrf.mxu0
        %v3040 = vadd.f32 %v2274, %v3039
        %v3041 = vpop.f32.mrf.mxu0
        %3042 = vdwg.mxu0
        %3043 = vmatpush.bf16.msra.mxu0 %v2794
        %3044 = vmatpush.bf16.msra.mxu0 %v2786
        %3045 = vmatpush.bf16.msra.mxu0 %v2778
        %3046 = vmatpush.bf16.msra.mxu0 %v2770
        %3047 = vmatpush.bf16.msra.mxu0 %v2762
        %3048 = vmatpush.bf16.msra.mxu0 %v2754
        %3049 = vmatpush.bf16.msra.mxu0 %v2746
        %3050 = vmatpush.bf16.msra.mxu0 %v2738
        %3051 = vmatmul.bf16.gmra.mxu0 %v2139
        %v3052 = vpop.f32.mrf.mxu0
        %v3053 = vadd.f32 %v3040, %v3052
        %v3054 = vpop.f32.mrf.mxu0
        %3055 = vdwg.mxu0
        %3056 = vmatpush.bf16.msra.mxu0 %v2731
        %3057 = vmatpush.bf16.msra.mxu0 %v2723
        %3058 = vmatpush.bf16.msra.mxu0 %v2715
        %3059 = vmatpush.bf16.msra.mxu0 %v2707
        %3060 = vmatpush.bf16.msra.mxu0 %v2699
        %3061 = vmatpush.bf16.msra.mxu0 %v2691
        %3062 = vmatpush.bf16.msra.mxu0 %v2683
        %3063 = vmatpush.bf16.msra.mxu0 %v2675
        %3064 = vmatmul.bf16.gmra.mxu0 %v2138
        %v3065 = vpop.f32.mrf.mxu0
        %v3066 = vadd.f32 %v2275, %v3065
        %v3067 = vpop.f32.mrf.mxu0
        %3068 = vdwg.mxu0
        %3069 = vmatpush.bf16.msra.mxu0 %v2795
        %3070 = vmatpush.bf16.msra.mxu0 %v2787
        %3071 = vmatpush.bf16.msra.mxu0 %v2779
        %3072 = vmatpush.bf16.msra.mxu0 %v2771
        %3073 = vmatpush.bf16.msra.mxu0 %v2763
        %3074 = vmatpush.bf16.msra.mxu0 %v2755
        %3075 = vmatpush.bf16.msra.mxu0 %v2747
        %3076 = vmatpush.bf16.msra.mxu0 %v2739
        %3077 = vmatmul.bf16.gmra.mxu0 %v2139
        %v3078 = vpop.f32.mrf.mxu0
        %v3079 = vadd.f32 %v3066, %v3078
        %v3080 = vpop.f32.mrf.mxu0
        %3081 = vdwg.mxu0
        %3082 = vmatpush.bf16.msra.mxu0 %v2732
        %3083 = vmatpush.bf16.msra.mxu0 %v2724
        %3084 = vmatpush.bf16.msra.mxu0 %v2716
        %3085 = vmatpush.bf16.msra.mxu0 %v2708
        %3086 = vmatpush.bf16.msra.mxu0 %v2700
        %3087 = vmatpush.bf16.msra.mxu0 %v2692
        %3088 = vmatpush.bf16.msra.mxu0 %v2684
        %3089 = vmatpush.bf16.msra.mxu0 %v2676
        %3090 = vmatmul.bf16.gmra.mxu0 %v2138
        %v3091 = vpop.f32.mrf.mxu0
        %v3092 = vadd.f32 %v2276, %v3091
        %v3093 = vpop.f32.mrf.mxu0
        %3094 = vdwg.mxu0
        %3095 = vmatpush.bf16.msra.mxu0 %v2796
        %3096 = vmatpush.bf16.msra.mxu0 %v2788
        %3097 = vmatpush.bf16.msra.mxu0 %v2780
        %3098 = vmatpush.bf16.msra.mxu0 %v2772
        %3099 = vmatpush.bf16.msra.mxu0 %v2764
        %3100 = vmatpush.bf16.msra.mxu0 %v2756
        %3101 = vmatpush.bf16.msra.mxu0 %v2748
        %3102 = vmatpush.bf16.msra.mxu0 %v2740
        %3103 = vmatmul.bf16.gmra.mxu0 %v2139
        %v3104 = vpop.f32.mrf.mxu0
        %v3105 = vadd.f32 %v3092, %v3104
        %v3106 = vpop.f32.mrf.mxu0
        %3107 = vdwg.mxu0
        %3108 = vmatpush.bf16.msra.mxu0 %v2733
        %3109 = vmatpush.bf16.msra.mxu0 %v2725
        %3110 = vmatpush.bf16.msra.mxu0 %v2717
        %3111 = vmatpush.bf16.msra.mxu0 %v2709
        %3112 = vmatpush.bf16.msra.mxu0 %v2701
        %3113 = vmatpush.bf16.msra.mxu0 %v2693
        %3114 = vmatpush.bf16.msra.mxu0 %v2685
        %3115 = vmatpush.bf16.msra.mxu0 %v2677
        %3116 = vmatmul.bf16.gmra.mxu0 %v2138
        %v3117 = vpop.f32.mrf.mxu0
        %v3118 = vadd.f32 %v2277, %v3117
        %v3119 = vpop.f32.mrf.mxu0
        %3120 = vdwg.mxu0
        %3121 = vmatpush.bf16.msra.mxu0 %v2797
        %3122 = vmatpush.bf16.msra.mxu0 %v2789
        %3123 = vmatpush.bf16.msra.mxu0 %v2781
        %3124 = vmatpush.bf16.msra.mxu0 %v2773
        %3125 = vmatpush.bf16.msra.mxu0 %v2765
        %3126 = vmatpush.bf16.msra.mxu0 %v2757
        %3127 = vmatpush.bf16.msra.mxu0 %v2749
        %3128 = vmatpush.bf16.msra.mxu0 %v2741
        %3129 = vmatmul.bf16.gmra.mxu0 %v2139
        %v3130 = vpop.f32.mrf.mxu0
        %v3131 = vadd.f32 %v3118, %v3130
        %v3132 = vpop.f32.mrf.mxu0
        %3133 = vdwg.mxu0
        %v3134 = vmul.f32 %v2949, %v2949
        %v3135 = vmul.f32 %v2975, %v2975
        %v3136 = vmul.f32 %v3001, %v3001
        %v3137 = vmul.f32 %v3027, %v3027
        %v3138 = vmul.f32 %v3053, %v3053
        %v3139 = vmul.f32 %v3079, %v3079
        %v3140 = vmul.f32 %v3105, %v3105
        %v3141 = vmul.f32 %v3131, %v3131
        %v3142 = vmul.f32 %v2949, 0.5
        %v3143 = vmul.f32 %v2975, 0.5
        %v3144 = vmul.f32 %v3001, 0.5
        %v3145 = vmul.f32 %v3027, 0.5
        %v3146 = vmul.f32 %v3053, 0.5
        %v3147 = vmul.f32 %v3079, 0.5
        %v3148 = vmul.f32 %v3105, 0.5
        %v3149 = vmul.f32 %v3131, 0.5
        %v3150 = vmul.f32 %v2949, 0.7978846
        %v3151 = vmul.f32 %v2975, 0.7978846
        %v3152 = vmul.f32 %v3001, 0.7978846
        %v3153 = vmul.f32 %v3027, 0.7978846
        %v3154 = vmul.f32 %v3053, 0.7978846
        %v3155 = vmul.f32 %v3079, 0.7978846
        %v3156 = vmul.f32 %v3105, 0.7978846
        %v3157 = vmul.f32 %v3131, 0.7978846
        %v3158 = vmul.f32 %v3134, 0.044715
        %v3159 = vmul.f32 %v3135, 0.044715
        %v3160 = vmul.f32 %v3136, 0.044715
        %v3161 = vmul.f32 %v3137, 0.044715
        %v3162 = vmul.f32 %v3138, 0.044715
        %v3163 = vmul.f32 %v3139, 0.044715
        %v3164 = vmul.f32 %v3140, 0.044715
        %v3165 = vmul.f32 %v3141, 0.044715
        %v3166 = vadd.f32 %v3158, 1.0
        %v3167 = vadd.f32 %v3159, 1.0
        %v3168 = vadd.f32 %v3160, 1.0
        %v3169 = vadd.f32 %v3161, 1.0
        %v3170 = vadd.f32 %v3162, 1.0
        %v3171 = vadd.f32 %v3163, 1.0
        %v3172 = vadd.f32 %v3164, 1.0
        %v3173 = vadd.f32 %v3165, 1.0
        %v3174 = vmul.f32 %v3150, %v3166
        %v3175 = vmul.f32 %v3151, %v3167
        %v3176 = vmul.f32 %v3152, %v3168
        %v3177 = vmul.f32 %v3153, %v3169
        %v3178 = vmul.f32 %v3154, %v3170
        %v3179 = vmul.f32 %v3155, %v3171
        %v3180 = vmul.f32 %v3156, %v3172
        %v3181 = vmul.f32 %v3157, %v3173
        %v3182 = vtanh.pop %v3174
        %v3183 = vtanh.pop %v3175
        %v3184 = vtanh.pop %v3176
        %v3185 = vtanh.pop %v3177
        %v3186 = vtanh.pop %v3178
        %v3187 = vtanh.pop %v3179
        %v3188 = vtanh.pop %v3180
        %v3189 = vtanh.pop %v3181
        %v3190 = vadd.f32 %v3182, 1.0
        %v3191 = vadd.f32 %v3183, 1.0
        %v3192 = vadd.f32 %v3184, 1.0
        %v3193 = vadd.f32 %v3185, 1.0
        %v3194 = vadd.f32 %v3186, 1.0
        %v3195 = vadd.f32 %v3187, 1.0
        %v3196 = vadd.f32 %v3188, 1.0
        %v3197 = vadd.f32 %v3189, 1.0
        %v3198 = vmul.f32 %v3142, %v3190
        %v3199 = vmul.f32 %v3143, %v3191
        %v3200 = vmul.f32 %v3144, %v3192
        %v3201 = vmul.f32 %v3145, %v3193
        %v3202 = vmul.f32 %v3146, %v3194
        %v3203 = vmul.f32 %v3147, %v3195
        %v3204 = vmul.f32 %v3148, %v3196
        %v3205 = vmul.f32 %v3149, %v3197
        %v3206 = vpack.c.bf16 %v3198, %v3198
        %v3207 = vpack.c.bf16 %v3199, %v3199
        %v3208 = vpack.c.bf16 %v3200, %v3200
        %v3209 = vpack.c.bf16 %v3201, %v3201
        %v3210 = vpack.c.bf16 %v3202, %v3202
        %v3211 = vpack.c.bf16 %v3203, %v3203
        %v3212 = vpack.c.bf16 %v3204, %v3204
        %v3213 = vpack.c.bf16 %v3205, %v3205
        %v3214 = vld [vmem:[%s782] sm:$0xff]
        %v3215 = vld [vmem:[%s782 + $0x8] sm:$0xff]
        %v3216 = vld [vmem:[%s782 + $0x10] sm:$0xff]
        %v3217 = vld [vmem:[%s782 + $0x18] sm:$0xff]
        %v3218 = vld [vmem:[%s782 + $0x20] sm:$0xff]
        %v3219 = vld [vmem:[%s782 + $0x28] sm:$0xff]
        %v3220 = vld [vmem:[%s782 + $0x30] sm:$0xff]
        %v3221 = vld [vmem:[%s782 + $0x38] sm:$0xff]
        %v3222 = vld [vmem:[%s782 + $0x40] sm:$0xff]
        %v3223 = vld [vmem:[%s782 + $0x48] sm:$0xff]
        %v3224 = vld [vmem:[%s782 + $0x50] sm:$0xff]
        %v3225 = vld [vmem:[%s782 + $0x58] sm:$0xff]
        %v3226 = vld [vmem:[%s782 + $0x60] sm:$0xff]
        %v3227 = vld [vmem:[%s782 + $0x68] sm:$0xff]
        %v3228 = vld [vmem:[%s782 + $0x70] sm:$0xff]
        %v3229 = vld [vmem:[%s782 + $0x78] sm:$0xff]
        %v3230 = vld [vmem:[%s782 + $0x80] sm:$0xff]
        %v3231 = vld [vmem:[%s782 + $0x88] sm:$0xff]
        %v3232 = vld [vmem:[%s782 + $0x90] sm:$0xff]
        %v3233 = vld [vmem:[%s782 + $0x98] sm:$0xff]
        %v3234 = vld [vmem:[%s782 + $0xa0] sm:$0xff]
        %v3235 = vld [vmem:[%s782 + $0xa8] sm:$0xff]
        %v3236 = vld [vmem:[%s782 + $0xb0] sm:$0xff]
        %v3237 = vld [vmem:[%s782 + $0xb8] sm:$0xff]
        %v3238 = vld [vmem:[%s782 + $0xc0] sm:$0xff]
        %v3239 = vld [vmem:[%s782 + $0xc8] sm:$0xff]
        %v3240 = vld [vmem:[%s782 + $0xd0] sm:$0xff]
        %v3241 = vld [vmem:[%s782 + $0xd8] sm:$0xff]
        %v3242 = vld [vmem:[%s782 + $0xe0] sm:$0xff]
        %v3243 = vld [vmem:[%s782 + $0xe8] sm:$0xff]
        %v3244 = vld [vmem:[%s782 + $0xf0] sm:$0xff]
        %v3245 = vld [vmem:[%s782 + $0xf8] sm:$0xff]
        %v3246 = vld [vmem:[%s782 + $0x100] sm:$0xff]
        %v3247 = vld [vmem:[%s782 + $0x108] sm:$0xff]
        %v3248 = vld [vmem:[%s782 + $0x110] sm:$0xff]
        %v3249 = vld [vmem:[%s782 + $0x118] sm:$0xff]
        %v3250 = vld [vmem:[%s782 + $0x120] sm:$0xff]
        %v3251 = vld [vmem:[%s782 + $0x128] sm:$0xff]
        %v3252 = vld [vmem:[%s782 + $0x130] sm:$0xff]
        %v3253 = vld [vmem:[%s782 + $0x138] sm:$0xff]
        %v3254 = vld [vmem:[%s782 + $0x140] sm:$0xff]
        %v3255 = vld [vmem:[%s782 + $0x148] sm:$0xff]
        %v3256 = vld [vmem:[%s782 + $0x150] sm:$0xff]
        %v3257 = vld [vmem:[%s782 + $0x158] sm:$0xff]
        %v3258 = vld [vmem:[%s782 + $0x160] sm:$0xff]
        %v3259 = vld [vmem:[%s782 + $0x168] sm:$0xff]
        %v3260 = vld [vmem:[%s782 + $0x170] sm:$0xff]
        %v3261 = vld [vmem:[%s782 + $0x178] sm:$0xff]
        %v3262 = vld [vmem:[%s782 + $0x180] sm:$0xff]
        %v3263 = vld [vmem:[%s782 + $0x188] sm:$0xff]
        %v3264 = vld [vmem:[%s782 + $0x190] sm:$0xff]
        %v3265 = vld [vmem:[%s782 + $0x198] sm:$0xff]
        %v3266 = vld [vmem:[%s782 + $0x1a0] sm:$0xff]
        %v3267 = vld [vmem:[%s782 + $0x1a8] sm:$0xff]
        %v3268 = vld [vmem:[%s782 + $0x1b0] sm:$0xff]
        %v3269 = vld [vmem:[%s782 + $0x1b8] sm:$0xff]
        %v3270 = vld [vmem:[%s782 + $0x1c0] sm:$0xff]
        %v3271 = vld [vmem:[%s782 + $0x1c8] sm:$0xff]
        %v3272 = vld [vmem:[%s782 + $0x1d0] sm:$0xff]
        %v3273 = vld [vmem:[%s782 + $0x1d8] sm:$0xff]
        %v3274 = vld [vmem:[%s782 + $0x1e0] sm:$0xff]
        %v3275 = vld [vmem:[%s782 + $0x1e8] sm:$0xff]
        %v3276 = vld [vmem:[%s782 + $0x1f0] sm:$0xff]
        %v3277 = vld [vmem:[%s782 + $0x1f8] sm:$0xff]
        %v3278 = vld [vmem:[%s782 + $0x200] sm:$0xff]
        %v3279 = vld [vmem:[%s782 + $0x208] sm:$0xff]
        %v3280 = vld [vmem:[%s782 + $0x210] sm:$0xff]
        %v3281 = vld [vmem:[%s782 + $0x218] sm:$0xff]
        %v3282 = vld [vmem:[%s782 + $0x220] sm:$0xff]
        %v3283 = vld [vmem:[%s782 + $0x228] sm:$0xff]
        %v3284 = vld [vmem:[%s782 + $0x230] sm:$0xff]
        %v3285 = vld [vmem:[%s782 + $0x238] sm:$0xff]
        %v3286 = vld [vmem:[%s782 + $0x240] sm:$0xff]
        %v3287 = vld [vmem:[%s782 + $0x248] sm:$0xff]
        %v3288 = vld [vmem:[%s782 + $0x250] sm:$0xff]
        %v3289 = vld [vmem:[%s782 + $0x258] sm:$0xff]
        %v3290 = vld [vmem:[%s782 + $0x260] sm:$0xff]
        %v3291 = vld [vmem:[%s782 + $0x268] sm:$0xff]
        %v3292 = vld [vmem:[%s782 + $0x270] sm:$0xff]
        %v3293 = vld [vmem:[%s782 + $0x278] sm:$0xff]
        %v3294 = vld [vmem:[%s782 + $0x280] sm:$0xff]
        %v3295 = vld [vmem:[%s782 + $0x288] sm:$0xff]
        %v3296 = vld [vmem:[%s782 + $0x290] sm:$0xff]
        %v3297 = vld [vmem:[%s782 + $0x298] sm:$0xff]
        %v3298 = vld [vmem:[%s782 + $0x2a0] sm:$0xff]
        %v3299 = vld [vmem:[%s782 + $0x2a8] sm:$0xff]
        %v3300 = vld [vmem:[%s782 + $0x2b0] sm:$0xff]
        %v3301 = vld [vmem:[%s782 + $0x2b8] sm:$0xff]
        %v3302 = vld [vmem:[%s782 + $0x2c0] sm:$0xff]
        %v3303 = vld [vmem:[%s782 + $0x2c8] sm:$0xff]
        %v3304 = vld [vmem:[%s782 + $0x2d0] sm:$0xff]
        %v3305 = vld [vmem:[%s782 + $0x2d8] sm:$0xff]
        %v3306 = vld [vmem:[%s782 + $0x2e0] sm:$0xff]
        %v3307 = vld [vmem:[%s782 + $0x2e8] sm:$0xff]
        %v3308 = vld [vmem:[%s782 + $0x2f0] sm:$0xff]
        %v3309 = vld [vmem:[%s782 + $0x2f8] sm:$0xff]
        %v3310 = vld [vmem:[%s782 + $0x300] sm:$0xff]
        %v3311 = vld [vmem:[%s782 + $0x308] sm:$0xff]
        %v3312 = vld [vmem:[%s782 + $0x310] sm:$0xff]
        %v3313 = vld [vmem:[%s782 + $0x318] sm:$0xff]
        %v3314 = vld [vmem:[%s782 + $0x320] sm:$0xff]
        %v3315 = vld [vmem:[%s782 + $0x328] sm:$0xff]
        %v3316 = vld [vmem:[%s782 + $0x330] sm:$0xff]
        %v3317 = vld [vmem:[%s782 + $0x338] sm:$0xff]
        %v3318 = vld [vmem:[%s782 + $0x340] sm:$0xff]
        %v3319 = vld [vmem:[%s782 + $0x348] sm:$0xff]
        %v3320 = vld [vmem:[%s782 + $0x350] sm:$0xff]
        %v3321 = vld [vmem:[%s782 + $0x358] sm:$0xff]
        %v3322 = vld [vmem:[%s782 + $0x360] sm:$0xff]
        %v3323 = vld [vmem:[%s782 + $0x368] sm:$0xff]
        %v3324 = vld [vmem:[%s782 + $0x370] sm:$0xff]
        %v3325 = vld [vmem:[%s782 + $0x378] sm:$0xff]
        %v3326 = vld [vmem:[%s782 + $0x380] sm:$0xff]
        %v3327 = vld [vmem:[%s782 + $0x388] sm:$0xff]
        %v3328 = vld [vmem:[%s782 + $0x390] sm:$0xff]
        %v3329 = vld [vmem:[%s782 + $0x398] sm:$0xff]
        %v3330 = vld [vmem:[%s782 + $0x3a0] sm:$0xff]
        %v3331 = vld [vmem:[%s782 + $0x3a8] sm:$0xff]
        %v3332 = vld [vmem:[%s782 + $0x3b0] sm:$0xff]
        %v3333 = vld [vmem:[%s782 + $0x3b8] sm:$0xff]
        %v3334 = vld [vmem:[%s782 + $0x3c0] sm:$0xff]
        %v3335 = vld [vmem:[%s782 + $0x3c8] sm:$0xff]
        %v3336 = vld [vmem:[%s782 + $0x3d0] sm:$0xff]
        %v3337 = vld [vmem:[%s782 + $0x3d8] sm:$0xff]
        %v3338 = vld [vmem:[%s782 + $0x3e0] sm:$0xff]
        %v3339 = vld [vmem:[%s782 + $0x3e8] sm:$0xff]
        %v3340 = vld [vmem:[%s782 + $0x3f0] sm:$0xff]
        %v3341 = vld [vmem:[%s782 + $0x3f8] sm:$0xff]
        %v3470 = vunpack.c.l.b16 %v3214
        %v3471 = vunpack.c.h.b16 %v3214
        %v3472 = vunpack.c.l.b16 %v3215
        %v3473 = vunpack.c.h.b16 %v3215
        %v3474 = vunpack.c.l.b16 %v3216
        %v3475 = vunpack.c.h.b16 %v3216
        %v3476 = vunpack.c.l.b16 %v3217
        %v3477 = vunpack.c.h.b16 %v3217
        %v3478 = vunpack.c.l.b16 %v3218
        %v3479 = vunpack.c.h.b16 %v3218
        %v3480 = vunpack.c.l.b16 %v3219
        %v3481 = vunpack.c.h.b16 %v3219
        %v3482 = vunpack.c.l.b16 %v3220
        %v3483 = vunpack.c.h.b16 %v3220
        %v3484 = vunpack.c.l.b16 %v3221
        %v3485 = vunpack.c.h.b16 %v3221
        %v3486 = vunpack.c.l.b16 %v3222
        %v3487 = vunpack.c.h.b16 %v3222
        %v3488 = vunpack.c.l.b16 %v3223
        %v3489 = vunpack.c.h.b16 %v3223
        %v3490 = vunpack.c.l.b16 %v3224
        %v3491 = vunpack.c.h.b16 %v3224
        %v3492 = vunpack.c.l.b16 %v3225
        %v3493 = vunpack.c.h.b16 %v3225
        %v3494 = vunpack.c.l.b16 %v3226
        %v3495 = vunpack.c.h.b16 %v3226
        %v3496 = vunpack.c.l.b16 %v3227
        %v3497 = vunpack.c.h.b16 %v3227
        %v3498 = vunpack.c.l.b16 %v3228
        %v3499 = vunpack.c.h.b16 %v3228
        %v3500 = vunpack.c.l.b16 %v3229
        %v3501 = vunpack.c.h.b16 %v3229
        %v3502 = vunpack.c.l.b16 %v3230
        %v3503 = vunpack.c.h.b16 %v3230
        %v3504 = vunpack.c.l.b16 %v3231
        %v3505 = vunpack.c.h.b16 %v3231
        %v3506 = vunpack.c.l.b16 %v3232
        %v3507 = vunpack.c.h.b16 %v3232
        %v3508 = vunpack.c.l.b16 %v3233
        %v3509 = vunpack.c.h.b16 %v3233
        %v3510 = vunpack.c.l.b16 %v3234
        %v3511 = vunpack.c.h.b16 %v3234
        %v3512 = vunpack.c.l.b16 %v3235
        %v3513 = vunpack.c.h.b16 %v3235
        %v3514 = vunpack.c.l.b16 %v3236
        %v3515 = vunpack.c.h.b16 %v3236
        %v3516 = vunpack.c.l.b16 %v3237
        %v3517 = vunpack.c.h.b16 %v3237
        %v3518 = vunpack.c.l.b16 %v3238
        %v3519 = vunpack.c.h.b16 %v3238
        %v3520 = vunpack.c.l.b16 %v3239
        %v3521 = vunpack.c.h.b16 %v3239
        %v3522 = vunpack.c.l.b16 %v3240
        %v3523 = vunpack.c.h.b16 %v3240
        %v3524 = vunpack.c.l.b16 %v3241
        %v3525 = vunpack.c.h.b16 %v3241
        %v3526 = vunpack.c.l.b16 %v3242
        %v3527 = vunpack.c.h.b16 %v3242
        %v3528 = vunpack.c.l.b16 %v3243
        %v3529 = vunpack.c.h.b16 %v3243
        %v3530 = vunpack.c.l.b16 %v3244
        %v3531 = vunpack.c.h.b16 %v3244
        %v3532 = vunpack.c.l.b16 %v3245
        %v3533 = vunpack.c.h.b16 %v3245
        %v3534 = vunpack.c.l.b16 %v3246
        %v3535 = vunpack.c.h.b16 %v3246
        %v3536 = vunpack.c.l.b16 %v3247
        %v3537 = vunpack.c.h.b16 %v3247
        %v3538 = vunpack.c.l.b16 %v3248
        %v3539 = vunpack.c.h.b16 %v3248
        %v3540 = vunpack.c.l.b16 %v3249
        %v3541 = vunpack.c.h.b16 %v3249
        %v3542 = vunpack.c.l.b16 %v3250
        %v3543 = vunpack.c.h.b16 %v3250
        %v3544 = vunpack.c.l.b16 %v3251
        %v3545 = vunpack.c.h.b16 %v3251
        %v3546 = vunpack.c.l.b16 %v3252
        %v3547 = vunpack.c.h.b16 %v3252
        %v3548 = vunpack.c.l.b16 %v3253
        %v3549 = vunpack.c.h.b16 %v3253
        %v3550 = vunpack.c.l.b16 %v3254
        %v3551 = vunpack.c.h.b16 %v3254
        %v3552 = vunpack.c.l.b16 %v3255
        %v3553 = vunpack.c.h.b16 %v3255
        %v3554 = vunpack.c.l.b16 %v3256
        %v3555 = vunpack.c.h.b16 %v3256
        %v3556 = vunpack.c.l.b16 %v3257
        %v3557 = vunpack.c.h.b16 %v3257
        %v3558 = vunpack.c.l.b16 %v3258
        %v3559 = vunpack.c.h.b16 %v3258
        %v3560 = vunpack.c.l.b16 %v3259
        %v3561 = vunpack.c.h.b16 %v3259
        %v3562 = vunpack.c.l.b16 %v3260
        %v3563 = vunpack.c.h.b16 %v3260
        %v3564 = vunpack.c.l.b16 %v3261
        %v3565 = vunpack.c.h.b16 %v3261
        %v3566 = vunpack.c.l.b16 %v3262
        %v3567 = vunpack.c.h.b16 %v3262
        %v3568 = vunpack.c.l.b16 %v3263
        %v3569 = vunpack.c.h.b16 %v3263
        %v3570 = vunpack.c.l.b16 %v3264
        %v3571 = vunpack.c.h.b16 %v3264
        %v3572 = vunpack.c.l.b16 %v3265
        %v3573 = vunpack.c.h.b16 %v3265
        %v3574 = vunpack.c.l.b16 %v3266
        %v3575 = vunpack.c.h.b16 %v3266
        %v3576 = vunpack.c.l.b16 %v3267
        %v3577 = vunpack.c.h.b16 %v3267
        %v3578 = vunpack.c.l.b16 %v3268
        %v3579 = vunpack.c.h.b16 %v3268
        %v3580 = vunpack.c.l.b16 %v3269
        %v3581 = vunpack.c.h.b16 %v3269
        %v3582 = vunpack.c.l.b16 %v3270
        %v3583 = vunpack.c.h.b16 %v3270
        %v3584 = vunpack.c.l.b16 %v3271
        %v3585 = vunpack.c.h.b16 %v3271
        %v3586 = vunpack.c.l.b16 %v3272
        %v3587 = vunpack.c.h.b16 %v3272
        %v3588 = vunpack.c.l.b16 %v3273
        %v3589 = vunpack.c.h.b16 %v3273
        %v3590 = vunpack.c.l.b16 %v3274
        %v3591 = vunpack.c.h.b16 %v3274
        %v3592 = vunpack.c.l.b16 %v3275
        %v3593 = vunpack.c.h.b16 %v3275
        %v3594 = vunpack.c.l.b16 %v3276
        %v3595 = vunpack.c.h.b16 %v3276
        %v3596 = vunpack.c.l.b16 %v3277
        %v3597 = vunpack.c.h.b16 %v3277
        %v3598 = vunpack.c.l.b16 %v3278
        %v3599 = vunpack.c.h.b16 %v3278
        %v3600 = vunpack.c.l.b16 %v3279
        %v3601 = vunpack.c.h.b16 %v3279
        %v3602 = vunpack.c.l.b16 %v3280
        %v3603 = vunpack.c.h.b16 %v3280
        %v3604 = vunpack.c.l.b16 %v3281
        %v3605 = vunpack.c.h.b16 %v3281
        %v3606 = vunpack.c.l.b16 %v3282
        %v3607 = vunpack.c.h.b16 %v3282
        %v3608 = vunpack.c.l.b16 %v3283
        %v3609 = vunpack.c.h.b16 %v3283
        %v3610 = vunpack.c.l.b16 %v3284
        %v3611 = vunpack.c.h.b16 %v3284
        %v3612 = vunpack.c.l.b16 %v3285
        %v3613 = vunpack.c.h.b16 %v3285
        %v3614 = vunpack.c.l.b16 %v3286
        %v3615 = vunpack.c.h.b16 %v3286
        %v3616 = vunpack.c.l.b16 %v3287
        %v3617 = vunpack.c.h.b16 %v3287
        %v3618 = vunpack.c.l.b16 %v3288
        %v3619 = vunpack.c.h.b16 %v3288
        %v3620 = vunpack.c.l.b16 %v3289
        %v3621 = vunpack.c.h.b16 %v3289
        %v3622 = vunpack.c.l.b16 %v3290
        %v3623 = vunpack.c.h.b16 %v3290
        %v3624 = vunpack.c.l.b16 %v3291
        %v3625 = vunpack.c.h.b16 %v3291
        %v3626 = vunpack.c.l.b16 %v3292
        %v3627 = vunpack.c.h.b16 %v3292
        %v3628 = vunpack.c.l.b16 %v3293
        %v3629 = vunpack.c.h.b16 %v3293
        %v3630 = vunpack.c.l.b16 %v3294
        %v3631 = vunpack.c.h.b16 %v3294
        %v3632 = vunpack.c.l.b16 %v3295
        %v3633 = vunpack.c.h.b16 %v3295
        %v3634 = vunpack.c.l.b16 %v3296
        %v3635 = vunpack.c.h.b16 %v3296
        %v3636 = vunpack.c.l.b16 %v3297
        %v3637 = vunpack.c.h.b16 %v3297
        %v3638 = vunpack.c.l.b16 %v3298
        %v3639 = vunpack.c.h.b16 %v3298
        %v3640 = vunpack.c.l.b16 %v3299
        %v3641 = vunpack.c.h.b16 %v3299
        %v3642 = vunpack.c.l.b16 %v3300
        %v3643 = vunpack.c.h.b16 %v3300
        %v3644 = vunpack.c.l.b16 %v3301
        %v3645 = vunpack.c.h.b16 %v3301
        %v3646 = vunpack.c.l.b16 %v3302
        %v3647 = vunpack.c.h.b16 %v3302
        %v3648 = vunpack.c.l.b16 %v3303
        %v3649 = vunpack.c.h.b16 %v3303
        %v3650 = vunpack.c.l.b16 %v3304
        %v3651 = vunpack.c.h.b16 %v3304
        %v3652 = vunpack.c.l.b16 %v3305
        %v3653 = vunpack.c.h.b16 %v3305
        %v3654 = vunpack.c.l.b16 %v3306
        %v3655 = vunpack.c.h.b16 %v3306
        %v3656 = vunpack.c.l.b16 %v3307
        %v3657 = vunpack.c.h.b16 %v3307
        %v3658 = vunpack.c.l.b16 %v3308
        %v3659 = vunpack.c.h.b16 %v3308
        %v3660 = vunpack.c.l.b16 %v3309
        %v3661 = vunpack.c.h.b16 %v3309
        %v3662 = vunpack.c.l.b16 %v3310
        %v3663 = vunpack.c.h.b16 %v3310
        %v3664 = vunpack.c.l.b16 %v3311
        %v3665 = vunpack.c.h.b16 %v3311
        %v3666 = vunpack.c.l.b16 %v3312
        %v3667 = vunpack.c.h.b16 %v3312
        %v3668 = vunpack.c.l.b16 %v3313
        %v3669 = vunpack.c.h.b16 %v3313
        %v3670 = vunpack.c.l.b16 %v3314
        %v3671 = vunpack.c.h.b16 %v3314
        %v3672 = vunpack.c.l.b16 %v3315
        %v3673 = vunpack.c.h.b16 %v3315
        %v3674 = vunpack.c.l.b16 %v3316
        %v3675 = vunpack.c.h.b16 %v3316
        %v3676 = vunpack.c.l.b16 %v3317
        %v3677 = vunpack.c.h.b16 %v3317
        %v3678 = vunpack.c.l.b16 %v3318
        %v3679 = vunpack.c.h.b16 %v3318
        %v3680 = vunpack.c.l.b16 %v3319
        %v3681 = vunpack.c.h.b16 %v3319
        %v3682 = vunpack.c.l.b16 %v3320
        %v3683 = vunpack.c.h.b16 %v3320
        %v3684 = vunpack.c.l.b16 %v3321
        %v3685 = vunpack.c.h.b16 %v3321
        %v3686 = vunpack.c.l.b16 %v3322
        %v3687 = vunpack.c.h.b16 %v3322
        %v3688 = vunpack.c.l.b16 %v3323
        %v3689 = vunpack.c.h.b16 %v3323
        %v3690 = vunpack.c.l.b16 %v3324
        %v3691 = vunpack.c.h.b16 %v3324
        %v3692 = vunpack.c.l.b16 %v3325
        %v3693 = vunpack.c.h.b16 %v3325
        %v3694 = vunpack.c.l.b16 %v3326
        %v3695 = vunpack.c.h.b16 %v3326
        %v3696 = vunpack.c.l.b16 %v3327
        %v3697 = vunpack.c.h.b16 %v3327
        %v3698 = vunpack.c.l.b16 %v3328
        %v3699 = vunpack.c.h.b16 %v3328
        %v3700 = vunpack.c.l.b16 %v3329
        %v3701 = vunpack.c.h.b16 %v3329
        %v3702 = vunpack.c.l.b16 %v3330
        %v3703 = vunpack.c.h.b16 %v3330
        %v3704 = vunpack.c.l.b16 %v3331
        %v3705 = vunpack.c.h.b16 %v3331
        %v3706 = vunpack.c.l.b16 %v3332
        %v3707 = vunpack.c.h.b16 %v3332
        %v3708 = vunpack.c.l.b16 %v3333
        %v3709 = vunpack.c.h.b16 %v3333
        %v3710 = vunpack.c.l.b16 %v3334
        %v3711 = vunpack.c.h.b16 %v3334
        %v3712 = vunpack.c.l.b16 %v3335
        %v3713 = vunpack.c.h.b16 %v3335
        %v3714 = vunpack.c.l.b16 %v3336
        %v3715 = vunpack.c.h.b16 %v3336
        %v3716 = vunpack.c.l.b16 %v3337
        %v3717 = vunpack.c.h.b16 %v3337
        %v3718 = vunpack.c.l.b16 %v3338
        %v3719 = vunpack.c.h.b16 %v3338
        %v3720 = vunpack.c.l.b16 %v3339
        %v3721 = vunpack.c.h.b16 %v3339
        %v3722 = vunpack.c.l.b16 %v3340
        %v3723 = vunpack.c.h.b16 %v3340
        %v3724 = vunpack.c.l.b16 %v3341
        %v3725 = vunpack.c.h.b16 %v3341
        %v3726 = vpack.c.b16 %v3472, %v3470
        %v3727 = vpack.c.b16 %v3473, %v3471
        %v3728 = vpack.c.b16 %v3476, %v3474
        %v3729 = vpack.c.b16 %v3477, %v3475
        %v3730 = vpack.c.b16 %v3480, %v3478
        %v3731 = vpack.c.b16 %v3481, %v3479
        %v3732 = vpack.c.b16 %v3484, %v3482
        %v3733 = vpack.c.b16 %v3485, %v3483
        %v3734 = vpack.c.b16 %v3488, %v3486
        %v3735 = vpack.c.b16 %v3489, %v3487
        %v3736 = vpack.c.b16 %v3492, %v3490
        %v3737 = vpack.c.b16 %v3493, %v3491
        %v3738 = vpack.c.b16 %v3496, %v3494
        %v3739 = vpack.c.b16 %v3497, %v3495
        %v3740 = vpack.c.b16 %v3500, %v3498
        %v3741 = vpack.c.b16 %v3501, %v3499
        %v3742 = vpack.c.b16 %v3504, %v3502
        %v3743 = vpack.c.b16 %v3505, %v3503
        %v3744 = vpack.c.b16 %v3508, %v3506
        %v3745 = vpack.c.b16 %v3509, %v3507
        %v3746 = vpack.c.b16 %v3512, %v3510
        %v3747 = vpack.c.b16 %v3513, %v3511
        %v3748 = vpack.c.b16 %v3516, %v3514
        %v3749 = vpack.c.b16 %v3517, %v3515
        %v3750 = vpack.c.b16 %v3520, %v3518
        %v3751 = vpack.c.b16 %v3521, %v3519
        %v3752 = vpack.c.b16 %v3524, %v3522
        %v3753 = vpack.c.b16 %v3525, %v3523
        %v3754 = vpack.c.b16 %v3528, %v3526
        %v3755 = vpack.c.b16 %v3529, %v3527
        %v3756 = vpack.c.b16 %v3532, %v3530
        %v3757 = vpack.c.b16 %v3533, %v3531
        %v3758 = vpack.c.b16 %v3536, %v3534
        %v3759 = vpack.c.b16 %v3537, %v3535
        %v3760 = vpack.c.b16 %v3540, %v3538
        %v3761 = vpack.c.b16 %v3541, %v3539
        %v3762 = vpack.c.b16 %v3544, %v3542
        %v3763 = vpack.c.b16 %v3545, %v3543
        %v3764 = vpack.c.b16 %v3548, %v3546
        %v3765 = vpack.c.b16 %v3549, %v3547
        %v3766 = vpack.c.b16 %v3552, %v3550
        %v3767 = vpack.c.b16 %v3553, %v3551
        %v3768 = vpack.c.b16 %v3556, %v3554
        %v3769 = vpack.c.b16 %v3557, %v3555
        %v3770 = vpack.c.b16 %v3560, %v3558
        %v3771 = vpack.c.b16 %v3561, %v3559
        %v3772 = vpack.c.b16 %v3564, %v3562
        %v3773 = vpack.c.b16 %v3565, %v3563
        %v3774 = vpack.c.b16 %v3568, %v3566
        %v3775 = vpack.c.b16 %v3569, %v3567
        %v3776 = vpack.c.b16 %v3572, %v3570
        %v3777 = vpack.c.b16 %v3573, %v3571
        %v3778 = vpack.c.b16 %v3576, %v3574
        %v3779 = vpack.c.b16 %v3577, %v3575
        %v3780 = vpack.c.b16 %v3580, %v3578
        %v3781 = vpack.c.b16 %v3581, %v3579
        %v3782 = vpack.c.b16 %v3584, %v3582
        %v3783 = vpack.c.b16 %v3585, %v3583
        %v3784 = vpack.c.b16 %v3588, %v3586
        %v3785 = vpack.c.b16 %v3589, %v3587
        %v3786 = vpack.c.b16 %v3592, %v3590
        %v3787 = vpack.c.b16 %v3593, %v3591
        %v3788 = vpack.c.b16 %v3596, %v3594
        %v3789 = vpack.c.b16 %v3597, %v3595
        %v3790 = vpack.c.b16 %v3600, %v3598
        %v3791 = vpack.c.b16 %v3601, %v3599
        %v3792 = vpack.c.b16 %v3604, %v3602
        %v3793 = vpack.c.b16 %v3605, %v3603
        %v3794 = vpack.c.b16 %v3608, %v3606
        %v3795 = vpack.c.b16 %v3609, %v3607
        %v3796 = vpack.c.b16 %v3612, %v3610
        %v3797 = vpack.c.b16 %v3613, %v3611
        %v3798 = vpack.c.b16 %v3616, %v3614
        %v3799 = vpack.c.b16 %v3617, %v3615
        %v3800 = vpack.c.b16 %v3620, %v3618
        %v3801 = vpack.c.b16 %v3621, %v3619
        %v3802 = vpack.c.b16 %v3624, %v3622
        %v3803 = vpack.c.b16 %v3625, %v3623
        %v3804 = vpack.c.b16 %v3628, %v3626
        %v3805 = vpack.c.b16 %v3629, %v3627
        %v3806 = vpack.c.b16 %v3632, %v3630
        %v3807 = vpack.c.b16 %v3633, %v3631
        %v3808 = vpack.c.b16 %v3636, %v3634
        %v3809 = vpack.c.b16 %v3637, %v3635
        %v3810 = vpack.c.b16 %v3640, %v3638
        %v3811 = vpack.c.b16 %v3641, %v3639
        %v3812 = vpack.c.b16 %v3644, %v3642
        %v3813 = vpack.c.b16 %v3645, %v3643
        %v3814 = vpack.c.b16 %v3648, %v3646
        %v3815 = vpack.c.b16 %v3649, %v3647
        %v3816 = vpack.c.b16 %v3652, %v3650
        %v3817 = vpack.c.b16 %v3653, %v3651
        %v3818 = vpack.c.b16 %v3656, %v3654
        %v3819 = vpack.c.b16 %v3657, %v3655
        %v3820 = vpack.c.b16 %v3660, %v3658
        %v3821 = vpack.c.b16 %v3661, %v3659
        %v3822 = vpack.c.b16 %v3664, %v3662
        %v3823 = vpack.c.b16 %v3665, %v3663
        %v3824 = vpack.c.b16 %v3668, %v3666
        %v3825 = vpack.c.b16 %v3669, %v3667
        %v3826 = vpack.c.b16 %v3672, %v3670
        %v3827 = vpack.c.b16 %v3673, %v3671
        %v3828 = vpack.c.b16 %v3676, %v3674
        %v3829 = vpack.c.b16 %v3677, %v3675
        %v3830 = vpack.c.b16 %v3680, %v3678
        %v3831 = vpack.c.b16 %v3681, %v3679
        %v3832 = vpack.c.b16 %v3684, %v3682
        %v3833 = vpack.c.b16 %v3685, %v3683
        %v3834 = vpack.c.b16 %v3688, %v3686
        %v3835 = vpack.c.b16 %v3689, %v3687
        %v3836 = vpack.c.b16 %v3692, %v3690
        %v3837 = vpack.c.b16 %v3693, %v3691
        %v3838 = vpack.c.b16 %v3696, %v3694
        %v3839 = vpack.c.b16 %v3697, %v3695
        %v3840 = vpack.c.b16 %v3700, %v3698
        %v3841 = vpack.c.b16 %v3701, %v3699
        %v3842 = vpack.c.b16 %v3704, %v3702
        %v3843 = vpack.c.b16 %v3705, %v3703
        %v3844 = vpack.c.b16 %v3708, %v3706
        %v3845 = vpack.c.b16 %v3709, %v3707
        %v3846 = vpack.c.b16 %v3712, %v3710
        %v3847 = vpack.c.b16 %v3713, %v3711
        %v3848 = vpack.c.b16 %v3716, %v3714
        %v3849 = vpack.c.b16 %v3717, %v3715
        %v3850 = vpack.c.b16 %v3720, %v3718
        %v3851 = vpack.c.b16 %v3721, %v3719
        %v3852 = vpack.c.b16 %v3724, %v3722
        %v3853 = vpack.c.b16 %v3725, %v3723
        %3982 = vmatpush.bf16.msra.mxu0 %v3740
        %3983 = vmatpush.bf16.msra.mxu0 %v3738
        %3984 = vmatpush.bf16.msra.mxu0 %v3736
        %3985 = vmatpush.bf16.msra.mxu0 %v3734
        %3986 = vmatpush.bf16.msra.mxu0 %v3732
        %3987 = vmatpush.bf16.msra.mxu0 %v3730
        %3988 = vmatpush.bf16.msra.mxu0 %v3728
        %3989 = vmatpush.bf16.msra.mxu0 %v3726
        %3990 = vmatmul.bf16.gmra.mxu0 %v3206
        %v3991 = vpop.f32.mrf.mxu0
        %v3992 = vadd.f32 0.0, %v3991
        %v3993 = vpop.f32.mrf.mxu0
        %3994 = vdwg.mxu0
        %3995 = vmatpush.bf16.msra.mxu0 %v3756
        %3996 = vmatpush.bf16.msra.mxu0 %v3754
        %3997 = vmatpush.bf16.msra.mxu0 %v3752
        %3998 = vmatpush.bf16.msra.mxu0 %v3750
        %3999 = vmatpush.bf16.msra.mxu0 %v3748
        %4000 = vmatpush.bf16.msra.mxu0 %v3746
        %4001 = vmatpush.bf16.msra.mxu0 %v3744
        %4002 = vmatpush.bf16.msra.mxu0 %v3742
        %4003 = vmatmul.bf16.gmra.mxu0 %v3207
        %v4004 = vpop.f32.mrf.mxu0
        %v4005 = vadd.f32 %v3992, %v4004
        %v4006 = vpop.f32.mrf.mxu0
        %4007 = vdwg.mxu0
        %4008 = vmatpush.bf16.msra.mxu0 %v3772
        %4009 = vmatpush.bf16.msra.mxu0 %v3770
        %4010 = vmatpush.bf16.msra.mxu0 %v3768
        %4011 = vmatpush.bf16.msra.mxu0 %v3766
        %4012 = vmatpush.bf16.msra.mxu0 %v3764
        %4013 = vmatpush.bf16.msra.mxu0 %v3762
        %4014 = vmatpush.bf16.msra.mxu0 %v3760
        %4015 = vmatpush.bf16.msra.mxu0 %v3758
        %4016 = vmatmul.bf16.gmra.mxu0 %v3208
        %v4017 = vpop.f32.mrf.mxu0
        %v4018 = vadd.f32 %v4005, %v4017
        %v4019 = vpop.f32.mrf.mxu0
        %4020 = vdwg.mxu0
        %4021 = vmatpush.bf16.msra.mxu0 %v3788
        %4022 = vmatpush.bf16.msra.mxu0 %v3786
        %4023 = vmatpush.bf16.msra.mxu0 %v3784
        %4024 = vmatpush.bf16.msra.mxu0 %v3782
        %4025 = vmatpush.bf16.msra.mxu0 %v3780
        %4026 = vmatpush.bf16.msra.mxu0 %v3778
        %4027 = vmatpush.bf16.msra.mxu0 %v3776
        %4028 = vmatpush.bf16.msra.mxu0 %v3774
        %4029 = vmatmul.bf16.gmra.mxu0 %v3209
        %v4030 = vpop.f32.mrf.mxu0
        %v4031 = vadd.f32 %v4018, %v4030
        %v4032 = vpop.f32.mrf.mxu0
        %4033 = vdwg.mxu0
        %4034 = vmatpush.bf16.msra.mxu0 %v3804
        %4035 = vmatpush.bf16.msra.mxu0 %v3802
        %4036 = vmatpush.bf16.msra.mxu0 %v3800
        %4037 = vmatpush.bf16.msra.mxu0 %v3798
        %4038 = vmatpush.bf16.msra.mxu0 %v3796
        %4039 = vmatpush.bf16.msra.mxu0 %v3794
        %4040 = vmatpush.bf16.msra.mxu0 %v3792
        %4041 = vmatpush.bf16.msra.mxu0 %v3790
        %4042 = vmatmul.bf16.gmra.mxu0 %v3210
        %v4043 = vpop.f32.mrf.mxu0
        %v4044 = vadd.f32 %v4031, %v4043
        %v4045 = vpop.f32.mrf.mxu0
        %4046 = vdwg.mxu0
        %4047 = vmatpush.bf16.msra.mxu0 %v3820
        %4048 = vmatpush.bf16.msra.mxu0 %v3818
        %4049 = vmatpush.bf16.msra.mxu0 %v3816
        %4050 = vmatpush.bf16.msra.mxu0 %v3814
        %4051 = vmatpush.bf16.msra.mxu0 %v3812
        %4052 = vmatpush.bf16.msra.mxu0 %v3810
        %4053 = vmatpush.bf16.msra.mxu0 %v3808
        %4054 = vmatpush.bf16.msra.mxu0 %v3806
        %4055 = vmatmul.bf16.gmra.mxu0 %v3211
        %v4056 = vpop.f32.mrf.mxu0
        %v4057 = vadd.f32 %v4044, %v4056
        %v4058 = vpop.f32.mrf.mxu0
        %4059 = vdwg.mxu0
        %4060 = vmatpush.bf16.msra.mxu0 %v3836
        %4061 = vmatpush.bf16.msra.mxu0 %v3834
        %4062 = vmatpush.bf16.msra.mxu0 %v3832
        %4063 = vmatpush.bf16.msra.mxu0 %v3830
        %4064 = vmatpush.bf16.msra.mxu0 %v3828
        %4065 = vmatpush.bf16.msra.mxu0 %v3826
        %4066 = vmatpush.bf16.msra.mxu0 %v3824
        %4067 = vmatpush.bf16.msra.mxu0 %v3822
        %4068 = vmatmul.bf16.gmra.mxu0 %v3212
        %v4069 = vpop.f32.mrf.mxu0
        %v4070 = vadd.f32 %v4057, %v4069
        %v4071 = vpop.f32.mrf.mxu0
        %4072 = vdwg.mxu0
        %4073 = vmatpush.bf16.msra.mxu0 %v3852
        %4074 = vmatpush.bf16.msra.mxu0 %v3850
        %4075 = vmatpush.bf16.msra.mxu0 %v3848
        %4076 = vmatpush.bf16.msra.mxu0 %v3846
        %4077 = vmatpush.bf16.msra.mxu0 %v3844
        %4078 = vmatpush.bf16.msra.mxu0 %v3842
        %4079 = vmatpush.bf16.msra.mxu0 %v3840
        %4080 = vmatpush.bf16.msra.mxu0 %v3838
        %4081 = vmatmul.bf16.gmra.mxu0 %v3213
        %v4082 = vpop.f32.mrf.mxu0
        %v4083 = vadd.f32 %v4070, %v4082
        %v4084 = vpop.f32.mrf.mxu0
        %4085 = vdwg.mxu0
        %4086 = vmatpush.bf16.msra.mxu0 %v3741
        %4087 = vmatpush.bf16.msra.mxu0 %v3739
        %4088 = vmatpush.bf16.msra.mxu0 %v3737
        %4089 = vmatpush.bf16.msra.mxu0 %v3735
        %4090 = vmatpush.bf16.msra.mxu0 %v3733
        %4091 = vmatpush.bf16.msra.mxu0 %v3731
        %4092 = vmatpush.bf16.msra.mxu0 %v3729
        %4093 = vmatpush.bf16.msra.mxu0 %v3727
        %4094 = vmatmul.bf16.gmra.mxu0 %v3206
        %v4095 = vpop.f32.mrf.mxu0
        %v4096 = vadd.f32 0.0, %v4095
        %v4097 = vpop.f32.mrf.mxu0
        %4098 = vdwg.mxu0
        %4099 = vmatpush.bf16.msra.mxu0 %v3757
        %4100 = vmatpush.bf16.msra.mxu0 %v3755
        %4101 = vmatpush.bf16.msra.mxu0 %v3753
        %4102 = vmatpush.bf16.msra.mxu0 %v3751
        %4103 = vmatpush.bf16.msra.mxu0 %v3749
        %4104 = vmatpush.bf16.msra.mxu0 %v3747
        %4105 = vmatpush.bf16.msra.mxu0 %v3745
        %4106 = vmatpush.bf16.msra.mxu0 %v3743
        %4107 = vmatmul.bf16.gmra.mxu0 %v3207
        %v4108 = vpop.f32.mrf.mxu0
        %v4109 = vadd.f32 %v4096, %v4108
        %v4110 = vpop.f32.mrf.mxu0
        %4111 = vdwg.mxu0
        %4112 = vmatpush.bf16.msra.mxu0 %v3773
        %4113 = vmatpush.bf16.msra.mxu0 %v3771
        %4114 = vmatpush.bf16.msra.mxu0 %v3769
        %4115 = vmatpush.bf16.msra.mxu0 %v3767
        %4116 = vmatpush.bf16.msra.mxu0 %v3765
        %4117 = vmatpush.bf16.msra.mxu0 %v3763
        %4118 = vmatpush.bf16.msra.mxu0 %v3761
        %4119 = vmatpush.bf16.msra.mxu0 %v3759
        %4120 = vmatmul.bf16.gmra.mxu0 %v3208
        %v4121 = vpop.f32.mrf.mxu0
        %v4122 = vadd.f32 %v4109, %v4121
        %v4123 = vpop.f32.mrf.mxu0
        %4124 = vdwg.mxu0
        %4125 = vmatpush.bf16.msra.mxu0 %v3789
        %4126 = vmatpush.bf16.msra.mxu0 %v3787
        %4127 = vmatpush.bf16.msra.mxu0 %v3785
        %4128 = vmatpush.bf16.msra.mxu0 %v3783
        %4129 = vmatpush.bf16.msra.mxu0 %v3781
        %4130 = vmatpush.bf16.msra.mxu0 %v3779
        %4131 = vmatpush.bf16.msra.mxu0 %v3777
        %4132 = vmatpush.bf16.msra.mxu0 %v3775
        %4133 = vmatmul.bf16.gmra.mxu0 %v3209
        %v4134 = vpop.f32.mrf.mxu0
        %v4135 = vadd.f32 %v4122, %v4134
        %v4136 = vpop.f32.mrf.mxu0
        %4137 = vdwg.mxu0
        %4138 = vmatpush.bf16.msra.mxu0 %v3805
        %4139 = vmatpush.bf16.msra.mxu0 %v3803
        %4140 = vmatpush.bf16.msra.mxu0 %v3801
        %4141 = vmatpush.bf16.msra.mxu0 %v3799
        %4142 = vmatpush.bf16.msra.mxu0 %v3797
        %4143 = vmatpush.bf16.msra.mxu0 %v3795
        %4144 = vmatpush.bf16.msra.mxu0 %v3793
        %4145 = vmatpush.bf16.msra.mxu0 %v3791
        %4146 = vmatmul.bf16.gmra.mxu0 %v3210
        %v4147 = vpop.f32.mrf.mxu0
        %v4148 = vadd.f32 %v4135, %v4147
        %v4149 = vpop.f32.mrf.mxu0
        %4150 = vdwg.mxu0
        %4151 = vmatpush.bf16.msra.mxu0 %v3821
        %4152 = vmatpush.bf16.msra.mxu0 %v3819
        %4153 = vmatpush.bf16.msra.mxu0 %v3817
        %4154 = vmatpush.bf16.msra.mxu0 %v3815
        %4155 = vmatpush.bf16.msra.mxu0 %v3813
        %4156 = vmatpush.bf16.msra.mxu0 %v3811
        %4157 = vmatpush.bf16.msra.mxu0 %v3809
        %4158 = vmatpush.bf16.msra.mxu0 %v3807
        %4159 = vmatmul.bf16.gmra.mxu0 %v3211
        %v4160 = vpop.f32.mrf.mxu0
        %v4161 = vadd.f32 %v4148, %v4160
        %v4162 = vpop.f32.mrf.mxu0
        %4163 = vdwg.mxu0
        %4164 = vmatpush.bf16.msra.mxu0 %v3837
        %4165 = vmatpush.bf16.msra.mxu0 %v3835
        %4166 = vmatpush.bf16.msra.mxu0 %v3833
        %4167 = vmatpush.bf16.msra.mxu0 %v3831
        %4168 = vmatpush.bf16.msra.mxu0 %v3829
        %4169 = vmatpush.bf16.msra.mxu0 %v3827
        %4170 = vmatpush.bf16.msra.mxu0 %v3825
        %4171 = vmatpush.bf16.msra.mxu0 %v3823
        %4172 = vmatmul.bf16.gmra.mxu0 %v3212
        %v4173 = vpop.f32.mrf.mxu0
        %v4174 = vadd.f32 %v4161, %v4173
        %v4175 = vpop.f32.mrf.mxu0
        %4176 = vdwg.mxu0
        %4177 = vmatpush.bf16.msra.mxu0 %v3853
        %4178 = vmatpush.bf16.msra.mxu0 %v3851
        %4179 = vmatpush.bf16.msra.mxu0 %v3849
        %4180 = vmatpush.bf16.msra.mxu0 %v3847
        %4181 = vmatpush.bf16.msra.mxu0 %v3845
        %4182 = vmatpush.bf16.msra.mxu0 %v3843
        %4183 = vmatpush.bf16.msra.mxu0 %v3841
        %4184 = vmatpush.bf16.msra.mxu0 %v3839
        %4185 = vmatmul.bf16.gmra.mxu0 %v3213
        %v4186 = vpop.f32.mrf.mxu0
        %v4187 = vadd.f32 %v4174, %v4186
        %v4188 = vpop.f32.mrf.mxu0
        %4189 = vdwg.mxu0
        %v4190 = vadd.f32 %v2095, %v4083
        %v4191 = vadd.f32 %v2096, %v4187
        %v4192 = vld [vmem:[%s891] sm:$0x3]
        %v4194 = vperm.slane %v4192, 0
        %v4195 = vperm.slane %v4192, 1
        %v4198 = vadd.f32 %v4190, %v4194
        %v4199 = vadd.f32 %v4191, %v4195
        %4200 = vst [vmem:[#allocation2] sm:$0xff] %v4198
        %4201 = vst [vmem:[#allocation2 + $0x8] sm:$0xff] %v4199
        %p4202 = scmp.eq.s32.totalorder %s50, 1
        // Predicated region
        $region121: #{tpu_custom_call.1} parent=71 // pred_check
          %p4203 = pneg %p4202
        $region122: #{tpu_custom_call.1} parent=71 // pred_check_branch
          %4205 = sbr.rel (%p4203) target = $region124
        $region123: #{tpu_custom_call.1} parent=71 // pred_region
          %s4206 = scalar_lea.vmem [#allocation2], 7
          %v4207 = vld [vmem:[%s4206] ss:$8 sm:$0x3]
          %v4208 = vlaneseq
          %vm4209 = vcmp.ge.s32.totalorder %v4208, 0
          %vm4210 = vcmp.lt.s32.totalorder %v4208, 256
          %vm4211 = vmand %vm4209, %vm4210
          %4212 = vst.msk [vmem:[%s883] sm:$0x3] %vm4211, %v4207
        $region124: #{tpu_custom_call.1} parent=71 // pred_fallthru
          _
        %s4213 = sand.u32 %s403, 1
        %s4214 = scalar_lea.sflag [#allocation7], %s4213
        %s4215 = sand.u32 %s403, 1
        %s4216 = smul.addr %s4215, 2
        %s4217 = scalar_lea.vmem [#allocation23], %s4216
        // Predicated region
        $region125: #{tpu_custom_call.1} parent=71 // pred_check
          %p4218 = pneg %p413
        $region126: #{tpu_custom_call.1} parent=71 // pred_check_branch
          %4220 = sbr.rel (%p4218) target = $region128
        $region127: #{tpu_custom_call.1} parent=71 // pred_region
          %4222 = vsyncadd %s4214, 0
          %s4223 = smul.addr %s49, 2
          %s4224 = scalar_lea.hbm %s13, %s4223
          %s4226 = sshll.u32 %s4217, 4
          %s4227 = int_to_ptr.vmem [resolvable:$true] %s4226
          %s4228 = sshll.u32 %s4224, 4
          %s4229 = int_to_ptr.hbm [resolvable:$true] %s4228
          %4231 = dma.vmem_to_hbm [thread:$0]  %s4227, 32, %s4229, %s4214
        $region128: #{tpu_custom_call.1} parent=71 // pred_fallthru
          _
      $region72: #{tpu_custom_call.1} parent=5 // pred_fallthru
        _
      %p4232 = scmp.le.s32.totalorder 2, %s40
      // Predicated region
      $region129: #{tpu_custom_call.1} parent=5 // pred_check
        %p4233 = pneg %p4232
      $region130: #{tpu_custom_call.1} parent=5 // pred_check_branch
        %4235 = sbr.rel (%p4233) target = $region132
      $region131: #{tpu_custom_call.1} parent=5 // pred_region
        %s4236 = ssub.s32 %s40, 2
        // Predicated region
        $region133: #{tpu_custom_call.1} parent=131 // pred_check
          %p4237 = pneg %p419
        $region134: #{tpu_custom_call.1} parent=131 // pred_check_branch
          %4239 = sbr.rel (%p4237) target = $region136
        $region135: #{tpu_custom_call.1} parent=131 // pred_region
          %s4240 = sand.u32 %s404, 1
          %s4241 = scalar_lea.sflag [#allocation7], %s4240
          %s4242 = sand.u32 %s404, 1
          %s4243 = smul.addr %s4242, 2
          %s4244 = scalar_lea.vmem [#allocation23], %s4243
          %4246 = dma.done %s4241, 32
        $region136: #{tpu_custom_call.1} parent=131 // pred_fallthru
          _
      $region132: #{tpu_custom_call.1} parent=5 // pred_fallthru
        _
    $region6: #{tpu_custom_call.1} parent=1 // loop_footer
      %s44 = sadd.s32 1, %s40
    $region7: #{tpu_custom_call.1} parent=1 // loop_footer_branch
      %39 = sbr.rel target = $region3
    $region8: #{tpu_custom_call.1} parent=1 // loop_exit
      _
    %4247 = vsyncpa [#allocation6], 1
    %s4248 = scalar_lea.sflag [#allocation6], 1
    %4249 = vsyncpa %s4248, 1
    %4250 = vsyncpa [#allocation9], 1
    %s4251 = scalar_lea.sflag [#allocation9], 1
    %4252 = vsyncpa %s4251, 1
    %4253 = vsyncpa [#allocation12], 1
    %s4254 = scalar_lea.sflag [#allocation12], 1
    %4255 = vsyncpa %s4254, 1
    %4256 = vsyncpa [#allocation15], 1
    %s4257 = scalar_lea.sflag [#allocation15], 1
    %4258 = vsyncpa %s4257, 1
    %4259 = vsyncpa [#allocation18], 1
    %s4260 = scalar_lea.sflag [#allocation18], 1
    %4261 = vsyncpa %s4260, 1
    %4262 = vsyncpa [#allocation21], 1
    %s4263 = scalar_lea.sflag [#allocation21], 1
    %4264 = vsyncpa %s4263, 1
    %4265 = vsyncpa [#allocation7], 1
    %s4266 = scalar_lea.sflag [#allocation7], 1
    %4267 = vsyncpa %s4266, 1

</llo_original>
